<compile_context>
chip_gen: v5e
topology: v5e:2x2
jax: 0.10.0
libtpu: 0.0.40
codegen_flags: <defaults>
</compile_context>

<pallas_src>
import numpy as np
import jax
import jax.numpy as jnp
from jax.experimental import pallas as pl
from jax.experimental.pallas import tpu as pltpu


# ------------------------------- fused kernel -------------------------------

def _build_kernel(H, W, C, TH, TN, M, eps):
    def kernel(xhp_ref, gp_ref, bp_ref, w_ref, bias_ref, o_ref, xp_ref):
        # ---- LayerNorm over the original W axis (last axis of NCHW) --------
        xbp = xhp_ref[0]                                   # (H, W+2, C) f32
        xin = xbp[:, 1:W + 1, :]                           # un-padded interior
        mu = jnp.mean(xin, axis=1, keepdims=True)          # (H, 1, C)
        xc = xin - mu
        var = jnp.mean(xc * xc, axis=1, keepdims=True)
        inv = jax.lax.rsqrt(var + eps)
        # gamma/beta are zero on the two pad columns -> pads stay exactly 0.
        xnp = (xbp - mu) * inv * gp_ref[...] + bp_ref[...]  # (H, W+2, C)

        # ---- H-padded normalized slab in VMEM scratch ----------------------
        xp_ref[...] = jnp.zeros((H + 2, W + 2, C), dtype=xp_ref.dtype)
        xp_ref[1:H + 1, :, :] = xnp

        # ---- fused ConvT(4,s=4,p=0) + ConvT(8,s=4,p=2): 9-shift accumulation
        hi = pl.program_id(1)
        r0 = hi * TH
        # bias folded into accumulator init (output block is f32 in VMEM).
        o_ref[...] = jnp.broadcast_to(bias_ref[...], (TN, M))
        for dhs in range(3):                               # static, unrolled
            for dws in range(3):
                lhs = xp_ref[pl.ds(r0 + dhs, TH), pl.ds(dws, W), :]  # (TH,W,C)
                lhs = lhs.reshape(TN, C).astype(jnp.bfloat16)
                o_ref[...] += jnp.dot(lhs, w_ref[3 * dhs + dws],
                                      preferred_element_type=jnp.float32)

    return kernel


def final_patch_expand_x4_cel(x, params):
    """x: (B, C, H, W) NCHW with C == W == dim.  Returns (B, dim, 4H, 4W)."""
    B, C, H, W = x.shape
    dim = C
    assert W == dim, "nn.LayerNorm(dim) on NCHW normalizes the last axis -> W must equal dim"
    assert dim % 8 == 0, "dim must be a multiple of 8 for lane-dense tiling"
    M = 16 * dim            # (o0 + o1) * 4 * 4 = dim * 16 output columns
    eps = 1e-5

    # Row tile: largest divisor of H keeping the output tile near >=512 rows.
    # Output tile is (TH*W, M); M = 16*dim >= 128 keeps stores lane-dense.
    target_rows = max(1, 512 // W)
    TH = max(d for d in range(1, H + 1) if H % d == 0 and d <= target_rows)
    TN = TH * W
    assert TN % 8 == 0, "row tile must be a multiple of 8 sublanes"
    HB = H // TH

    # Layout plumbing on the (small) input: NCHW -> NHWC, pre-pad W by 1.
    xh = jnp.transpose(x, (0, 2, 3, 1))                    # (B, H, W, C)
    xhp = jnp.pad(xh, ((0, 0), (0, 0), (1, 1), (0, 0)))    # (B, H, W+2, C)

    kernel = _build_kernel(H, W, C, TH, TN, M, eps)

    out_flat = pl.pallas_call(
        kernel,
        out_shape=jax.ShapeDtypeStruct((B * H * W, M), jnp.float32),
        grid_spec=pltpu.PrefetchScalarGridSpec(
            num_scalar_prefetch=0,
            grid=(B, HB),
            in_specs=[
                # activation slab for batch b: resident across the hi axis
                pl.BlockSpec((1, H, W + 2, C), lambda b, hi: (b, 0, 0, 0)),
                pl.BlockSpec((W + 2, C), lambda b, hi: (0, 0)),
                pl.BlockSpec((W + 2, C), lambda b, hi: (0, 0)),
                # packed per-shift weight; resident for the whole grid.
                # NOTE: for very large dim, tile M here and use
                # pipeline_mode=pl.Buffered(1) to respect v7x's smaller VMEM.
                pl.BlockSpec((9, C, M), lambda b, hi: (0, 0, 0)),
                pl.BlockSpec((1, M), lambda b, hi: (0, 0)),
            ],
            out_specs=pl.BlockSpec((TN, M), lambda b, hi: (b * HB + hi, 0)),
            scratch_shapes=[pltpu.VMEM((H + 2, W + 2, C), jnp.float32)],
        ),
        compiler_params=pltpu.CompilerParams(
            dimension_semantics=("parallel", "parallel")),
    )(xhp, params["gamma_p"], params["beta_p"], params["w_fused"], params["bias_f"])

    # Columns already ordered (out_channel, rh, rw) with out_channel spanning
    # [conv0 | conv1]: one transpose lands NCHW and the channel concat is free.
    y = out_flat.reshape(B, H, W, dim, 4, 4)
    y = jnp.transpose(y, (0, 3, 1, 4, 2, 5)).reshape(B, dim, 4 * H, 4 * W)
    return y


# --------------------------- parameter preparation --------------------------

def pack_params(gamma, beta, w0, b0, w1, b1):
    dim = gamma.shape[0]
    o0 = w0.shape[1]
    o1 = w1.shape[1]
    C = dim
    M = 16 * (o0 + o1)

    # Fused per-shift weight (9, C, M); shift k = 3*dhs + dws with dhs,dws in
    # {0,1,2} meaning input pixel (h-1+dhs, w-1+dws) for output block (h, w).
    wf = np.zeros((9, C, M), np.float32)
    # conv0 (k=4,s=4,p=0): only the center shift (k=4), columns [0, o0*16).
    wf[4, :, : o0 * 16] = np.asarray(w0).reshape(C, o0 * 16)
    # conv1 (k=8,s=4,p=2): tap kh = rh + 2 - 4*(dhs-1) = rh + 6 - 4*dhs.
    w1np = np.asarray(w1)
    for dhs in range(3):
        for dws in range(3):
            blk = np.zeros((C, o1, 4, 4), np.float32)
            for rh in range(4):
                kh = rh + 6 - 4 * dhs
                if not (0 <= kh < 8):
                    continue
                for rw in range(4):
                    kw = rw + 6 - 4 * dws
                    if not (0 <= kw < 8):
                        continue
                    blk[:, :, rh, rw] = w1np[:, :, kh, kw]
            wf[3 * dhs + dws, :, o0 * 16:] = blk.reshape(C, o1 * 16)

    bias_f = np.concatenate([np.repeat(np.asarray(b0), 16),
                             np.repeat(np.asarray(b1), 16)]).astype(np.float32)

    # LayerNorm affine, W-padded with zeros so normalized pad columns are 0.
    Wsp = dim  # LayerNorm(dim) over the NCHW last axis requires W == dim
    gpad = np.zeros((Wsp + 2, C), np.float32)
    bpad = np.zeros((Wsp + 2, C), np.float32)
    gpad[1:Wsp + 1, :] = np.asarray(gamma)[:, None]
    bpad[1:Wsp + 1, :] = np.asarray(beta)[:, None]

    return {
        "w_fused": jnp.asarray(wf, jnp.bfloat16),     # bf16 MXU operands
        "bias_f": jnp.asarray(bias_f)[None, :],       # (1, M) f32
        "gamma_p": jnp.asarray(gpad),                 # (W+2, C) f32
        "beta_p": jnp.asarray(bpad),                  # (W+2, C) f32
    }


def init_params(key, dim):
    o0 = dim // 2
    o1 = dim // 2
    ks = jax.random.split(key, 6)
    gamma = 1.0 + 0.1 * jax.random.normal(ks[0], (dim,), jnp.float32)
    beta = 0.1 * jax.random.normal(ks[1], (dim,), jnp.float32)
    # ConvTranspose2d weights: (in_channels, out_channels, kH, kW)
    w0 = 0.1 * jax.random.normal(ks[2], (dim, o0, 4, 4), jnp.float32)
    b0 = 0.1 * jax.random.normal(ks[3], (o0,), jnp.float32)
    w1 = 0.1 * jax.random.normal(ks[4], (dim, o1, 8, 8), jnp.float32)
    b1 = 0.1 * jax.random.normal(ks[5], (o1,), jnp.float32)
    raw = (gamma, beta, w0, b0, w1, b1)
    return pack_params(*raw), raw


# ------------------------------ pure-JAX reference ---------------------------

def reference(x, gamma, beta, w0, b0, w1, b1, cast=None):
    eps = 1e-5
    mu = jnp.mean(x, axis=-1, keepdims=True)
    var = jnp.mean(jnp.square(x - mu), axis=-1, keepdims=True)
    xn = (x - mu) * jax.lax.rsqrt(var + eps) * gamma + beta
    if cast is not None:   # emulate the bf16 rounding the MXU operands see
        xn = xn.astype(cast).astype(jnp.float32)
        w0 = w0.astype(cast).astype(jnp.float32)
        w1 = w1.astype(cast).astype(jnp.float32)

    def convT(z, w, b, k, s, p):
        wc = jnp.flip(jnp.transpose(w, (1, 0, 2, 3)), axis=(2, 3))  # (O,I,k,k)
        y = jax.lax.conv_general_dilated(
            z, wc, window_strides=(1, 1),
            padding=[(k - 1 - p, k - 1 - p)] * 2,
            lhs_dilation=(s, s),
            dimension_numbers=("NCHW", "OIHW", "NCHW"),
            precision=jax.lax.Precision.HIGHEST)
        return y + b[None, :, None, None]

    y0 = convT(xn, w0, b0, 4, 4, 0)
    y1 = convT(xn, w1, b1, 8, 4, 2)
    return jnp.concatenate([y0, y1], axis=1)


# ----------------------------------- main ------------------------------------

if __name__ == "__main__":
    dim = 16
    # LayerNorm(dim) on NCHW requires W == dim; the convs require C == dim.
    B, C, H, W = 2, dim, 16, dim

    key = jax.random.PRNGKey(0)
    kx, kp = jax.random.split(key)
    x = jax.random.normal(kx, (B, C, H, W), jnp.float32)
    params, raw = init_params(kp, dim)

    out = jax.jit(final_patch_expand_x4_cel)(x, params)
    out = jax.block_until_ready(out)
    assert out.shape == (B, dim, 4 * H, 4 * W), out.shape

    # Tight structural check: reference with the same bf16-rounded matmul
    # operands (a weight-packing / layout bug would give O(1) errors; the
    # output std is ~1, so 2e-2 catches those with huge margin).
    ref_tight = reference(x, *raw, cast=jnp.bfloat16)
    err_tight = float(jnp.max(jnp.abs(out - ref_tight)))
    assert err_tight < 2e-2, f"max abs err vs bf16-rounded reference: {err_tight}"

    # End-to-end check vs the full-f32 reference; the only slack is bf16
    # rounding of the MXU operands (f32 accumulation is kept).
    ref_f32 = reference(x, *raw)
    err_f32 = float(jnp.max(jnp.abs(out - ref_f32)))
    assert err_f32 < 5e-2, f"max abs err vs f32 reference: {err_f32}"

    print("KERNEL_OK")
</pallas_src>

<mosaic_0001>
module attributes {stable_mosaic.version = 11 : i64} {
  func.func @kernel(%arg0: i32, %arg1: i32, %arg2: memref<1x16x18x16xf32, #tpu.memory_space<vmem>>, %arg3: memref<18x16xf32, #tpu.memory_space<vmem>>, %arg4: memref<18x16xf32, #tpu.memory_space<vmem>>, %arg5: memref<9x16x256xbf16, #tpu.memory_space<vmem>>, %arg6: memref<1x256xf32, #tpu.memory_space<vmem>>, %arg7: memref<256x256xf32, #tpu.memory_space<vmem>>, %arg8: memref<18x18x16xf32, #tpu.memory_space<vmem>>) attributes {dimension_semantics = [#tpu.dimension_semantics<parallel>, #tpu.dimension_semantics<parallel>], iteration_bounds = array<i64: 2, 1>, scalar_prefetch = 0 : i64, scratch_operands = 1 : i64, tpu.core_type = #tpu.core_type<tc>, window_params = [{transform_indices = @transform_0, window_bounds = array<i64: 1, 16, 18, 16>}, {pipeline_mode = #tpu.pipeline_mode<synchronous>, transform_indices = @transform_1, window_bounds = array<i64: 18, 16>}, {pipeline_mode = #tpu.pipeline_mode<synchronous>, transform_indices = @transform_2, window_bounds = array<i64: 18, 16>}, {pipeline_mode = #tpu.pipeline_mode<synchronous>, transform_indices = @transform_3, window_bounds = array<i64: 9, 16, 256>}, {pipeline_mode = #tpu.pipeline_mode<synchronous>, transform_indices = @transform_4, window_bounds = array<i64: 1, 256>}, {transform_indices = @transform_5, window_bounds = array<i64: 256, 256>}]} {
    %c0 = arith.constant 0 : index
    %c0_0 = arith.constant 0 : index
    %c0_1 = arith.constant 0 : index
    %c0_2 = arith.constant 0 : index
    %0 = vector.load %arg2[%c0, %c0_0, %c0_1, %c0_2] : memref<1x16x18x16xf32, #tpu.memory_space<vmem>>, vector<1x16x18x16xf32>
    %1 = vector.shape_cast %0 : vector<1x16x18x16xf32> to vector<16x18x16xf32>
    %2 = vector.extract_strided_slice %1 {offsets = [0, 1, 0], sizes = [16, 16, 16], strides = [1, 1, 1]} : vector<16x18x16xf32> to vector<16x16x16xf32>
    %cst = arith.constant dense<0.000000e+00> : vector<16x16xf32>
    %3 = vector.multi_reduction <add>, %2, %cst [1] : vector<16x16x16xf32> to vector<16x16xf32>
    %4 = vector.shape_cast %3 : vector<16x16xf32> to vector<16x1x16xf32>
    %cst_3 = arith.constant 1.600000e+01 : f32
    %5 = vector.broadcast %cst_3 : f32 to vector<16x1x16xf32>
    %6 = arith.divf %4, %5 : vector<16x1x16xf32>
    %7 = vector.broadcast %6 : vector<16x1x16xf32> to vector<16x16x16xf32>
    %8 = arith.subf %2, %7 : vector<16x16x16xf32>
    %9 = arith.mulf %8, %8 : vector<16x16x16xf32>
    %cst_4 = arith.constant dense<0.000000e+00> : vector<16x16xf32>
    %10 = vector.multi_reduction <add>, %9, %cst_4 [1] : vector<16x16x16xf32> to vector<16x16xf32>
    %11 = vector.shape_cast %10 : vector<16x16xf32> to vector<16x1x16xf32>
    %cst_5 = arith.constant 1.600000e+01 : f32
    %12 = vector.broadcast %cst_5 : f32 to vector<16x1x16xf32>
    %13 = arith.divf %11, %12 : vector<16x1x16xf32>
    %cst_6 = arith.constant 9.99999974E-6 : f32
    %14 = vector.broadcast %cst_6 : f32 to vector<16x1x16xf32>
    %15 = arith.addf %13, %14 : vector<16x1x16xf32>
    %16 = math.rsqrt %15 : vector<16x1x16xf32>
    %17 = vector.broadcast %6 : vector<16x1x16xf32> to vector<16x18x16xf32>
    %18 = arith.subf %1, %17 : vector<16x18x16xf32>
    %19 = vector.broadcast %16 : vector<16x1x16xf32> to vector<16x18x16xf32>
    %20 = arith.mulf %18, %19 : vector<16x18x16xf32>
    %c0_7 = arith.constant 0 : index
    %c0_8 = arith.constant 0 : index
    %21 = vector.load %arg3[%c0_7, %c0_8] : memref<18x16xf32, #tpu.memory_space<vmem>>, vector<18x16xf32>
    %22 = vector.shape_cast %21 : vector<18x16xf32> to vector<1x18x16xf32>
    %23 = vector.broadcast %22 : vector<1x18x16xf32> to vector<16x18x16xf32>
    %24 = arith.mulf %20, %23 : vector<16x18x16xf32>
    %c0_9 = arith.constant 0 : index
    %c0_10 = arith.constant 0 : index
    %25 = vector.load %arg4[%c0_9, %c0_10] : memref<18x16xf32, #tpu.memory_space<vmem>>, vector<18x16xf32>
    %26 = vector.shape_cast %25 : vector<18x16xf32> to vector<1x18x16xf32>
    %27 = vector.broadcast %26 : vector<1x18x16xf32> to vector<16x18x16xf32>
    %28 = arith.addf %24, %27 : vector<16x18x16xf32>
    %cst_11 = arith.constant 0.000000e+00 : f32
    %29 = vector.broadcast %cst_11 : f32 to vector<18x18x16xf32>
    %c0_12 = arith.constant 0 : index
    %c0_13 = arith.constant 0 : index
    %c0_14 = arith.constant 0 : index
    %30 = vector.load %arg8[%c0_12, %c0_13, %c0_14] : memref<18x18x16xf32, #tpu.memory_space<vmem>>, vector<18x18x16xf32>
    tpu.vector_store %arg8[%c0_12, %c0_13, %c0_14], %29 {strides = array<i32>} : memref<18x18x16xf32, #tpu.memory_space<vmem>>, vector<18x18x16xf32>,
    %c1 = arith.constant 1 : index
    %c0_15 = arith.constant 0 : index
    %c0_16 = arith.constant 0 : index
    %31 = vector.load %arg8[%c1, %c0_15, %c0_16] : memref<18x18x16xf32, #tpu.memory_space<vmem>>, vector<16x18x16xf32>
    tpu.vector_store %arg8[%c1, %c0_15, %c0_16], %28 {strides = array<i32>} : memref<18x18x16xf32, #tpu.memory_space<vmem>>, vector<16x18x16xf32>,
    %c16_i32 = arith.constant 16 : i32
    %32 = arith.muli %arg1, %c16_i32 : i32
    %c0_17 = arith.constant 0 : index
    %c0_18 = arith.constant 0 : index
    %33 = vector.load %arg6[%c0_17, %c0_18] : memref<1x256xf32, #tpu.memory_space<vmem>>, vector<1x256xf32>
    %34 = vector.shape_cast %33 : vector<1x256xf32> to vector<1x256xf32>
    %35 = vector.broadcast %34 : vector<1x256xf32> to vector<256x256xf32>
    %c0_19 = arith.constant 0 : index
    %c0_20 = arith.constant 0 : index
    %36 = vector.load %arg7[%c0_19, %c0_20] : memref<256x256xf32, #tpu.memory_space<vmem>>, vector<256x256xf32>
    tpu.vector_store %arg7[%c0_19, %c0_20], %35 {strides = array<i32>} : memref<256x256xf32, #tpu.memory_space<vmem>>, vector<256x256xf32>,
    %c0_i32 = arith.constant 0 : i32
    %37 = arith.addi %32, %c0_i32 : i32
    %38 = arith.index_cast %37 : i32 to index
    %c0_21 = arith.constant 0 : index
    %c0_22 = arith.constant 0 : index
    %39 = vector.load %arg8[%38, %c0_21, %c0_22] : memref<18x18x16xf32, #tpu.memory_space<vmem>>, vector<16x16x16xf32>
    %40 = vector.shape_cast %39 : vector<16x16x16xf32> to vector<256x16xf32>
    %41 = arith.truncf %40 : vector<256x16xf32> to vector<256x16xbf16>
    %c0_23 = arith.constant 0 : index
    %c0_24 = arith.constant 0 : index
    %42 = vector.load %arg7[%c0_23, %c0_24] : memref<256x256xf32, #tpu.memory_space<vmem>>, vector<256x256xf32>
    %c0_25 = arith.constant 0 : index
    %c0_26 = arith.constant 0 : index
    %c0_27 = arith.constant 0 : index
    %43 = vector.load %arg5[%c0_25, %c0_26, %c0_27] : memref<9x16x256xbf16, #tpu.memory_space<vmem>>, vector<1x16x256xbf16>
    %44 = vector.shape_cast %43 : vector<1x16x256xbf16> to vector<16x256xbf16>
    %cst_28 = arith.constant dense<0.000000e+00> : vector<256x256xf32>
    %45 = tpu.matmul %41, %44, %cst_28 {dimension_numbers = #tpu.dot_dimension_numbers<[1], [0], [0], [1], [0, 0, 1, 1], [], []>} : vector<256x16xbf16>, vector<16x256xbf16>, vector<256x256xf32> -> vector<256x256xf32>
    %46 = arith.addf %42, %45 : vector<256x256xf32>
    %c0_29 = arith.constant 0 : index
    %c0_30 = arith.constant 0 : index
    %47 = vector.load %arg7[%c0_29, %c0_30] : memref<256x256xf32, #tpu.memory_space<vmem>>, vector<256x256xf32>
    tpu.vector_store %arg7[%c0_29, %c0_30], %46 {strides = array<i32>} : memref<256x256xf32, #tpu.memory_space<vmem>>, vector<256x256xf32>,
    %c0_i32_31 = arith.constant 0 : i32
    %48 = arith.addi %32, %c0_i32_31 : i32
    %49 = arith.index_cast %48 : i32 to index
    %c1_32 = arith.constant 1 : index
    %c0_33 = arith.constant 0 : index
    %50 = vector.load %arg8[%49, %c1_32, %c0_33] : memref<18x18x16xf32, #tpu.memory_space<vmem>>, vector<16x16x16xf32>
    %51 = vector.shape_cast %50 : vector<16x16x16xf32> to vector<256x16xf32>
    %52 = arith.truncf %51 : vector<256x16xf32> to vector<256x16xbf16>
    %c0_34 = arith.constant 0 : index
    %c0_35 = arith.constant 0 : index
    %53 = vector.load %arg7[%c0_34, %c0_35] : memref<256x256xf32, #tpu.memory_space<vmem>>, vector<256x256xf32>
    %c1_36 = arith.constant 1 : index
    %c0_37 = arith.constant 0 : index
    %c0_38 = arith.constant 0 : index
    %54 = vector.load %arg5[%c1_36, %c0_37, %c0_38] : memref<9x16x256xbf16, #tpu.memory_space<vmem>>, vector<1x16x256xbf16>
    %55 = vector.shape_cast %54 : vector<1x16x256xbf16> to vector<16x256xbf16>
    %cst_39 = arith.constant dense<0.000000e+00> : vector<256x256xf32>
    %56 = tpu.matmul %52, %55, %cst_39 {dimension_numbers = #tpu.dot_dimension_numbers<[1], [0], [0], [1], [0, 0, 1, 1], [], []>} : vector<256x16xbf16>, vector<16x256xbf16>, vector<256x256xf32> -> vector<256x256xf32>
    %57 = arith.addf %53, %56 : vector<256x256xf32>
    %c0_40 = arith.constant 0 : index
    %c0_41 = arith.constant 0 : index
    %58 = vector.load %arg7[%c0_40, %c0_41] : memref<256x256xf32, #tpu.memory_space<vmem>>, vector<256x256xf32>
    tpu.vector_store %arg7[%c0_40, %c0_41], %57 {strides = array<i32>} : memref<256x256xf32, #tpu.memory_space<vmem>>, vector<256x256xf32>,
    %c0_i32_42 = arith.constant 0 : i32
    %59 = arith.addi %32, %c0_i32_42 : i32
    %60 = arith.index_cast %59 : i32 to index
    %c2 = arith.constant 2 : index
    %c0_43 = arith.constant 0 : index
    %61 = vector.load %arg8[%60, %c2, %c0_43] : memref<18x18x16xf32, #tpu.memory_space<vmem>>, vector<16x16x16xf32>
    %62 = vector.shape_cast %61 : vector<16x16x16xf32> to vector<256x16xf32>
    %63 = arith.truncf %62 : vector<256x16xf32> to vector<256x16xbf16>
    %c0_44 = arith.constant 0 : index
    %c0_45 = arith.constant 0 : index
    %64 = vector.load %arg7[%c0_44, %c0_45] : memref<256x256xf32, #tpu.memory_space<vmem>>, vector<256x256xf32>
    %c2_46 = arith.constant 2 : index
    %c0_47 = arith.constant 0 : index
    %c0_48 = arith.constant 0 : index
    %65 = vector.load %arg5[%c2_46, %c0_47, %c0_48] : memref<9x16x256xbf16, #tpu.memory_space<vmem>>, vector<1x16x256xbf16>
    %66 = vector.shape_cast %65 : vector<1x16x256xbf16> to vector<16x256xbf16>
    %cst_49 = arith.constant dense<0.000000e+00> : vector<256x256xf32>
    %67 = tpu.matmul %63, %66, %cst_49 {dimension_numbers = #tpu.dot_dimension_numbers<[1], [0], [0], [1], [0, 0, 1, 1], [], []>} : vector<256x16xbf16>, vector<16x256xbf16>, vector<256x256xf32> -> vector<256x256xf32>
    %68 = arith.addf %64, %67 : vector<256x256xf32>
    %c0_50 = arith.constant 0 : index
    %c0_51 = arith.constant 0 : index
    %69 = vector.load %arg7[%c0_50, %c0_51] : memref<256x256xf32, #tpu.memory_space<vmem>>, vector<256x256xf32>
    tpu.vector_store %arg7[%c0_50, %c0_51], %68 {strides = array<i32>} : memref<256x256xf32, #tpu.memory_space<vmem>>, vector<256x256xf32>,
    %c1_i32 = arith.constant 1 : i32
    %70 = arith.addi %32, %c1_i32 : i32
    %71 = arith.index_cast %70 : i32 to index
    %c0_52 = arith.constant 0 : index
    %c0_53 = arith.constant 0 : index
    %72 = vector.load %arg8[%71, %c0_52, %c0_53] : memref<18x18x16xf32, #tpu.memory_space<vmem>>, vector<16x16x16xf32>
    %73 = vector.shape_cast %72 : vector<16x16x16xf32> to vector<256x16xf32>
    %74 = arith.truncf %73 : vector<256x16xf32> to vector<256x16xbf16>
    %c0_54 = arith.constant 0 : index
    %c0_55 = arith.constant 0 : index
    %75 = vector.load %arg7[%c0_54, %c0_55] : memref<256x256xf32, #tpu.memory_space<vmem>>, vector<256x256xf32>
    %c3 = arith.constant 3 : index
    %c0_56 = arith.constant 0 : index
    %c0_57 = arith.constant 0 : index
    %76 = vector.load %arg5[%c3, %c0_56, %c0_57] : memref<9x16x256xbf16, #tpu.memory_space<vmem>>, vector<1x16x256xbf16>
    %77 = vector.shape_cast %76 : vector<1x16x256xbf16> to vector<16x256xbf16>
    %cst_58 = arith.constant dense<0.000000e+00> : vector<256x256xf32>
    %78 = tpu.matmul %74, %77, %cst_58 {dimension_numbers = #tpu.dot_dimension_numbers<[1], [0], [0], [1], [0, 0, 1, 1], [], []>} : vector<256x16xbf16>, vector<16x256xbf16>, vector<256x256xf32> -> vector<256x256xf32>
    %79 = arith.addf %75, %78 : vector<256x256xf32>
    %c0_59 = arith.constant 0 : index
    %c0_60 = arith.constant 0 : index
    %80 = vector.load %arg7[%c0_59, %c0_60] : memref<256x256xf32, #tpu.memory_space<vmem>>, vector<256x256xf32>
    tpu.vector_store %arg7[%c0_59, %c0_60], %79 {strides = array<i32>} : memref<256x256xf32, #tpu.memory_space<vmem>>, vector<256x256xf32>,
    %c1_i32_61 = arith.constant 1 : i32
    %81 = arith.addi %32, %c1_i32_61 : i32
    %82 = arith.index_cast %81 : i32 to index
    %c1_62 = arith.constant 1 : index
    %c0_63 = arith.constant 0 : index
    %83 = vector.load %arg8[%82, %c1_62, %c0_63] : memref<18x18x16xf32, #tpu.memory_space<vmem>>, vector<16x16x16xf32>
    %84 = vector.shape_cast %83 : vector<16x16x16xf32> to vector<256x16xf32>
    %85 = arith.truncf %84 : vector<256x16xf32> to vector<256x16xbf16>
    %c0_64 = arith.constant 0 : index
    %c0_65 = arith.constant 0 : index
    %86 = vector.load %arg7[%c0_64, %c0_65] : memref<256x256xf32, #tpu.memory_space<vmem>>, vector<256x256xf32>
    %c4 = arith.constant 4 : index
    %c0_66 = arith.constant 0 : index
    %c0_67 = arith.constant 0 : index
    %87 = vector.load %arg5[%c4, %c0_66, %c0_67] : memref<9x16x256xbf16, #tpu.memory_space<vmem>>, vector<1x16x256xbf16>
    %88 = vector.shape_cast %87 : vector<1x16x256xbf16> to vector<16x256xbf16>
    %cst_68 = arith.constant dense<0.000000e+00> : vector<256x256xf32>
    %89 = tpu.matmul %85, %88, %cst_68 {dimension_numbers = #tpu.dot_dimension_numbers<[1], [0], [0], [1], [0, 0, 1, 1], [], []>} : vector<256x16xbf16>, vector<16x256xbf16>, vector<256x256xf32> -> vector<256x256xf32>
    %90 = arith.addf %86, %89 : vector<256x256xf32>
    %c0_69 = arith.constant 0 : index
    %c0_70 = arith.constant 0 : index
    %91 = vector.load %arg7[%c0_69, %c0_70] : memref<256x256xf32, #tpu.memory_space<vmem>>, vector<256x256xf32>
    tpu.vector_store %arg7[%c0_69, %c0_70], %90 {strides = array<i32>} : memref<256x256xf32, #tpu.memory_space<vmem>>, vector<256x256xf32>,
    %c1_i32_71 = arith.constant 1 : i32
    %92 = arith.addi %32, %c1_i32_71 : i32
    %93 = arith.index_cast %92 : i32 to index
    %c2_72 = arith.constant 2 : index
    %c0_73 = arith.constant 0 : index
    %94 = vector.load %arg8[%93, %c2_72, %c0_73] : memref<18x18x16xf32, #tpu.memory_space<vmem>>, vector<16x16x16xf32>
    %95 = vector.shape_cast %94 : vector<16x16x16xf32> to vector<256x16xf32>
    %96 = arith.truncf %95 : vector<256x16xf32> to vector<256x16xbf16>
    %c0_74 = arith.constant 0 : index
    %c0_75 = arith.constant 0 : index
    %97 = vector.load %arg7[%c0_74, %c0_75] : memref<256x256xf32, #tpu.memory_space<vmem>>, vector<256x256xf32>
    %c5 = arith.constant 5 : index
    %c0_76 = arith.constant 0 : index
    %c0_77 = arith.constant 0 : index
    %98 = vector.load %arg5[%c5, %c0_76, %c0_77] : memref<9x16x256xbf16, #tpu.memory_space<vmem>>, vector<1x16x256xbf16>
    %99 = vector.shape_cast %98 : vector<1x16x256xbf16> to vector<16x256xbf16>
    %cst_78 = arith.constant dense<0.000000e+00> : vector<256x256xf32>
    %100 = tpu.matmul %96, %99, %cst_78 {dimension_numbers = #tpu.dot_dimension_numbers<[1], [0], [0], [1], [0, 0, 1, 1], [], []>} : vector<256x16xbf16>, vector<16x256xbf16>, vector<256x256xf32> -> vector<256x256xf32>
    %101 = arith.addf %97, %100 : vector<256x256xf32>
    %c0_79 = arith.constant 0 : index
    %c0_80 = arith.constant 0 : index
    %102 = vector.load %arg7[%c0_79, %c0_80] : memref<256x256xf32, #tpu.memory_space<vmem>>, vector<256x256xf32>
    tpu.vector_store %arg7[%c0_79, %c0_80], %101 {strides = array<i32>} : memref<256x256xf32, #tpu.memory_space<vmem>>, vector<256x256xf32>,
    %c2_i32 = arith.constant 2 : i32
    %103 = arith.addi %32, %c2_i32 : i32
    %104 = arith.index_cast %103 : i32 to index
    %c0_81 = arith.constant 0 : index
    %c0_82 = arith.constant 0 : index
    %105 = vector.load %arg8[%104, %c0_81, %c0_82] : memref<18x18x16xf32, #tpu.memory_space<vmem>>, vector<16x16x16xf32>
    %106 = vector.shape_cast %105 : vector<16x16x16xf32> to vector<256x16xf32>
    %107 = arith.truncf %106 : vector<256x16xf32> to vector<256x16xbf16>
    %c0_83 = arith.constant 0 : index
    %c0_84 = arith.constant 0 : index
    %108 = vector.load %arg7[%c0_83, %c0_84] : memref<256x256xf32, #tpu.memory_space<vmem>>, vector<256x256xf32>
    %c6 = arith.constant 6 : index
    %c0_85 = arith.constant 0 : index
    %c0_86 = arith.constant 0 : index
    %109 = vector.load %arg5[%c6, %c0_85, %c0_86] : memref<9x16x256xbf16, #tpu.memory_space<vmem>>, vector<1x16x256xbf16>
    %110 = vector.shape_cast %109 : vector<1x16x256xbf16> to vector<16x256xbf16>
    %cst_87 = arith.constant dense<0.000000e+00> : vector<256x256xf32>
    %111 = tpu.matmul %107, %110, %cst_87 {dimension_numbers = #tpu.dot_dimension_numbers<[1], [0], [0], [1], [0, 0, 1, 1], [], []>} : vector<256x16xbf16>, vector<16x256xbf16>, vector<256x256xf32> -> vector<256x256xf32>
    %112 = arith.addf %108, %111 : vector<256x256xf32>
    %c0_88 = arith.constant 0 : index
    %c0_89 = arith.constant 0 : index
    %113 = vector.load %arg7[%c0_88, %c0_89] : memref<256x256xf32, #tpu.memory_space<vmem>>, vector<256x256xf32>
    tpu.vector_store %arg7[%c0_88, %c0_89], %112 {strides = array<i32>} : memref<256x256xf32, #tpu.memory_space<vmem>>, vector<256x256xf32>,
    %c2_i32_90 = arith.constant 2 : i32
    %114 = arith.addi %32, %c2_i32_90 : i32
    %115 = arith.index_cast %114 : i32 to index
    %c1_91 = arith.constant 1 : index
    %c0_92 = arith.constant 0 : index
    %116 = vector.load %arg8[%115, %c1_91, %c0_92] : memref<18x18x16xf32, #tpu.memory_space<vmem>>, vector<16x16x16xf32>
    %117 = vector.shape_cast %116 : vector<16x16x16xf32> to vector<256x16xf32>
    %118 = arith.truncf %117 : vector<256x16xf32> to vector<256x16xbf16>
    %c0_93 = arith.constant 0 : index
    %c0_94 = arith.constant 0 : index
    %119 = vector.load %arg7[%c0_93, %c0_94] : memref<256x256xf32, #tpu.memory_space<vmem>>, vector<256x256xf32>
    %c7 = arith.constant 7 : index
    %c0_95 = arith.constant 0 : index
    %c0_96 = arith.constant 0 : index
    %120 = vector.load %arg5[%c7, %c0_95, %c0_96] : memref<9x16x256xbf16, #tpu.memory_space<vmem>>, vector<1x16x256xbf16>
    %121 = vector.shape_cast %120 : vector<1x16x256xbf16> to vector<16x256xbf16>
    %cst_97 = arith.constant dense<0.000000e+00> : vector<256x256xf32>
    %122 = tpu.matmul %118, %121, %cst_97 {dimension_numbers = #tpu.dot_dimension_numbers<[1], [0], [0], [1], [0, 0, 1, 1], [], []>} : vector<256x16xbf16>, vector<16x256xbf16>, vector<256x256xf32> -> vector<256x256xf32>
    %123 = arith.addf %119, %122 : vector<256x256xf32>
    %c0_98 = arith.constant 0 : index
    %c0_99 = arith.constant 0 : index
    %124 = vector.load %arg7[%c0_98, %c0_99] : memref<256x256xf32, #tpu.memory_space<vmem>>, vector<256x256xf32>
    tpu.vector_store %arg7[%c0_98, %c0_99], %123 {strides = array<i32>} : memref<256x256xf32, #tpu.memory_space<vmem>>, vector<256x256xf32>,
    %c2_i32_100 = arith.constant 2 : i32
    %125 = arith.addi %32, %c2_i32_100 : i32
    %126 = arith.index_cast %125 : i32 to index
    %c2_101 = arith.constant 2 : index
    %c0_102 = arith.constant 0 : index
    %127 = vector.load %arg8[%126, %c2_101, %c0_102] : memref<18x18x16xf32, #tpu.memory_space<vmem>>, vector<16x16x16xf32>
    %128 = vector.shape_cast %127 : vector<16x16x16xf32> to vector<256x16xf32>
    %129 = arith.truncf %128 : vector<256x16xf32> to vector<256x16xbf16>
    %c0_103 = arith.constant 0 : index
    %c0_104 = arith.constant 0 : index
    %130 = vector.load %arg7[%c0_103, %c0_104] : memref<256x256xf32, #tpu.memory_space<vmem>>, vector<256x256xf32>
    %c8 = arith.constant 8 : index
    %c0_105 = arith.constant 0 : index
    %c0_106 = arith.constant 0 : index
    %131 = vector.load %arg5[%c8, %c0_105, %c0_106] : memref<9x16x256xbf16, #tpu.memory_space<vmem>>, vector<1x16x256xbf16>
    %132 = vector.shape_cast %131 : vector<1x16x256xbf16> to vector<16x256xbf16>
    %cst_107 = arith.constant dense<0.000000e+00> : vector<256x256xf32>
    %133 = tpu.matmul %129, %132, %cst_107 {dimension_numbers = #tpu.dot_dimension_numbers<[1], [0], [0], [1], [0, 0, 1, 1], [], []>} : vector<256x16xbf16>, vector<16x256xbf16>, vector<256x256xf32> -> vector<256x256xf32>
    %134 = arith.addf %130, %133 : vector<256x256xf32>
    %c0_108 = arith.constant 0 : index
    %c0_109 = arith.constant 0 : index
    %135 = vector.load %arg7[%c0_108, %c0_109] : memref<256x256xf32, #tpu.memory_space<vmem>>, vector<256x256xf32>
    tpu.vector_store %arg7[%c0_108, %c0_109], %134 {strides = array<i32>} : memref<256x256xf32, #tpu.memory_space<vmem>>, vector<256x256xf32>,
    return
  }
  func.func @transform_0(%arg0: i32, %arg1: i32) -> (i32, i32, i32, i32) {
    %c0_i32 = arith.constant 0 : i32
    %c0_i32_0 = arith.constant 0 : i32
    %c0_i32_1 = arith.constant 0 : i32
    %c0_i32_2 = arith.constant 0 : i32
    return %arg0, %c0_i32, %c0_i32_0, %c0_i32_1 : i32, i32, i32, i32
  }
  func.func @transform_1(%arg0: i32, %arg1: i32) -> (i32, i32) {
    %c0_i32 = arith.constant 0 : i32
    %c0_i32_0 = arith.constant 0 : i32
    %c0_i32_1 = arith.constant 0 : i32
    return %c0_i32, %c0_i32_0 : i32, i32
  }
  func.func @transform_2(%arg0: i32, %arg1: i32) -> (i32, i32) {
    %c0_i32 = arith.constant 0 : i32
    %c0_i32_0 = arith.constant 0 : i32
    %c0_i32_1 = arith.constant 0 : i32
    return %c0_i32, %c0_i32_0 : i32, i32
  }
  func.func @transform_3(%arg0: i32, %arg1: i32) -> (i32, i32, i32) {
    %c0_i32 = arith.constant 0 : i32
    %c0_i32_0 = arith.constant 0 : i32
    %c0_i32_1 = arith.constant 0 : i32
    %c0_i32_2 = arith.constant 0 : i32
    return %c0_i32, %c0_i32_0, %c0_i32_1 : i32, i32, i32
  }
  func.func @transform_4(%arg0: i32, %arg1: i32) -> (i32, i32) {
    %c0_i32 = arith.constant 0 : i32
    %c0_i32_0 = arith.constant 0 : i32
    %c0_i32_1 = arith.constant 0 : i32
    return %c0_i32, %c0_i32_0 : i32, i32
  }
  func.func @transform_5(%arg0: i32, %arg1: i32) -> (i32, i32) {
    %c1_i32 = arith.constant 1 : i32
    %0 = arith.muli %arg0, %c1_i32 : i32
    %1 = arith.addi %0, %arg1 : i32
    %c0_i32 = arith.constant 0 : i32
    %c0_i32_0 = arith.constant 0 : i32
    return %1, %c0_i32 : i32, i32
  }
}

</mosaic_0001>

<llo_original>
// kernel: final_patch_expand_x4_cel.1
$region0: #{final_patch_expand_x4_cel.1}
  #allocation0 [shape = 'u32[]', space=smem, size = 0x4, offset = 0x4, fixed_abs, tag = 'smem constant byte address 0x4 - core index']
  #allocation1 [shape = 'u32[72,128]{1,0:T(1,128)}', space=vmem, size = 0x9000, scoped, tag = 'internal scratch']
  #allocation2 [shape = 'f32[18,18,16]{2,1,0:T(8,128)}', space=vmem, size = 0x36000, scoped, tag = 'scratch operand']
  %s0 = inlined_call_operand.vmem [shape: f32[2,16,18,16], index: 0, kind: input, shape index: {}]
  %s1 = inlined_call_operand.vmem [shape: f32[18,16], index: 1, kind: input, shape index: {}]
  %s2 = inlined_call_operand.vmem [shape: f32[18,16], index: 2, kind: input, shape index: {}]
  %s3 = inlined_call_operand.hbm [shape: bf16[9,16,256], index: 3, kind: input, shape index: {}]
  %s4 = inlined_call_operand.hbm [shape: f32[1,256], index: 4, kind: input, shape index: {}]
  %s5 = inlined_call_operand.vmem [shape: f32[512,256], index: 5, kind: output, shape index: {}]
  %s6 = sld [smem:[#allocation0]]
  $region61: #{final_patch_expand_x4_cel.1} parent=0
    _
  %s8 = ssub.s32 1, %s6
  %s9 = scalar_select 0, %s8, %s6
  $region1: #{final_patch_expand_x4_cel.1} parent=0
    #allocation3 [shape = 'u8[73728]{0}', space=vmem, size = 0x12000, scoped, tag = 'input window, operand 3, single buffered']
    #allocation4 [shape = 's32[2]{0}', space=sflag, size = 0x8, scoped, tag = 'scoped memory for final_patch_expand_x4_cel.1']
    #allocation5 [shape = 'u8[1024]{0}', space=vmem, size = 0x400, scoped, tag = 'input window, operand 4, single buffered']
    #allocation6 [shape = 's32[1]{0}', space=sflag, size = 0x4, scoped, tag = 'scoped memory for final_patch_expand_x4_cel.1']
    %10 = vsyncpa [#allocation4], 0
    %11 = vsyncpa [#allocation6], 0
    loop: start=0, step=1, limit=4
    $region2: #{final_patch_expand_x4_cel.1} parent=1 // loop_pre_header
      _
    $region3: #{final_patch_expand_x4_cel.1} parent=1 // loop_header
      %s13 = sphi 0, %s17
      %p14 = scmp.ge.s32.totalorder %s13, 4
      %s20 = sphi 0, %s32
      %s21 = sphi 0, %s28
      %s22 = sphi 0, %s20
      %s23 = sphi 0, %s21
      %s24 = sphi 0, %s22
      %s25 = sphi 0, %s23
      %s35 = sphi 0, %s37
      %s38 = sphi 0, %s35
      %s39 = sphi 0, %s38
      %s55 = sphi 0, %s39
      %s59 = sphi 0, %s59
      %s61 = sphi 0, %s59
      %s62 = sphi 0, %s61
      %s76 = sphi 0, %s62
      %s80 = sphi 0, %s80
      %s82 = sphi 0, %s80
      %s83 = sphi 0, %s82
      %s97 = sphi 0, %s83
      %s101 = sphi 0, %s101
      %s103 = sphi 0, %s101
      %s104 = sphi 0, %s103
      %s118 = sphi 0, %s104
      %s122 = sphi 0, %s122
      %s124 = sphi 0, %s122
      %s125 = sphi 0, %s124
      %s139 = sphi 0, %s125
      %s147 = sphi 0, %s149
      %s150 = sphi 0, %s147
      %s151 = sphi 0, %s150
      %s167 = sphi 0, %s151
    $region4: #{final_patch_expand_x4_cel.1} parent=1 // loop_header_branch
      %16 = sbr.rel (%p14) target = $region8
    $region5: #{final_patch_expand_x4_cel.1} parent=1 // loop_body
      %s18 = ssub.s32 %s13, 1
      %s19 = ssub.s32 %s13, 2
      %s26 = sadd.s32 1, %s21
      %p27 = scmp.ge.s32.totalorder %s26, 1
      %s28 = scalar_select %p27, 0, %s26
      %s29 = sadd.s32 1, %s20
      %s30 = scalar_select %p27, %s29, %s20
      %p31 = scmp.ge.s32.totalorder %s30, 2
      %s32 = scalar_select %p31, 0, %s30
      %s33 = ssub.s32 %s20, %s32
      %p34 = scmp.eq.s32.totalorder %s33, 0
      %s36 = sadd.s32 %s35, 1
      %s37 = scalar_select %p34, %s35, %s36
      %p40 = pneg %p34
      %p41 = scmp.eq.s32.totalorder %s13, 1
      %p42 = por %p40, %p41
      %p43 = scmp.ne.s32.totalorder %s35, %s38
      %p44 = scmp.eq.s32.totalorder %s13, 0
      %p45 = por %p43, %p44
      %p46 = scmp.ne.s32.totalorder %s35, %s38
      %p47 = scmp.eq.s32.totalorder %s18, 1
      %p48 = por %p46, %p47
      %p49 = scmp.ne.s32.totalorder %s38, %s39
      %p50 = scmp.eq.s32.totalorder %s18, 0
      %p51 = por %p49, %p50
      %p52 = scmp.ne.s32.totalorder %s38, %s39
      %p53 = scmp.eq.s32.totalorder %s19, 1
      %p54 = por %p52, %p53
      %p56 = scmp.ne.s32.totalorder %s39, %s55
      %p57 = scmp.eq.s32.totalorder %s19, 0
      %p58 = por %p56, %p57
      %s60 = sadd.s32 %s59, 1
      %p63 = scmp.eq.s32.totalorder %s13, 1
      %p64 = scmp.ne.s32.totalorder %s59, %s61
      %p65 = scmp.eq.s32.totalorder %s13, 0
      %p66 = por %p64, %p65
      %p67 = scmp.ne.s32.totalorder %s59, %s61
      %p68 = scmp.eq.s32.totalorder %s18, 1
      %p69 = por %p67, %p68
      %p70 = scmp.ne.s32.totalorder %s61, %s62
      %p71 = scmp.eq.s32.totalorder %s18, 0
      %p72 = por %p70, %p71
      %p73 = scmp.ne.s32.totalorder %s61, %s62
      %p74 = scmp.eq.s32.totalorder %s19, 1
      %p75 = por %p73, %p74
      %p77 = scmp.ne.s32.totalorder %s62, %s76
      %p78 = scmp.eq.s32.totalorder %s19, 0
      %p79 = por %p77, %p78
      %s81 = sadd.s32 %s80, 1
      %p84 = scmp.eq.s32.totalorder %s13, 1
      %p85 = scmp.ne.s32.totalorder %s80, %s82
      %p86 = scmp.eq.s32.totalorder %s13, 0
      %p87 = por %p85, %p86
      %p88 = scmp.ne.s32.totalorder %s80, %s82
      %p89 = scmp.eq.s32.totalorder %s18, 1
      %p90 = por %p88, %p89
      %p91 = scmp.ne.s32.totalorder %s82, %s83
      %p92 = scmp.eq.s32.totalorder %s18, 0
      %p93 = por %p91, %p92
      %p94 = scmp.ne.s32.totalorder %s82, %s83
      %p95 = scmp.eq.s32.totalorder %s19, 1
      %p96 = por %p94, %p95
      %p98 = scmp.ne.s32.totalorder %s83, %s97
      %p99 = scmp.eq.s32.totalorder %s19, 0
      %p100 = por %p98, %p99
      %s102 = sadd.s32 %s101, 1
      %p105 = scmp.eq.s32.totalorder %s13, 1
      %p106 = scmp.ne.s32.totalorder %s101, %s103
      %p107 = scmp.eq.s32.totalorder %s13, 0
      %p108 = por %p106, %p107
      %p109 = scmp.ne.s32.totalorder %s101, %s103
      %p110 = scmp.eq.s32.totalorder %s18, 1
      %p111 = por %p109, %p110
      %p112 = scmp.ne.s32.totalorder %s103, %s104
      %p113 = scmp.eq.s32.totalorder %s18, 0
      %p114 = por %p112, %p113
      %p115 = scmp.ne.s32.totalorder %s103, %s104
      %p116 = scmp.eq.s32.totalorder %s19, 1
      %p117 = por %p115, %p116
      %p119 = scmp.ne.s32.totalorder %s104, %s118
      %p120 = scmp.eq.s32.totalorder %s19, 0
      %p121 = por %p119, %p120
      %s123 = sadd.s32 %s122, 1
      %p126 = scmp.eq.s32.totalorder %s13, 1
      %p127 = scmp.ne.s32.totalorder %s122, %s124
      %p128 = scmp.eq.s32.totalorder %s13, 0
      %p129 = por %p127, %p128
      %p130 = scmp.ne.s32.totalorder %s122, %s124
      %p131 = scmp.eq.s32.totalorder %s18, 1
      %p132 = por %p130, %p131
      %p133 = scmp.ne.s32.totalorder %s124, %s125
      %p134 = scmp.eq.s32.totalorder %s18, 0
      %p135 = por %p133, %p134
      %p136 = scmp.ne.s32.totalorder %s124, %s125
      %p137 = scmp.eq.s32.totalorder %s19, 1
      %p138 = por %p136, %p137
      %p140 = scmp.ne.s32.totalorder %s125, %s139
      %p141 = scmp.eq.s32.totalorder %s19, 0
      %p142 = por %p140, %p141
      %s143 = sadd.s32 %s20, %s21
      %s144 = sadd.s32 %s32, %s28
      %s145 = ssub.s32 %s143, %s144
      %p146 = scmp.eq.s32.totalorder %s145, 0
      %s148 = sadd.s32 %s147, 1
      %s149 = scalar_select %p146, %s147, %s148
      %p152 = pneg %p146
      %p153 = scmp.eq.s32.totalorder %s13, 1
      %p154 = por %p152, %p153
      %p155 = scmp.ne.s32.totalorder %s147, %s150
      %p156 = scmp.eq.s32.totalorder %s13, 0
      %p157 = por %p155, %p156
      %p158 = scmp.ne.s32.totalorder %s147, %s150
      %p159 = scmp.eq.s32.totalorder %s18, 1
      %p160 = por %p158, %p159
      %p161 = scmp.ne.s32.totalorder %s150, %s151
      %p162 = scmp.eq.s32.totalorder %s18, 0
      %p163 = por %p161, %p162
      %p164 = scmp.ne.s32.totalorder %s150, %s151
      %p165 = scmp.eq.s32.totalorder %s19, 1
      %p166 = por %p164, %p165
      %p168 = scmp.ne.s32.totalorder %s151, %s167
      %p169 = scmp.eq.s32.totalorder %s19, 0
      %p170 = por %p168, %p169
      %p171 = scmp.le.s32.totalorder 1, %s13
      %p172 = scmp.lt.s32.totalorder %s13, 3
      %p173 = pnand %p171, %p172
      %p174 = pneg %p173
      // Predicated region
      $region9: #{final_patch_expand_x4_cel.1} parent=5 // pred_check
        _
      $region10: #{final_patch_expand_x4_cel.1} parent=5 // pred_check_branch
        %176 = sbr.rel (%p173) target = $region12
      $region11: #{final_patch_expand_x4_cel.1} parent=5 // pred_region
        %s177 = ssub.s32 %s13, 1
        // Predicated region
        $region13: #{final_patch_expand_x4_cel.1} parent=11 // pred_check
          %p178 = pneg %p72
        $region14: #{final_patch_expand_x4_cel.1} parent=11 // pred_check_branch
          %180 = sbr.rel (%p178) target = $region16
        $region15: #{final_patch_expand_x4_cel.1} parent=11 // pred_region
          _
        $region16: #{final_patch_expand_x4_cel.1} parent=11 // pred_fallthru
          _
        // Predicated region
        $region17: #{final_patch_expand_x4_cel.1} parent=11 // pred_check
          %p181 = pneg %p93
        $region18: #{final_patch_expand_x4_cel.1} parent=11 // pred_check_branch
          %183 = sbr.rel (%p181) target = $region20
        $region19: #{final_patch_expand_x4_cel.1} parent=11 // pred_region
          _
        $region20: #{final_patch_expand_x4_cel.1} parent=11 // pred_fallthru
          _
        // Predicated region
        $region21: #{final_patch_expand_x4_cel.1} parent=11 // pred_check
          %p184 = pneg %p114
        $region22: #{final_patch_expand_x4_cel.1} parent=11 // pred_check_branch
          %186 = sbr.rel (%p184) target = $region24
        $region23: #{final_patch_expand_x4_cel.1} parent=11 // pred_region
          %188 = vsyncadd [#allocation4], 0
          %s189 = sshll.u32 %s3, 4
          %s190 = int_to_ptr.hbm [resolvable:$true] %s189
          %s191 = sshll.u32 [#allocation3], 4
          %s192 = int_to_ptr.vmem [resolvable:$true] %s191
          %197 = dma.hbm_to_vmem [thread:$0]  %s190, 2304, %s192, [#allocation4], 128, 128, 8
        $region24: #{final_patch_expand_x4_cel.1} parent=11 // pred_fallthru
          _
        // Predicated region
        $region25: #{final_patch_expand_x4_cel.1} parent=11 // pred_check
          %p198 = pneg %p135
        $region26: #{final_patch_expand_x4_cel.1} parent=11 // pred_check_branch
          %200 = sbr.rel (%p198) target = $region28
        $region27: #{final_patch_expand_x4_cel.1} parent=11 // pred_region
          %202 = vsyncadd [#allocation6], 0
          %s204 = sshll.u32 %s4, 4
          %s205 = int_to_ptr.hbm [resolvable:$true] %s204
          %s206 = sshll.u32 [#allocation5], 4
          %s207 = int_to_ptr.vmem [resolvable:$true] %s206
          %209 = dma.hbm_to_vmem [thread:$0]  %s205, 32, %s207, [#allocation6]
        $region28: #{final_patch_expand_x4_cel.1} parent=11 // pred_fallthru
          _
      $region12: #{final_patch_expand_x4_cel.1} parent=5 // pred_fallthru
        _
      %p210 = scmp.lt.s32.totalorder %s13, 2
      // Predicated region
      $region29: #{final_patch_expand_x4_cel.1} parent=5 // pred_check
        %p211 = pneg %p210
      $region30: #{final_patch_expand_x4_cel.1} parent=5 // pred_check_branch
        %213 = sbr.rel (%p211) target = $region32
      $region31: #{final_patch_expand_x4_cel.1} parent=5 // pred_region
        // Predicated region
        $region33: #{final_patch_expand_x4_cel.1} parent=31 // pred_check
          %p214 = pneg %p45
        $region34: #{final_patch_expand_x4_cel.1} parent=31 // pred_check_branch
          %216 = sbr.rel (%p214) target = $region36
        $region35: #{final_patch_expand_x4_cel.1} parent=31 // pred_region
          %p217 = scmp.lt.s32.totalorder %s20, 1
          %s218 = scalar_select %p217, %s20, 1
          %s219 = smul.addr %s218, 48
          %s220 = smul.addr %s219, 8
          %s221 = scalar_lea.vmem %s0, %s220
        $region36: #{final_patch_expand_x4_cel.1} parent=31 // pred_fallthru
          _
      $region32: #{final_patch_expand_x4_cel.1} parent=5 // pred_fallthru
        _
      %p222 = scmp.le.s32.totalorder 1, %s13
      %p223 = scmp.lt.s32.totalorder %s13, 3
      %p224 = pnand %p222, %p223
      %p225 = pneg %p224
      // Predicated region
      $region37: #{final_patch_expand_x4_cel.1} parent=5 // pred_check
        _
      $region38: #{final_patch_expand_x4_cel.1} parent=5 // pred_check_branch
        %227 = sbr.rel (%p224) target = $region40
      $region39: #{final_patch_expand_x4_cel.1} parent=5 // pred_region
        %s228 = ssub.s32 %s13, 1
        // Predicated region
        $region41: #{final_patch_expand_x4_cel.1} parent=39 // pred_check
          %p229 = pneg %p114
        $region42: #{final_patch_expand_x4_cel.1} parent=39 // pred_check_branch
          %231 = sbr.rel (%p229) target = $region44
        $region43: #{final_patch_expand_x4_cel.1} parent=39 // pred_region
          %233 = dma.done [#allocation4], 2304
        $region44: #{final_patch_expand_x4_cel.1} parent=39 // pred_fallthru
          _
        // Predicated region
        $region45: #{final_patch_expand_x4_cel.1} parent=39 // pred_check
          %p234 = pneg %p135
        $region46: #{final_patch_expand_x4_cel.1} parent=39 // pred_check_branch
          %236 = sbr.rel (%p234) target = $region48
        $region47: #{final_patch_expand_x4_cel.1} parent=39 // pred_region
          %238 = dma.done [#allocation6], 32
        $region48: #{final_patch_expand_x4_cel.1} parent=39 // pred_fallthru
          _
        %p239 = scmp.lt.s32.totalorder %s22, 1
        %s240 = scalar_select %p239, %s22, 1
        %s241 = smul.addr %s240, 48
        %s242 = smul.addr %s241, 8
        %s243 = scalar_lea.vmem %s0, %s242
        %p244 = pneg %p51
        %p245 = pneg %p48
        %p246 = pneg %p72
        %p247 = pneg %p69
        %p248 = pneg %p93
        %p249 = pneg %p90
        %p250 = pneg %p114
        %p251 = pneg %p111
        %p252 = pneg %p135
        %p253 = pneg %p132
        %p254 = pneg %p163
        %p255 = pneg %p160
        %s256 = sadd.s32 %s22, %s23
        %s257 = smul.u32 32, %s256
        %p258 = scmp.lt.s32.totalorder %s257, 63
        %s259 = scalar_select %p258, %s257, 63
        %s260 = smul.addr %s259, 2
        %s261 = smul.addr %s260, 8
        %s262 = scalar_lea.vmem %s5, %s261
        %p263 = scmp.lt.s32.totalorder %s22, 1
        %s264 = scalar_select %p263, %s22, 1
        %s265 = smul.addr %s264, 48
        %s266 = smul.addr %s265, 8
        %s267 = scalar_lea.vmem %s0, %s266
        %s268 = sadd.s32 %s22, %s23
        %s269 = smul.u32 32, %s268
        %p270 = scmp.lt.s32.totalorder %s269, 63
        %s271 = scalar_select %p270, %s269, 63
        %s272 = smul.addr %s271, 2
        %s273 = smul.addr %s272, 8
        %s274 = scalar_lea.vmem %s5, %s273
        %s275 = sadd.s32 %s22, %s23
        %s276 = smul.u32 32, %s275
        %v278 = vld [vmem:[%s267] sm:$0xff]
        %v279 = vld [vmem:[%s267 + $0x8] sm:$0xff]
        %v280 = vld [vmem:[%s267 + $0x10] sm:$0x3]
        %v281 = vld [vmem:[%s267 + $0x18] sm:$0xff]
        %v282 = vld [vmem:[%s267 + $0x20] sm:$0xff]
        %v283 = vld [vmem:[%s267 + $0x28] sm:$0x3]
        %v284 = vld [vmem:[%s267 + $0x30] sm:$0xff]
        %v285 = vld [vmem:[%s267 + $0x38] sm:$0xff]
        %v286 = vld [vmem:[%s267 + $0x40] sm:$0x3]
        %v287 = vld [vmem:[%s267 + $0x48] sm:$0xff]
        %v288 = vld [vmem:[%s267 + $0x50] sm:$0xff]
        %v289 = vld [vmem:[%s267 + $0x58] sm:$0x3]
        %v290 = vld [vmem:[%s267 + $0x60] sm:$0xff]
        %v291 = vld [vmem:[%s267 + $0x68] sm:$0xff]
        %v292 = vld [vmem:[%s267 + $0x70] sm:$0x3]
        %v293 = vld [vmem:[%s267 + $0x78] sm:$0xff]
        %v294 = vld [vmem:[%s267 + $0x80] sm:$0xff]
        %v295 = vld [vmem:[%s267 + $0x88] sm:$0x3]
        %v296 = vld [vmem:[%s267 + $0x90] sm:$0xff]
        %v297 = vld [vmem:[%s267 + $0x98] sm:$0xff]
        %v298 = vld [vmem:[%s267 + $0xa0] sm:$0x3]
        %v299 = vld [vmem:[%s267 + $0xa8] sm:$0xff]
        %v300 = vld [vmem:[%s267 + $0xb0] sm:$0xff]
        %v301 = vld [vmem:[%s267 + $0xb8] sm:$0x3]
        %v302 = vld [vmem:[%s267 + $0xc0] sm:$0xff]
        %v303 = vld [vmem:[%s267 + $0xc8] sm:$0xff]
        %v304 = vld [vmem:[%s267 + $0xd0] sm:$0x3]
        %v305 = vld [vmem:[%s267 + $0xd8] sm:$0xff]
        %v306 = vld [vmem:[%s267 + $0xe0] sm:$0xff]
        %v307 = vld [vmem:[%s267 + $0xe8] sm:$0x3]
        %v308 = vld [vmem:[%s267 + $0xf0] sm:$0xff]
        %v309 = vld [vmem:[%s267 + $0xf8] sm:$0xff]
        %v310 = vld [vmem:[%s267 + $0x100] sm:$0x3]
        %v311 = vld [vmem:[%s267 + $0x108] sm:$0xff]
        %v312 = vld [vmem:[%s267 + $0x110] sm:$0xff]
        %v313 = vld [vmem:[%s267 + $0x118] sm:$0x3]
        %v314 = vld [vmem:[%s267 + $0x120] sm:$0xff]
        %v315 = vld [vmem:[%s267 + $0x128] sm:$0xff]
        %v316 = vld [vmem:[%s267 + $0x130] sm:$0x3]
        %v317 = vld [vmem:[%s267 + $0x138] sm:$0xff]
        %v318 = vld [vmem:[%s267 + $0x140] sm:$0xff]
        %v319 = vld [vmem:[%s267 + $0x148] sm:$0x3]
        %v320 = vld [vmem:[%s267 + $0x150] sm:$0xff]
        %v321 = vld [vmem:[%s267 + $0x158] sm:$0xff]
        %v322 = vld [vmem:[%s267 + $0x160] sm:$0x3]
        %v323 = vld [vmem:[%s267 + $0x168] sm:$0xff]
        %v324 = vld [vmem:[%s267 + $0x170] sm:$0xff]
        %v325 = vld [vmem:[%s267 + $0x178] sm:$0x3]
        %vm374 = vcmask 1046528
        %v375 = vrot.slane %v278, 1
        %v376 = vrot.slane %v279, 1
        %v377 = vsel %vm374, %v375, %v376
        %v378 = vrot.slane %v280, 1
        %v379 = vsel %vm374, %v376, %v378
        %v380 = vrot.slane %v281, 1
        %v381 = vrot.slane %v282, 1
        %v382 = vsel %vm374, %v380, %v381
        %v383 = vrot.slane %v283, 1
        %v384 = vsel %vm374, %v381, %v383
        %v385 = vrot.slane %v284, 1
        %v386 = vrot.slane %v285, 1
        %v387 = vsel %vm374, %v385, %v386
        %v388 = vrot.slane %v286, 1
        %v389 = vsel %vm374, %v386, %v388
        %v390 = vrot.slane %v287, 1
        %v391 = vrot.slane %v288, 1
        %v392 = vsel %vm374, %v390, %v391
        %v393 = vrot.slane %v289, 1
        %v394 = vsel %vm374, %v391, %v393
        %v395 = vrot.slane %v290, 1
        %v396 = vrot.slane %v291, 1
        %v397 = vsel %vm374, %v395, %v396
        %v398 = vrot.slane %v292, 1
        %v399 = vsel %vm374, %v396, %v398
        %v400 = vrot.slane %v293, 1
        %v401 = vrot.slane %v294, 1
        %v402 = vsel %vm374, %v400, %v401
        %v403 = vrot.slane %v295, 1
        %v404 = vsel %vm374, %v401, %v403
        %v405 = vrot.slane %v296, 1
        %v406 = vrot.slane %v297, 1
        %v407 = vsel %vm374, %v405, %v406
        %v408 = vrot.slane %v298, 1
        %v409 = vsel %vm374, %v406, %v408
        %v410 = vrot.slane %v299, 1
        %v411 = vrot.slane %v300, 1
        %v412 = vsel %vm374, %v410, %v411
        %v413 = vrot.slane %v301, 1
        %v414 = vsel %vm374, %v411, %v413
        %v415 = vrot.slane %v302, 1
        %v416 = vrot.slane %v303, 1
        %v417 = vsel %vm374, %v415, %v416
        %v418 = vrot.slane %v304, 1
        %v419 = vsel %vm374, %v416, %v418
        %v420 = vrot.slane %v305, 1
        %v421 = vrot.slane %v306, 1
        %v422 = vsel %vm374, %v420, %v421
        %v423 = vrot.slane %v307, 1
        %v424 = vsel %vm374, %v421, %v423
        %v425 = vrot.slane %v308, 1
        %v426 = vrot.slane %v309, 1
        %v427 = vsel %vm374, %v425, %v426
        %v428 = vrot.slane %v310, 1
        %v429 = vsel %vm374, %v426, %v428
        %v430 = vrot.slane %v311, 1
        %v431 = vrot.slane %v312, 1
        %v432 = vsel %vm374, %v430, %v431
        %v433 = vrot.slane %v313, 1
        %v434 = vsel %vm374, %v431, %v433
        %v435 = vrot.slane %v314, 1
        %v436 = vrot.slane %v315, 1
        %v437 = vsel %vm374, %v435, %v436
        %v438 = vrot.slane %v316, 1
        %v439 = vsel %vm374, %v436, %v438
        %v440 = vrot.slane %v317, 1
        %v441 = vrot.slane %v318, 1
        %v442 = vsel %vm374, %v440, %v441
        %v443 = vrot.slane %v319, 1
        %v444 = vsel %vm374, %v441, %v443
        %v445 = vrot.slane %v320, 1
        %v446 = vrot.slane %v321, 1
        %v447 = vsel %vm374, %v445, %v446
        %v448 = vrot.slane %v322, 1
        %v449 = vsel %vm374, %v446, %v448
        %v450 = vrot.slane %v323, 1
        %v451 = vrot.slane %v324, 1
        %v452 = vsel %vm374, %v450, %v451
        %v453 = vrot.slane %v325, 1
        %v454 = vsel %vm374, %v451, %v453
        %vm487 = vcmask 130048
        %v488 = vsel %vm487, %v377, 0.0
        %v489 = vsel %vm487, %v379, 0.0
        %v490 = vadd.f32 %v488, %v489
        %v491 = vrot.slane %v490, 4
        %v492 = vadd.f32 %v490, %v491
        %v493 = vrot.slane %v492, 2
        %v494 = vadd.f32 %v492, %v493
        %v495 = vrot.slane %v494, 1
        %v496 = vadd.f32 %v494, %v495
        %v497 = vsel %vm487, %v382, 0.0
        %v498 = vsel %vm487, %v384, 0.0
        %v499 = vadd.f32 %v497, %v498
        %v500 = vrot.slane %v499, 4
        %v501 = vadd.f32 %v499, %v500
        %v502 = vrot.slane %v501, 2
        %v503 = vadd.f32 %v501, %v502
        %v504 = vrot.slane %v503, 1
        %v505 = vadd.f32 %v503, %v504
        %v506 = vsel %vm487, %v387, 0.0
        %v507 = vsel %vm487, %v389, 0.0
        %v508 = vadd.f32 %v506, %v507
        %v509 = vrot.slane %v508, 4
        %v510 = vadd.f32 %v508, %v509
        %v511 = vrot.slane %v510, 2
        %v512 = vadd.f32 %v510, %v511
        %v513 = vrot.slane %v512, 1
        %v514 = vadd.f32 %v512, %v513
        %v515 = vsel %vm487, %v392, 0.0
        %v516 = vsel %vm487, %v394, 0.0
        %v517 = vadd.f32 %v515, %v516
        %v518 = vrot.slane %v517, 4
        %v519 = vadd.f32 %v517, %v518
        %v520 = vrot.slane %v519, 2
        %v521 = vadd.f32 %v519, %v520
        %v522 = vrot.slane %v521, 1
        %v523 = vadd.f32 %v521, %v522
        %v524 = vsel %vm487, %v397, 0.0
        %v525 = vsel %vm487, %v399, 0.0
        %v526 = vadd.f32 %v524, %v525
        %v527 = vrot.slane %v526, 4
        %v528 = vadd.f32 %v526, %v527
        %v529 = vrot.slane %v528, 2
        %v530 = vadd.f32 %v528, %v529
        %v531 = vrot.slane %v530, 1
        %v532 = vadd.f32 %v530, %v531
        %v533 = vsel %vm487, %v402, 0.0
        %v534 = vsel %vm487, %v404, 0.0
        %v535 = vadd.f32 %v533, %v534
        %v536 = vrot.slane %v535, 4
        %v537 = vadd.f32 %v535, %v536
        %v538 = vrot.slane %v537, 2
        %v539 = vadd.f32 %v537, %v538
        %v540 = vrot.slane %v539, 1
        %v541 = vadd.f32 %v539, %v540
        %v542 = vsel %vm487, %v407, 0.0
        %v543 = vsel %vm487, %v409, 0.0
        %v544 = vadd.f32 %v542, %v543
        %v545 = vrot.slane %v544, 4
        %v546 = vadd.f32 %v544, %v545
        %v547 = vrot.slane %v546, 2
        %v548 = vadd.f32 %v546, %v547
        %v549 = vrot.slane %v548, 1
        %v550 = vadd.f32 %v548, %v549
        %v551 = vsel %vm487, %v412, 0.0
        %v552 = vsel %vm487, %v414, 0.0
        %v553 = vadd.f32 %v551, %v552
        %v554 = vrot.slane %v553, 4
        %v555 = vadd.f32 %v553, %v554
        %v556 = vrot.slane %v555, 2
        %v557 = vadd.f32 %v555, %v556
        %v558 = vrot.slane %v557, 1
        %v559 = vadd.f32 %v557, %v558
        %v560 = vsel %vm487, %v417, 0.0
        %v561 = vsel %vm487, %v419, 0.0
        %v562 = vadd.f32 %v560, %v561
        %v563 = vrot.slane %v562, 4
        %v564 = vadd.f32 %v562, %v563
        %v565 = vrot.slane %v564, 2
        %v566 = vadd.f32 %v564, %v565
        %v567 = vrot.slane %v566, 1
        %v568 = vadd.f32 %v566, %v567
        %v569 = vsel %vm487, %v422, 0.0
        %v570 = vsel %vm487, %v424, 0.0
        %v571 = vadd.f32 %v569, %v570
        %v572 = vrot.slane %v571, 4
        %v573 = vadd.f32 %v571, %v572
        %v574 = vrot.slane %v573, 2
        %v575 = vadd.f32 %v573, %v574
        %v576 = vrot.slane %v575, 1
        %v577 = vadd.f32 %v575, %v576
        %v578 = vsel %vm487, %v427, 0.0
        %v579 = vsel %vm487, %v429, 0.0
        %v580 = vadd.f32 %v578, %v579
        %v581 = vrot.slane %v580, 4
        %v582 = vadd.f32 %v580, %v581
        %v583 = vrot.slane %v582, 2
        %v584 = vadd.f32 %v582, %v583
        %v585 = vrot.slane %v584, 1
        %v586 = vadd.f32 %v584, %v585
        %v587 = vsel %vm487, %v432, 0.0
        %v588 = vsel %vm487, %v434, 0.0
        %v589 = vadd.f32 %v587, %v588
        %v590 = vrot.slane %v589, 4
        %v591 = vadd.f32 %v589, %v590
        %v592 = vrot.slane %v591, 2
        %v593 = vadd.f32 %v591, %v592
        %v594 = vrot.slane %v593, 1
        %v595 = vadd.f32 %v593, %v594
        %v596 = vsel %vm487, %v437, 0.0
        %v597 = vsel %vm487, %v439, 0.0
        %v598 = vadd.f32 %v596, %v597
        %v599 = vrot.slane %v598, 4
        %v600 = vadd.f32 %v598, %v599
        %v601 = vrot.slane %v600, 2
        %v602 = vadd.f32 %v600, %v601
        %v603 = vrot.slane %v602, 1
        %v604 = vadd.f32 %v602, %v603
        %v605 = vsel %vm487, %v442, 0.0
        %v606 = vsel %vm487, %v444, 0.0
        %v607 = vadd.f32 %v605, %v606
        %v608 = vrot.slane %v607, 4
        %v609 = vadd.f32 %v607, %v608
        %v610 = vrot.slane %v609, 2
        %v611 = vadd.f32 %v609, %v610
        %v612 = vrot.slane %v611, 1
        %v613 = vadd.f32 %v611, %v612
        %v614 = vsel %vm487, %v447, 0.0
        %v615 = vsel %vm487, %v449, 0.0
        %v616 = vadd.f32 %v614, %v615
        %v617 = vrot.slane %v616, 4
        %v618 = vadd.f32 %v616, %v617
        %v619 = vrot.slane %v618, 2
        %v620 = vadd.f32 %v618, %v619
        %v621 = vrot.slane %v620, 1
        %v622 = vadd.f32 %v620, %v621
        %v623 = vsel %vm487, %v452, 0.0
        %v624 = vsel %vm487, %v454, 0.0
        %v625 = vadd.f32 %v623, %v624
        %v626 = vrot.slane %v625, 4
        %v627 = vadd.f32 %v625, %v626
        %v628 = vrot.slane %v627, 2
        %v629 = vadd.f32 %v627, %v628
        %v630 = vrot.slane %v629, 1
        %v631 = vadd.f32 %v629, %v630
        %v632 = vrcp.pop 16.0
        %v633 = vmul.f32 16.0, %v632
        %v634 = vsub.f32 1.0, %v633
        %v635 = vmul.f32 %v632, %v634
        %v636 = vadd.f32 %v632, %v635
        %vm637 = vweird.f32 %v632
        %v638 = vsel %vm637, %v632, %v636
        %v639 = vmul.f32 %v496, %v638
        %v640 = vmul.f32 %v505, %v638
        %v641 = vmul.f32 %v514, %v638
        %v642 = vmul.f32 %v523, %v638
        %v643 = vmul.f32 %v532, %v638
        %v644 = vmul.f32 %v541, %v638
        %v645 = vmul.f32 %v550, %v638
        %v646 = vmul.f32 %v559, %v638
        %v647 = vmul.f32 %v568, %v638
        %v648 = vmul.f32 %v577, %v638
        %v649 = vmul.f32 %v586, %v638
        %v650 = vmul.f32 %v595, %v638
        %v651 = vmul.f32 %v604, %v638
        %v652 = vmul.f32 %v613, %v638
        %v653 = vmul.f32 %v622, %v638
        %v654 = vmul.f32 %v631, %v638
        %v655 = vsub.f32 %v278, %v639
        %v656 = vsub.f32 %v279, %v639
        %v657 = vsub.f32 %v280, %v639
        %v658 = vsub.f32 %v281, %v640
        %v659 = vsub.f32 %v282, %v640
        %v660 = vsub.f32 %v283, %v640
        %v661 = vsub.f32 %v284, %v641
        %v662 = vsub.f32 %v285, %v641
        %v663 = vsub.f32 %v286, %v641
        %v664 = vsub.f32 %v287, %v642
        %v665 = vsub.f32 %v288, %v642
        %v666 = vsub.f32 %v289, %v642
        %v667 = vsub.f32 %v290, %v643
        %v668 = vsub.f32 %v291, %v643
        %v669 = vsub.f32 %v292, %v643
        %v670 = vsub.f32 %v293, %v644
        %v671 = vsub.f32 %v294, %v644
        %v672 = vsub.f32 %v295, %v644
        %v673 = vsub.f32 %v296, %v645
        %v674 = vsub.f32 %v297, %v645
        %v675 = vsub.f32 %v298, %v645
        %v676 = vsub.f32 %v299, %v646
        %v677 = vsub.f32 %v300, %v646
        %v678 = vsub.f32 %v301, %v646
        %v679 = vsub.f32 %v302, %v647
        %v680 = vsub.f32 %v303, %v647
        %v681 = vsub.f32 %v304, %v647
        %v682 = vsub.f32 %v305, %v648
        %v683 = vsub.f32 %v306, %v648
        %v684 = vsub.f32 %v307, %v648
        %v685 = vsub.f32 %v308, %v649
        %v686 = vsub.f32 %v309, %v649
        %v687 = vsub.f32 %v310, %v649
        %v688 = vsub.f32 %v311, %v650
        %v689 = vsub.f32 %v312, %v650
        %v690 = vsub.f32 %v313, %v650
        %v691 = vsub.f32 %v314, %v651
        %v692 = vsub.f32 %v315, %v651
        %v693 = vsub.f32 %v316, %v651
        %v694 = vsub.f32 %v317, %v652
        %v695 = vsub.f32 %v318, %v652
        %v696 = vsub.f32 %v319, %v652
        %v697 = vsub.f32 %v320, %v653
        %v698 = vsub.f32 %v321, %v653
        %v699 = vsub.f32 %v322, %v653
        %v700 = vsub.f32 %v323, %v654
        %v701 = vsub.f32 %v324, %v654
        %v702 = vsub.f32 %v325, %v654
        %v703 = vmul.f32 %v655, %v655
        %v704 = vmul.f32 %v656, %v656
        %v705 = vmul.f32 %v657, %v657
        %v706 = vmul.f32 %v658, %v658
        %v707 = vmul.f32 %v659, %v659
        %v708 = vmul.f32 %v660, %v660
        %v709 = vmul.f32 %v661, %v661
        %v710 = vmul.f32 %v662, %v662
        %v711 = vmul.f32 %v663, %v663
        %v712 = vmul.f32 %v664, %v664
        %v713 = vmul.f32 %v665, %v665
        %v714 = vmul.f32 %v666, %v666
        %v715 = vmul.f32 %v667, %v667
        %v716 = vmul.f32 %v668, %v668
        %v717 = vmul.f32 %v669, %v669
        %v718 = vmul.f32 %v670, %v670
        %v719 = vmul.f32 %v671, %v671
        %v720 = vmul.f32 %v672, %v672
        %v721 = vmul.f32 %v673, %v673
        %v722 = vmul.f32 %v674, %v674
        %v723 = vmul.f32 %v675, %v675
        %v724 = vmul.f32 %v676, %v676
        %v725 = vmul.f32 %v677, %v677
        %v726 = vmul.f32 %v678, %v678
        %v727 = vmul.f32 %v679, %v679
        %v728 = vmul.f32 %v680, %v680
        %v729 = vmul.f32 %v681, %v681
        %v730 = vmul.f32 %v682, %v682
        %v731 = vmul.f32 %v683, %v683
        %v732 = vmul.f32 %v684, %v684
        %v733 = vmul.f32 %v685, %v685
        %v734 = vmul.f32 %v686, %v686
        %v735 = vmul.f32 %v687, %v687
        %v736 = vmul.f32 %v688, %v688
        %v737 = vmul.f32 %v689, %v689
        %v738 = vmul.f32 %v690, %v690
        %v739 = vmul.f32 %v691, %v691
        %v740 = vmul.f32 %v692, %v692
        %v741 = vmul.f32 %v693, %v693
        %v742 = vmul.f32 %v694, %v694
        %v743 = vmul.f32 %v695, %v695
        %v744 = vmul.f32 %v696, %v696
        %v745 = vmul.f32 %v697, %v697
        %v746 = vmul.f32 %v698, %v698
        %v747 = vmul.f32 %v699, %v699
        %v748 = vmul.f32 %v700, %v700
        %v749 = vmul.f32 %v701, %v701
        %v750 = vmul.f32 %v702, %v702
        %v799 = vrot.slane %v703, 1
        %v800 = vrot.slane %v704, 1
        %v801 = vsel %vm374, %v799, %v800
        %v802 = vrot.slane %v705, 1
        %v803 = vsel %vm374, %v800, %v802
        %v804 = vrot.slane %v706, 1
        %v805 = vrot.slane %v707, 1
        %v806 = vsel %vm374, %v804, %v805
        %v807 = vrot.slane %v708, 1
        %v808 = vsel %vm374, %v805, %v807
        %v809 = vrot.slane %v709, 1
        %v810 = vrot.slane %v710, 1
        %v811 = vsel %vm374, %v809, %v810
        %v812 = vrot.slane %v711, 1
        %v813 = vsel %vm374, %v810, %v812
        %v814 = vrot.slane %v712, 1
        %v815 = vrot.slane %v713, 1
        %v816 = vsel %vm374, %v814, %v815
        %v817 = vrot.slane %v714, 1
        %v818 = vsel %vm374, %v815, %v817
        %v819 = vrot.slane %v715, 1
        %v820 = vrot.slane %v716, 1
        %v821 = vsel %vm374, %v819, %v820
        %v822 = vrot.slane %v717, 1
        %v823 = vsel %vm374, %v820, %v822
        %v824 = vrot.slane %v718, 1
        %v825 = vrot.slane %v719, 1
        %v826 = vsel %vm374, %v824, %v825
        %v827 = vrot.slane %v720, 1
        %v828 = vsel %vm374, %v825, %v827
        %v829 = vrot.slane %v721, 1
        %v830 = vrot.slane %v722, 1
        %v831 = vsel %vm374, %v829, %v830
        %v832 = vrot.slane %v723, 1
        %v833 = vsel %vm374, %v830, %v832
        %v834 = vrot.slane %v724, 1
        %v835 = vrot.slane %v725, 1
        %v836 = vsel %vm374, %v834, %v835
        %v837 = vrot.slane %v726, 1
        %v838 = vsel %vm374, %v835, %v837
        %v839 = vrot.slane %v727, 1
        %v840 = vrot.slane %v728, 1
        %v841 = vsel %vm374, %v839, %v840
        %v842 = vrot.slane %v729, 1
        %v843 = vsel %vm374, %v840, %v842
        %v844 = vrot.slane %v730, 1
        %v845 = vrot.slane %v731, 1
        %v846 = vsel %vm374, %v844, %v845
        %v847 = vrot.slane %v732, 1
        %v848 = vsel %vm374, %v845, %v847
        %v849 = vrot.slane %v733, 1
        %v850 = vrot.slane %v734, 1
        %v851 = vsel %vm374, %v849, %v850
        %v852 = vrot.slane %v735, 1
        %v853 = vsel %vm374, %v850, %v852
        %v854 = vrot.slane %v736, 1
        %v855 = vrot.slane %v737, 1
        %v856 = vsel %vm374, %v854, %v855
        %v857 = vrot.slane %v738, 1
        %v858 = vsel %vm374, %v855, %v857
        %v859 = vrot.slane %v739, 1
        %v860 = vrot.slane %v740, 1
        %v861 = vsel %vm374, %v859, %v860
        %v862 = vrot.slane %v741, 1
        %v863 = vsel %vm374, %v860, %v862
        %v864 = vrot.slane %v742, 1
        %v865 = vrot.slane %v743, 1
        %v866 = vsel %vm374, %v864, %v865
        %v867 = vrot.slane %v744, 1
        %v868 = vsel %vm374, %v865, %v867
        %v869 = vrot.slane %v745, 1
        %v870 = vrot.slane %v746, 1
        %v871 = vsel %vm374, %v869, %v870
        %v872 = vrot.slane %v747, 1
        %v873 = vsel %vm374, %v870, %v872
        %v874 = vrot.slane %v748, 1
        %v875 = vrot.slane %v749, 1
        %v876 = vsel %vm374, %v874, %v875
        %v877 = vrot.slane %v750, 1
        %v878 = vsel %vm374, %v875, %v877
        %v911 = vsel %vm487, %v801, 0.0
        %v912 = vsel %vm487, %v803, 0.0
        %v913 = vadd.f32 %v911, %v912
        %v914 = vrot.slane %v913, 4
        %v915 = vadd.f32 %v913, %v914
        %v916 = vrot.slane %v915, 2
        %v917 = vadd.f32 %v915, %v916
        %v918 = vrot.slane %v917, 1
        %v919 = vadd.f32 %v917, %v918
        %v920 = vsel %vm487, %v806, 0.0
        %v921 = vsel %vm487, %v808, 0.0
        %v922 = vadd.f32 %v920, %v921
        %v923 = vrot.slane %v922, 4
        %v924 = vadd.f32 %v922, %v923
        %v925 = vrot.slane %v924, 2
        %v926 = vadd.f32 %v924, %v925
        %v927 = vrot.slane %v926, 1
        %v928 = vadd.f32 %v926, %v927
        %v929 = vsel %vm487, %v811, 0.0
        %v930 = vsel %vm487, %v813, 0.0
        %v931 = vadd.f32 %v929, %v930
        %v932 = vrot.slane %v931, 4
        %v933 = vadd.f32 %v931, %v932
        %v934 = vrot.slane %v933, 2
        %v935 = vadd.f32 %v933, %v934
        %v936 = vrot.slane %v935, 1
        %v937 = vadd.f32 %v935, %v936
        %v938 = vsel %vm487, %v816, 0.0
        %v939 = vsel %vm487, %v818, 0.0
        %v940 = vadd.f32 %v938, %v939
        %v941 = vrot.slane %v940, 4
        %v942 = vadd.f32 %v940, %v941
        %v943 = vrot.slane %v942, 2
        %v944 = vadd.f32 %v942, %v943
        %v945 = vrot.slane %v944, 1
        %v946 = vadd.f32 %v944, %v945
        %v947 = vsel %vm487, %v821, 0.0
        %v948 = vsel %vm487, %v823, 0.0
        %v949 = vadd.f32 %v947, %v948
        %v950 = vrot.slane %v949, 4
        %v951 = vadd.f32 %v949, %v950
        %v952 = vrot.slane %v951, 2
        %v953 = vadd.f32 %v951, %v952
        %v954 = vrot.slane %v953, 1
        %v955 = vadd.f32 %v953, %v954
        %v956 = vsel %vm487, %v826, 0.0
        %v957 = vsel %vm487, %v828, 0.0
        %v958 = vadd.f32 %v956, %v957
        %v959 = vrot.slane %v958, 4
        %v960 = vadd.f32 %v958, %v959
        %v961 = vrot.slane %v960, 2
        %v962 = vadd.f32 %v960, %v961
        %v963 = vrot.slane %v962, 1
        %v964 = vadd.f32 %v962, %v963
        %v965 = vsel %vm487, %v831, 0.0
        %v966 = vsel %vm487, %v833, 0.0
        %v967 = vadd.f32 %v965, %v966
        %v968 = vrot.slane %v967, 4
        %v969 = vadd.f32 %v967, %v968
        %v970 = vrot.slane %v969, 2
        %v971 = vadd.f32 %v969, %v970
        %v972 = vrot.slane %v971, 1
        %v973 = vadd.f32 %v971, %v972
        %v974 = vsel %vm487, %v836, 0.0
        %v975 = vsel %vm487, %v838, 0.0
        %v976 = vadd.f32 %v974, %v975
        %v977 = vrot.slane %v976, 4
        %v978 = vadd.f32 %v976, %v977
        %v979 = vrot.slane %v978, 2
        %v980 = vadd.f32 %v978, %v979
        %v981 = vrot.slane %v980, 1
        %v982 = vadd.f32 %v980, %v981
        %v983 = vsel %vm487, %v841, 0.0
        %v984 = vsel %vm487, %v843, 0.0
        %v985 = vadd.f32 %v983, %v984
        %v986 = vrot.slane %v985, 4
        %v987 = vadd.f32 %v985, %v986
        %v988 = vrot.slane %v987, 2
        %v989 = vadd.f32 %v987, %v988
        %v990 = vrot.slane %v989, 1
        %v991 = vadd.f32 %v989, %v990
        %v992 = vsel %vm487, %v846, 0.0
        %v993 = vsel %vm487, %v848, 0.0
        %v994 = vadd.f32 %v992, %v993
        %v995 = vrot.slane %v994, 4
        %v996 = vadd.f32 %v994, %v995
        %v997 = vrot.slane %v996, 2
        %v998 = vadd.f32 %v996, %v997
        %v999 = vrot.slane %v998, 1
        %v1000 = vadd.f32 %v998, %v999
        %v1001 = vsel %vm487, %v851, 0.0
        %v1002 = vsel %vm487, %v853, 0.0
        %v1003 = vadd.f32 %v1001, %v1002
        %v1004 = vrot.slane %v1003, 4
        %v1005 = vadd.f32 %v1003, %v1004
        %v1006 = vrot.slane %v1005, 2
        %v1007 = vadd.f32 %v1005, %v1006
        %v1008 = vrot.slane %v1007, 1
        %v1009 = vadd.f32 %v1007, %v1008
        %v1010 = vsel %vm487, %v856, 0.0
        %v1011 = vsel %vm487, %v858, 0.0
        %v1012 = vadd.f32 %v1010, %v1011
        %v1013 = vrot.slane %v1012, 4
        %v1014 = vadd.f32 %v1012, %v1013
        %v1015 = vrot.slane %v1014, 2
        %v1016 = vadd.f32 %v1014, %v1015
        %v1017 = vrot.slane %v1016, 1
        %v1018 = vadd.f32 %v1016, %v1017
        %v1019 = vsel %vm487, %v861, 0.0
        %v1020 = vsel %vm487, %v863, 0.0
        %v1021 = vadd.f32 %v1019, %v1020
        %v1022 = vrot.slane %v1021, 4
        %v1023 = vadd.f32 %v1021, %v1022
        %v1024 = vrot.slane %v1023, 2
        %v1025 = vadd.f32 %v1023, %v1024
        %v1026 = vrot.slane %v1025, 1
        %v1027 = vadd.f32 %v1025, %v1026
        %v1028 = vsel %vm487, %v866, 0.0
        %v1029 = vsel %vm487, %v868, 0.0
        %v1030 = vadd.f32 %v1028, %v1029
        %v1031 = vrot.slane %v1030, 4
        %v1032 = vadd.f32 %v1030, %v1031
        %v1033 = vrot.slane %v1032, 2
        %v1034 = vadd.f32 %v1032, %v1033
        %v1035 = vrot.slane %v1034, 1
        %v1036 = vadd.f32 %v1034, %v1035
        %v1037 = vsel %vm487, %v871, 0.0
        %v1038 = vsel %vm487, %v873, 0.0
        %v1039 = vadd.f32 %v1037, %v1038
        %v1040 = vrot.slane %v1039, 4
        %v1041 = vadd.f32 %v1039, %v1040
        %v1042 = vrot.slane %v1041, 2
        %v1043 = vadd.f32 %v1041, %v1042
        %v1044 = vrot.slane %v1043, 1
        %v1045 = vadd.f32 %v1043, %v1044
        %v1046 = vsel %vm487, %v876, 0.0
        %v1047 = vsel %vm487, %v878, 0.0
        %v1048 = vadd.f32 %v1046, %v1047
        %v1049 = vrot.slane %v1048, 4
        %v1050 = vadd.f32 %v1048, %v1049
        %v1051 = vrot.slane %v1050, 2
        %v1052 = vadd.f32 %v1050, %v1051
        %v1053 = vrot.slane %v1052, 1
        %v1054 = vadd.f32 %v1052, %v1053
        %v1055 = vmul.f32 %v919, %v638
        %v1056 = vmul.f32 %v928, %v638
        %v1057 = vmul.f32 %v937, %v638
        %v1058 = vmul.f32 %v946, %v638
        %v1059 = vmul.f32 %v955, %v638
        %v1060 = vmul.f32 %v964, %v638
        %v1061 = vmul.f32 %v973, %v638
        %v1062 = vmul.f32 %v982, %v638
        %v1063 = vmul.f32 %v991, %v638
        %v1064 = vmul.f32 %v1000, %v638
        %v1065 = vmul.f32 %v1009, %v638
        %v1066 = vmul.f32 %v1018, %v638
        %v1067 = vmul.f32 %v1027, %v638
        %v1068 = vmul.f32 %v1036, %v638
        %v1069 = vmul.f32 %v1045, %v638
        %v1070 = vmul.f32 %v1054, %v638
        %v1071 = vadd.f32 %v1055, 1e-05
        %v1072 = vadd.f32 %v1056, 1e-05
        %v1073 = vadd.f32 %v1057, 1e-05
        %v1074 = vadd.f32 %v1058, 1e-05
        %v1075 = vadd.f32 %v1059, 1e-05
        %v1076 = vadd.f32 %v1060, 1e-05
        %v1077 = vadd.f32 %v1061, 1e-05
        %v1078 = vadd.f32 %v1062, 1e-05
        %v1079 = vadd.f32 %v1063, 1e-05
        %v1080 = vadd.f32 %v1064, 1e-05
        %v1081 = vadd.f32 %v1065, 1e-05
        %v1082 = vadd.f32 %v1066, 1e-05
        %v1083 = vadd.f32 %v1067, 1e-05
        %v1084 = vadd.f32 %v1068, 1e-05
        %v1085 = vadd.f32 %v1069, 1e-05
        %v1086 = vadd.f32 %v1070, 1e-05
        %v1087 = vrsqrt.pop %v1071
        %v1088 = vmul.f32 %v1087, %v1071
        %v1089 = vmul.f32 %v1088, %v1087
        %v1090 = vmul.f32 0.5, %v1089
        %v1091 = vsub.f32 1.5, %v1090
        %v1092 = vmul.f32 %v1087, %v1091
        %vm1093 = vweird.f32 %v1071
        %vm1094 = vweird.f32 %v1087
        %vm1095 = vmor %vm1093, %vm1094
        %v1096 = vsel %vm1095, %v1087, %v1092
        %v1097 = vrsqrt.pop %v1072
        %v1098 = vmul.f32 %v1097, %v1072
        %v1099 = vmul.f32 %v1098, %v1097
        %v1100 = vmul.f32 0.5, %v1099
        %v1101 = vsub.f32 1.5, %v1100
        %v1102 = vmul.f32 %v1097, %v1101
        %vm1103 = vweird.f32 %v1072
        %vm1104 = vweird.f32 %v1097
        %vm1105 = vmor %vm1103, %vm1104
        %v1106 = vsel %vm1105, %v1097, %v1102
        %v1107 = vrsqrt.pop %v1073
        %v1108 = vmul.f32 %v1107, %v1073
        %v1109 = vmul.f32 %v1108, %v1107
        %v1110 = vmul.f32 0.5, %v1109
        %v1111 = vsub.f32 1.5, %v1110
        %v1112 = vmul.f32 %v1107, %v1111
        %vm1113 = vweird.f32 %v1073
        %vm1114 = vweird.f32 %v1107
        %vm1115 = vmor %vm1113, %vm1114
        %v1116 = vsel %vm1115, %v1107, %v1112
        %v1117 = vrsqrt.pop %v1074
        %v1118 = vmul.f32 %v1117, %v1074
        %v1119 = vmul.f32 %v1118, %v1117
        %v1120 = vmul.f32 0.5, %v1119
        %v1121 = vsub.f32 1.5, %v1120
        %v1122 = vmul.f32 %v1117, %v1121
        %vm1123 = vweird.f32 %v1074
        %vm1124 = vweird.f32 %v1117
        %vm1125 = vmor %vm1123, %vm1124
        %v1126 = vsel %vm1125, %v1117, %v1122
        %v1127 = vrsqrt.pop %v1075
        %v1128 = vmul.f32 %v1127, %v1075
        %v1129 = vmul.f32 %v1128, %v1127
        %v1130 = vmul.f32 0.5, %v1129
        %v1131 = vsub.f32 1.5, %v1130
        %v1132 = vmul.f32 %v1127, %v1131
        %vm1133 = vweird.f32 %v1075
        %vm1134 = vweird.f32 %v1127
        %vm1135 = vmor %vm1133, %vm1134
        %v1136 = vsel %vm1135, %v1127, %v1132
        %v1137 = vrsqrt.pop %v1076
        %v1138 = vmul.f32 %v1137, %v1076
        %v1139 = vmul.f32 %v1138, %v1137
        %v1140 = vmul.f32 0.5, %v1139
        %v1141 = vsub.f32 1.5, %v1140
        %v1142 = vmul.f32 %v1137, %v1141
        %vm1143 = vweird.f32 %v1076
        %vm1144 = vweird.f32 %v1137
        %vm1145 = vmor %vm1143, %vm1144
        %v1146 = vsel %vm1145, %v1137, %v1142
        %v1147 = vrsqrt.pop %v1077
        %v1148 = vmul.f32 %v1147, %v1077
        %v1149 = vmul.f32 %v1148, %v1147
        %v1150 = vmul.f32 0.5, %v1149
        %v1151 = vsub.f32 1.5, %v1150
        %v1152 = vmul.f32 %v1147, %v1151
        %vm1153 = vweird.f32 %v1077
        %vm1154 = vweird.f32 %v1147
        %vm1155 = vmor %vm1153, %vm1154
        %v1156 = vsel %vm1155, %v1147, %v1152
        %v1157 = vrsqrt.pop %v1078
        %v1158 = vmul.f32 %v1157, %v1078
        %v1159 = vmul.f32 %v1158, %v1157
        %v1160 = vmul.f32 0.5, %v1159
        %v1161 = vsub.f32 1.5, %v1160
        %v1162 = vmul.f32 %v1157, %v1161
        %vm1163 = vweird.f32 %v1078
        %vm1164 = vweird.f32 %v1157
        %vm1165 = vmor %vm1163, %vm1164
        %v1166 = vsel %vm1165, %v1157, %v1162
        %v1167 = vrsqrt.pop %v1079
        %v1168 = vmul.f32 %v1167, %v1079
        %v1169 = vmul.f32 %v1168, %v1167
        %v1170 = vmul.f32 0.5, %v1169
        %v1171 = vsub.f32 1.5, %v1170
        %v1172 = vmul.f32 %v1167, %v1171
        %vm1173 = vweird.f32 %v1079
        %vm1174 = vweird.f32 %v1167
        %vm1175 = vmor %vm1173, %vm1174
        %v1176 = vsel %vm1175, %v1167, %v1172
        %v1177 = vrsqrt.pop %v1080
        %v1178 = vmul.f32 %v1177, %v1080
        %v1179 = vmul.f32 %v1178, %v1177
        %v1180 = vmul.f32 0.5, %v1179
        %v1181 = vsub.f32 1.5, %v1180
        %v1182 = vmul.f32 %v1177, %v1181
        %vm1183 = vweird.f32 %v1080
        %vm1184 = vweird.f32 %v1177
        %vm1185 = vmor %vm1183, %vm1184
        %v1186 = vsel %vm1185, %v1177, %v1182
        %v1187 = vrsqrt.pop %v1081
        %v1188 = vmul.f32 %v1187, %v1081
        %v1189 = vmul.f32 %v1188, %v1187
        %v1190 = vmul.f32 0.5, %v1189
        %v1191 = vsub.f32 1.5, %v1190
        %v1192 = vmul.f32 %v1187, %v1191
        %vm1193 = vweird.f32 %v1081
        %vm1194 = vweird.f32 %v1187
        %vm1195 = vmor %vm1193, %vm1194
        %v1196 = vsel %vm1195, %v1187, %v1192
        %v1197 = vrsqrt.pop %v1082
        %v1198 = vmul.f32 %v1197, %v1082
        %v1199 = vmul.f32 %v1198, %v1197
        %v1200 = vmul.f32 0.5, %v1199
        %v1201 = vsub.f32 1.5, %v1200
        %v1202 = vmul.f32 %v1197, %v1201
        %vm1203 = vweird.f32 %v1082
        %vm1204 = vweird.f32 %v1197
        %vm1205 = vmor %vm1203, %vm1204
        %v1206 = vsel %vm1205, %v1197, %v1202
        %v1207 = vrsqrt.pop %v1083
        %v1208 = vmul.f32 %v1207, %v1083
        %v1209 = vmul.f32 %v1208, %v1207
        %v1210 = vmul.f32 0.5, %v1209
        %v1211 = vsub.f32 1.5, %v1210
        %v1212 = vmul.f32 %v1207, %v1211
        %vm1213 = vweird.f32 %v1083
        %vm1214 = vweird.f32 %v1207
        %vm1215 = vmor %vm1213, %vm1214
        %v1216 = vsel %vm1215, %v1207, %v1212
        %v1217 = vrsqrt.pop %v1084
        %v1218 = vmul.f32 %v1217, %v1084
        %v1219 = vmul.f32 %v1218, %v1217
        %v1220 = vmul.f32 0.5, %v1219
        %v1221 = vsub.f32 1.5, %v1220
        %v1222 = vmul.f32 %v1217, %v1221
        %vm1223 = vweird.f32 %v1084
        %vm1224 = vweird.f32 %v1217
        %vm1225 = vmor %vm1223, %vm1224
        %v1226 = vsel %vm1225, %v1217, %v1222
        %v1227 = vrsqrt.pop %v1085
        %v1228 = vmul.f32 %v1227, %v1085
        %v1229 = vmul.f32 %v1228, %v1227
        %v1230 = vmul.f32 0.5, %v1229
        %v1231 = vsub.f32 1.5, %v1230
        %v1232 = vmul.f32 %v1227, %v1231
        %vm1233 = vweird.f32 %v1085
        %vm1234 = vweird.f32 %v1227
        %vm1235 = vmor %vm1233, %vm1234
        %v1236 = vsel %vm1235, %v1227, %v1232
        %v1237 = vrsqrt.pop %v1086
        %v1238 = vmul.f32 %v1237, %v1086
        %v1239 = vmul.f32 %v1238, %v1237
        %v1240 = vmul.f32 0.5, %v1239
        %v1241 = vsub.f32 1.5, %v1240
        %v1242 = vmul.f32 %v1237, %v1241
        %vm1243 = vweird.f32 %v1086
        %vm1244 = vweird.f32 %v1237
        %vm1245 = vmor %vm1243, %vm1244
        %v1246 = vsel %vm1245, %v1237, %v1242
        %v1247 = vmul.f32 %v655, %v1096
        %v1248 = vmul.f32 %v656, %v1096
        %v1249 = vmul.f32 %v657, %v1096
        %v1250 = vmul.f32 %v658, %v1106
        %v1251 = vmul.f32 %v659, %v1106
        %v1252 = vmul.f32 %v660, %v1106
        %v1253 = vmul.f32 %v661, %v1116
        %v1254 = vmul.f32 %v662, %v1116
        %v1255 = vmul.f32 %v663, %v1116
        %v1256 = vmul.f32 %v664, %v1126
        %v1257 = vmul.f32 %v665, %v1126
        %v1258 = vmul.f32 %v666, %v1126
        %v1259 = vmul.f32 %v667, %v1136
        %v1260 = vmul.f32 %v668, %v1136
        %v1261 = vmul.f32 %v669, %v1136
        %v1262 = vmul.f32 %v670, %v1146
        %v1263 = vmul.f32 %v671, %v1146
        %v1264 = vmul.f32 %v672, %v1146
        %v1265 = vmul.f32 %v673, %v1156
        %v1266 = vmul.f32 %v674, %v1156
        %v1267 = vmul.f32 %v675, %v1156
        %v1268 = vmul.f32 %v676, %v1166
        %v1269 = vmul.f32 %v677, %v1166
        %v1270 = vmul.f32 %v678, %v1166
        %v1271 = vmul.f32 %v679, %v1176
        %v1272 = vmul.f32 %v680, %v1176
        %v1273 = vmul.f32 %v681, %v1176
        %v1274 = vmul.f32 %v682, %v1186
        %v1275 = vmul.f32 %v683, %v1186
        %v1276 = vmul.f32 %v684, %v1186
        %v1277 = vmul.f32 %v685, %v1196
        %v1278 = vmul.f32 %v686, %v1196
        %v1279 = vmul.f32 %v687, %v1196
        %v1280 = vmul.f32 %v688, %v1206
        %v1281 = vmul.f32 %v689, %v1206
        %v1282 = vmul.f32 %v690, %v1206
        %v1283 = vmul.f32 %v691, %v1216
        %v1284 = vmul.f32 %v692, %v1216
        %v1285 = vmul.f32 %v693, %v1216
        %v1286 = vmul.f32 %v694, %v1226
        %v1287 = vmul.f32 %v695, %v1226
        %v1288 = vmul.f32 %v696, %v1226
        %v1289 = vmul.f32 %v697, %v1236
        %v1290 = vmul.f32 %v698, %v1236
        %v1291 = vmul.f32 %v699, %v1236
        %v1292 = vmul.f32 %v700, %v1246
        %v1293 = vmul.f32 %v701, %v1246
        %v1294 = vmul.f32 %v702, %v1246
        %v1295 = vld [vmem:[%s1] sm:$0xff]
        %v1296 = vld [vmem:[%s1 + $0x8] sm:$0xff]
        %v1297 = vld [vmem:[%s1 + $0x10] sm:$0x3]
        %v1298 = vmul.f32 %v1247, %v1295
        %v1299 = vmul.f32 %v1248, %v1296
        %v1300 = vmul.f32 %v1249, %v1297
        %v1301 = vmul.f32 %v1250, %v1295
        %v1302 = vmul.f32 %v1251, %v1296
        %v1303 = vmul.f32 %v1252, %v1297
        %v1304 = vmul.f32 %v1253, %v1295
        %v1305 = vmul.f32 %v1254, %v1296
        %v1306 = vmul.f32 %v1255, %v1297
        %v1307 = vmul.f32 %v1256, %v1295
        %v1308 = vmul.f32 %v1257, %v1296
        %v1309 = vmul.f32 %v1258, %v1297
        %v1310 = vmul.f32 %v1259, %v1295
        %v1311 = vmul.f32 %v1260, %v1296
        %v1312 = vmul.f32 %v1261, %v1297
        %v1313 = vmul.f32 %v1262, %v1295
        %v1314 = vmul.f32 %v1263, %v1296
        %v1315 = vmul.f32 %v1264, %v1297
        %v1316 = vmul.f32 %v1265, %v1295
        %v1317 = vmul.f32 %v1266, %v1296
        %v1318 = vmul.f32 %v1267, %v1297
        %v1319 = vmul.f32 %v1268, %v1295
        %v1320 = vmul.f32 %v1269, %v1296
        %v1321 = vmul.f32 %v1270, %v1297
        %v1322 = vmul.f32 %v1271, %v1295
        %v1323 = vmul.f32 %v1272, %v1296
        %v1324 = vmul.f32 %v1273, %v1297
        %v1325 = vmul.f32 %v1274, %v1295
        %v1326 = vmul.f32 %v1275, %v1296
        %v1327 = vmul.f32 %v1276, %v1297
        %v1328 = vmul.f32 %v1277, %v1295
        %v1329 = vmul.f32 %v1278, %v1296
        %v1330 = vmul.f32 %v1279, %v1297
        %v1331 = vmul.f32 %v1280, %v1295
        %v1332 = vmul.f32 %v1281, %v1296
        %v1333 = vmul.f32 %v1282, %v1297
        %v1334 = vmul.f32 %v1283, %v1295
        %v1335 = vmul.f32 %v1284, %v1296
        %v1336 = vmul.f32 %v1285, %v1297
        %v1337 = vmul.f32 %v1286, %v1295
        %v1338 = vmul.f32 %v1287, %v1296
        %v1339 = vmul.f32 %v1288, %v1297
        %v1340 = vmul.f32 %v1289, %v1295
        %v1341 = vmul.f32 %v1290, %v1296
        %v1342 = vmul.f32 %v1291, %v1297
        %v1343 = vmul.f32 %v1292, %v1295
        %v1344 = vmul.f32 %v1293, %v1296
        %v1345 = vmul.f32 %v1294, %v1297
        %v1346 = vld [vmem:[%s2] sm:$0xff]
        %v1347 = vld [vmem:[%s2 + $0x8] sm:$0xff]
        %v1348 = vld [vmem:[%s2 + $0x10] sm:$0x3]
        %v1349 = vadd.f32 %v1298, %v1346
        %v1350 = vadd.f32 %v1299, %v1347
        %v1351 = vadd.f32 %v1300, %v1348
        %v1352 = vadd.f32 %v1301, %v1346
        %v1353 = vadd.f32 %v1302, %v1347
        %v1354 = vadd.f32 %v1303, %v1348
        %v1355 = vadd.f32 %v1304, %v1346
        %v1356 = vadd.f32 %v1305, %v1347
        %v1357 = vadd.f32 %v1306, %v1348
        %v1358 = vadd.f32 %v1307, %v1346
        %v1359 = vadd.f32 %v1308, %v1347
        %v1360 = vadd.f32 %v1309, %v1348
        %v1361 = vadd.f32 %v1310, %v1346
        %v1362 = vadd.f32 %v1311, %v1347
        %v1363 = vadd.f32 %v1312, %v1348
        %v1364 = vadd.f32 %v1313, %v1346
        %v1365 = vadd.f32 %v1314, %v1347
        %v1366 = vadd.f32 %v1315, %v1348
        %v1367 = vadd.f32 %v1316, %v1346
        %v1368 = vadd.f32 %v1317, %v1347
        %v1369 = vadd.f32 %v1318, %v1348
        %v1370 = vadd.f32 %v1319, %v1346
        %v1371 = vadd.f32 %v1320, %v1347
        %v1372 = vadd.f32 %v1321, %v1348
        %v1373 = vadd.f32 %v1322, %v1346
        %v1374 = vadd.f32 %v1323, %v1347
        %v1375 = vadd.f32 %v1324, %v1348
        %v1376 = vadd.f32 %v1325, %v1346
        %v1377 = vadd.f32 %v1326, %v1347
        %v1378 = vadd.f32 %v1327, %v1348
        %v1379 = vadd.f32 %v1328, %v1346
        %v1380 = vadd.f32 %v1329, %v1347
        %v1381 = vadd.f32 %v1330, %v1348
        %v1382 = vadd.f32 %v1331, %v1346
        %v1383 = vadd.f32 %v1332, %v1347
        %v1384 = vadd.f32 %v1333, %v1348
        %v1385 = vadd.f32 %v1334, %v1346
        %v1386 = vadd.f32 %v1335, %v1347
        %v1387 = vadd.f32 %v1336, %v1348
        %v1388 = vadd.f32 %v1337, %v1346
        %v1389 = vadd.f32 %v1338, %v1347
        %v1390 = vadd.f32 %v1339, %v1348
        %v1391 = vadd.f32 %v1340, %v1346
        %v1392 = vadd.f32 %v1341, %v1347
        %v1393 = vadd.f32 %v1342, %v1348
        %v1394 = vadd.f32 %v1343, %v1346
        %v1395 = vadd.f32 %v1344, %v1347
        %v1396 = vadd.f32 %v1345, %v1348
        %1397 = vst.msk [vmem:[#allocation2] sm:$0xff] %vm487, 0.0
        %1398 = vst.msk [vmem:[#allocation2 + $0x8] sm:$0xff] %vm487, 0.0
        %vm1399 = vcmask 123904
        %1400 = vst.msk [vmem:[#allocation2 + $0x10] sm:$0x3] %vm1399, 0.0
        %1401 = vst.msk [vmem:[#allocation2 + $0x18] sm:$0xff] %vm487, 0.0
        %1402 = vst.msk [vmem:[#allocation2 + $0x20] sm:$0xff] %vm487, 0.0
        %1403 = vst.msk [vmem:[#allocation2 + $0x28] sm:$0x3] %vm1399, 0.0
        %1404 = vst.msk [vmem:[#allocation2 + $0x30] sm:$0xff] %vm487, 0.0
        %1405 = vst.msk [vmem:[#allocation2 + $0x38] sm:$0xff] %vm487, 0.0
        %1406 = vst.msk [vmem:[#allocation2 + $0x40] sm:$0x3] %vm1399, 0.0
        %1407 = vst.msk [vmem:[#allocation2 + $0x48] sm:$0xff] %vm487, 0.0
        %1408 = vst.msk [vmem:[#allocation2 + $0x50] sm:$0xff] %vm487, 0.0
        %1409 = vst.msk [vmem:[#allocation2 + $0x58] sm:$0x3] %vm1399, 0.0
        %1410 = vst.msk [vmem:[#allocation2 + $0x60] sm:$0xff] %vm487, 0.0
        %1411 = vst.msk [vmem:[#allocation2 + $0x68] sm:$0xff] %vm487, 0.0
        %1412 = vst.msk [vmem:[#allocation2 + $0x70] sm:$0x3] %vm1399, 0.0
        %1413 = vst.msk [vmem:[#allocation2 + $0x78] sm:$0xff] %vm487, 0.0
        %1414 = vst.msk [vmem:[#allocation2 + $0x80] sm:$0xff] %vm487, 0.0
        %1415 = vst.msk [vmem:[#allocation2 + $0x88] sm:$0x3] %vm1399, 0.0
        %1416 = vst.msk [vmem:[#allocation2 + $0x90] sm:$0xff] %vm487, 0.0
        %1417 = vst.msk [vmem:[#allocation2 + $0x98] sm:$0xff] %vm487, 0.0
        %1418 = vst.msk [vmem:[#allocation2 + $0xa0] sm:$0x3] %vm1399, 0.0
        %1419 = vst.msk [vmem:[#allocation2 + $0xa8] sm:$0xff] %vm487, 0.0
        %1420 = vst.msk [vmem:[#allocation2 + $0xb0] sm:$0xff] %vm487, 0.0
        %1421 = vst.msk [vmem:[#allocation2 + $0xb8] sm:$0x3] %vm1399, 0.0
        %1422 = vst.msk [vmem:[#allocation2 + $0xc0] sm:$0xff] %vm487, 0.0
        %1423 = vst.msk [vmem:[#allocation2 + $0xc8] sm:$0xff] %vm487, 0.0
        %1424 = vst.msk [vmem:[#allocation2 + $0xd0] sm:$0x3] %vm1399, 0.0
        %1425 = vst.msk [vmem:[#allocation2 + $0xd8] sm:$0xff] %vm487, 0.0
        %1426 = vst.msk [vmem:[#allocation2 + $0xe0] sm:$0xff] %vm487, 0.0
        %1427 = vst.msk [vmem:[#allocation2 + $0xe8] sm:$0x3] %vm1399, 0.0
        %1428 = vst.msk [vmem:[#allocation2 + $0xf0] sm:$0xff] %vm487, 0.0
        %1429 = vst.msk [vmem:[#allocation2 + $0xf8] sm:$0xff] %vm487, 0.0
        %1430 = vst.msk [vmem:[#allocation2 + $0x100] sm:$0x3] %vm1399, 0.0
        %1431 = vst.msk [vmem:[#allocation2 + $0x108] sm:$0xff] %vm487, 0.0
        %1432 = vst.msk [vmem:[#allocation2 + $0x110] sm:$0xff] %vm487, 0.0
        %1433 = vst.msk [vmem:[#allocation2 + $0x118] sm:$0x3] %vm1399, 0.0
        %1434 = vst.msk [vmem:[#allocation2 + $0x120] sm:$0xff] %vm487, 0.0
        %1435 = vst.msk [vmem:[#allocation2 + $0x128] sm:$0xff] %vm487, 0.0
        %1436 = vst.msk [vmem:[#allocation2 + $0x130] sm:$0x3] %vm1399, 0.0
        %1437 = vst.msk [vmem:[#allocation2 + $0x138] sm:$0xff] %vm487, 0.0
        %1438 = vst.msk [vmem:[#allocation2 + $0x140] sm:$0xff] %vm487, 0.0
        %1439 = vst.msk [vmem:[#allocation2 + $0x148] sm:$0x3] %vm1399, 0.0
        %1440 = vst.msk [vmem:[#allocation2 + $0x150] sm:$0xff] %vm487, 0.0
        %1441 = vst.msk [vmem:[#allocation2 + $0x158] sm:$0xff] %vm487, 0.0
        %1442 = vst.msk [vmem:[#allocation2 + $0x160] sm:$0x3] %vm1399, 0.0
        %1443 = vst.msk [vmem:[#allocation2 + $0x168] sm:$0xff] %vm487, 0.0
        %1444 = vst.msk [vmem:[#allocation2 + $0x170] sm:$0xff] %vm487, 0.0
        %1445 = vst.msk [vmem:[#allocation2 + $0x178] sm:$0x3] %vm1399, 0.0
        %1446 = vst.msk [vmem:[#allocation2 + $0x180] sm:$0xff] %vm487, 0.0
        %1447 = vst.msk [vmem:[#allocation2 + $0x188] sm:$0xff] %vm487, 0.0
        %1448 = vst.msk [vmem:[#allocation2 + $0x190] sm:$0x3] %vm1399, 0.0
        %1449 = vst.msk [vmem:[#allocation2 + $0x198] sm:$0xff] %vm487, 0.0
        %1450 = vst.msk [vmem:[#allocation2 + $0x1a0] sm:$0xff] %vm487, 0.0
        %1451 = vst.msk [vmem:[#allocation2 + $0x1a8] sm:$0x3] %vm1399, 0.0
        %s1452 = scalar_lea.vmem [#allocation2], 24
        %1453 = vst.msk [vmem:[%s1452] sm:$0xff] %vm487, %v1349
        %1454 = vst.msk [vmem:[%s1452 + $0x8] sm:$0xff] %vm487, %v1350
        %1455 = vst.msk [vmem:[%s1452 + $0x10] sm:$0x3] %vm1399, %v1351
        %1456 = vst.msk [vmem:[%s1452 + $0x18] sm:$0xff] %vm487, %v1352
        %1457 = vst.msk [vmem:[%s1452 + $0x20] sm:$0xff] %vm487, %v1353
        %1458 = vst.msk [vmem:[%s1452 + $0x28] sm:$0x3] %vm1399, %v1354
        %1459 = vst.msk [vmem:[%s1452 + $0x30] sm:$0xff] %vm487, %v1355
        %1460 = vst.msk [vmem:[%s1452 + $0x38] sm:$0xff] %vm487, %v1356
        %1461 = vst.msk [vmem:[%s1452 + $0x40] sm:$0x3] %vm1399, %v1357
        %1462 = vst.msk [vmem:[%s1452 + $0x48] sm:$0xff] %vm487, %v1358
        %1463 = vst.msk [vmem:[%s1452 + $0x50] sm:$0xff] %vm487, %v1359
        %1464 = vst.msk [vmem:[%s1452 + $0x58] sm:$0x3] %vm1399, %v1360
        %1465 = vst.msk [vmem:[%s1452 + $0x60] sm:$0xff] %vm487, %v1361
        %1466 = vst.msk [vmem:[%s1452 + $0x68] sm:$0xff] %vm487, %v1362
        %1467 = vst.msk [vmem:[%s1452 + $0x70] sm:$0x3] %vm1399, %v1363
        %1468 = vst.msk [vmem:[%s1452 + $0x78] sm:$0xff] %vm487, %v1364
        %1469 = vst.msk [vmem:[%s1452 + $0x80] sm:$0xff] %vm487, %v1365
        %1470 = vst.msk [vmem:[%s1452 + $0x88] sm:$0x3] %vm1399, %v1366
        %1471 = vst.msk [vmem:[%s1452 + $0x90] sm:$0xff] %vm487, %v1367
        %1472 = vst.msk [vmem:[%s1452 + $0x98] sm:$0xff] %vm487, %v1368
        %1473 = vst.msk [vmem:[%s1452 + $0xa0] sm:$0x3] %vm1399, %v1369
        %1474 = vst.msk [vmem:[%s1452 + $0xa8] sm:$0xff] %vm487, %v1370
        %1475 = vst.msk [vmem:[%s1452 + $0xb0] sm:$0xff] %vm487, %v1371
        %1476 = vst.msk [vmem:[%s1452 + $0xb8] sm:$0x3] %vm1399, %v1372
        %1477 = vst.msk [vmem:[%s1452 + $0xc0] sm:$0xff] %vm487, %v1373
        %1478 = vst.msk [vmem:[%s1452 + $0xc8] sm:$0xff] %vm487, %v1374
        %1479 = vst.msk [vmem:[%s1452 + $0xd0] sm:$0x3] %vm1399, %v1375
        %1480 = vst.msk [vmem:[%s1452 + $0xd8] sm:$0xff] %vm487, %v1376
        %1481 = vst.msk [vmem:[%s1452 + $0xe0] sm:$0xff] %vm487, %v1377
        %1482 = vst.msk [vmem:[%s1452 + $0xe8] sm:$0x3] %vm1399, %v1378
        %1483 = vst.msk [vmem:[%s1452 + $0xf0] sm:$0xff] %vm487, %v1379
        %1484 = vst.msk [vmem:[%s1452 + $0xf8] sm:$0xff] %vm487, %v1380
        %1485 = vst.msk [vmem:[%s1452 + $0x100] sm:$0x3] %vm1399, %v1381
        %1486 = vst.msk [vmem:[%s1452 + $0x108] sm:$0xff] %vm487, %v1382
        %1487 = vst.msk [vmem:[%s1452 + $0x110] sm:$0xff] %vm487, %v1383
        %1488 = vst.msk [vmem:[%s1452 + $0x118] sm:$0x3] %vm1399, %v1384
        %1489 = vst.msk [vmem:[%s1452 + $0x120] sm:$0xff] %vm487, %v1385
        %1490 = vst.msk [vmem:[%s1452 + $0x128] sm:$0xff] %vm487, %v1386
        %1491 = vst.msk [vmem:[%s1452 + $0x130] sm:$0x3] %vm1399, %v1387
        %1492 = vst.msk [vmem:[%s1452 + $0x138] sm:$0xff] %vm487, %v1388
        %1493 = vst.msk [vmem:[%s1452 + $0x140] sm:$0xff] %vm487, %v1389
        %1494 = vst.msk [vmem:[%s1452 + $0x148] sm:$0x3] %vm1399, %v1390
        %1495 = vst.msk [vmem:[%s1452 + $0x150] sm:$0xff] %vm487, %v1391
        %1496 = vst.msk [vmem:[%s1452 + $0x158] sm:$0xff] %vm487, %v1392
        %1497 = vst.msk [vmem:[%s1452 + $0x160] sm:$0x3] %vm1399, %v1393
        %1498 = vst.msk [vmem:[%s1452 + $0x168] sm:$0xff] %vm487, %v1394
        %1499 = vst.msk [vmem:[%s1452 + $0x170] sm:$0xff] %vm487, %v1395
        %1500 = vst.msk [vmem:[%s1452 + $0x178] sm:$0x3] %vm1399, %v1396
        %s1501 = smul.u32 %s23, 16
        %v1502 = vld [vmem:[#allocation5] sm:$0x3]
        %v1504 = vperm.slane %v1502, 0
        %v1505 = vperm.slane %v1502, 1
        %1508 = vst [vmem:[%s274] sm:$0xff] %v1504
        %1509 = vst [vmem:[%s274 + $0x8] sm:$0xff] %v1505
        %1510 = vst [vmem:[%s274 + $0x10] sm:$0xff] %v1504
        %1511 = vst [vmem:[%s274 + $0x18] sm:$0xff] %v1505
        %1512 = vst [vmem:[%s274 + $0x20] sm:$0xff] %v1504
        %1513 = vst [vmem:[%s274 + $0x28] sm:$0xff] %v1505
        %1514 = vst [vmem:[%s274 + $0x30] sm:$0xff] %v1504
        %1515 = vst [vmem:[%s274 + $0x38] sm:$0xff] %v1505
        %1516 = vst [vmem:[%s274 + $0x40] sm:$0xff] %v1504
        %1517 = vst [vmem:[%s274 + $0x48] sm:$0xff] %v1505
        %1518 = vst [vmem:[%s274 + $0x50] sm:$0xff] %v1504
        %1519 = vst [vmem:[%s274 + $0x58] sm:$0xff] %v1505
        %1520 = vst [vmem:[%s274 + $0x60] sm:$0xff] %v1504
        %1521 = vst [vmem:[%s274 + $0x68] sm:$0xff] %v1505
        %1522 = vst [vmem:[%s274 + $0x70] sm:$0xff] %v1504
        %1523 = vst [vmem:[%s274 + $0x78] sm:$0xff] %v1505
        %1524 = vst [vmem:[%s274 + $0x80] sm:$0xff] %v1504
        %1525 = vst [vmem:[%s274 + $0x88] sm:$0xff] %v1505
        %1526 = vst [vmem:[%s274 + $0x90] sm:$0xff] %v1504
        %1527 = vst [vmem:[%s274 + $0x98] sm:$0xff] %v1505
        %1528 = vst [vmem:[%s274 + $0xa0] sm:$0xff] %v1504
        %1529 = vst [vmem:[%s274 + $0xa8] sm:$0xff] %v1505
        %1530 = vst [vmem:[%s274 + $0xb0] sm:$0xff] %v1504
        %1531 = vst [vmem:[%s274 + $0xb8] sm:$0xff] %v1505
        %1532 = vst [vmem:[%s274 + $0xc0] sm:$0xff] %v1504
        %1533 = vst [vmem:[%s274 + $0xc8] sm:$0xff] %v1505
        %1534 = vst [vmem:[%s274 + $0xd0] sm:$0xff] %v1504
        %1535 = vst [vmem:[%s274 + $0xd8] sm:$0xff] %v1505
        %1536 = vst [vmem:[%s274 + $0xe0] sm:$0xff] %v1504
        %1537 = vst [vmem:[%s274 + $0xe8] sm:$0xff] %v1505
        %1538 = vst [vmem:[%s274 + $0xf0] sm:$0xff] %v1504
        %1539 = vst [vmem:[%s274 + $0xf8] sm:$0xff] %v1505
        %1540 = vst [vmem:[%s274 + $0x100] sm:$0xff] %v1504
        %1541 = vst [vmem:[%s274 + $0x108] sm:$0xff] %v1505
        %1542 = vst [vmem:[%s274 + $0x110] sm:$0xff] %v1504
        %1543 = vst [vmem:[%s274 + $0x118] sm:$0xff] %v1505
        %1544 = vst [vmem:[%s274 + $0x120] sm:$0xff] %v1504
        %1545 = vst [vmem:[%s274 + $0x128] sm:$0xff] %v1505
        %1546 = vst [vmem:[%s274 + $0x130] sm:$0xff] %v1504
        %1547 = vst [vmem:[%s274 + $0x138] sm:$0xff] %v1505
        %1548 = vst [vmem:[%s274 + $0x140] sm:$0xff] %v1504
        %1549 = vst [vmem:[%s274 + $0x148] sm:$0xff] %v1505
        %1550 = vst [vmem:[%s274 + $0x150] sm:$0xff] %v1504
        %1551 = vst [vmem:[%s274 + $0x158] sm:$0xff] %v1505
        %1552 = vst [vmem:[%s274 + $0x160] sm:$0xff] %v1504
        %1553 = vst [vmem:[%s274 + $0x168] sm:$0xff] %v1505
        %1554 = vst [vmem:[%s274 + $0x170] sm:$0xff] %v1504
        %1555 = vst [vmem:[%s274 + $0x178] sm:$0xff] %v1505
        %1556 = vst [vmem:[%s274 + $0x180] sm:$0xff] %v1504
        %1557 = vst [vmem:[%s274 + $0x188] sm:$0xff] %v1505
        %1558 = vst [vmem:[%s274 + $0x190] sm:$0xff] %v1504
        %1559 = vst [vmem:[%s274 + $0x198] sm:$0xff] %v1505
        %1560 = vst [vmem:[%s274 + $0x1a0] sm:$0xff] %v1504
        %1561 = vst [vmem:[%s274 + $0x1a8] sm:$0xff] %v1505
        %1562 = vst [vmem:[%s274 + $0x1b0] sm:$0xff] %v1504
        %1563 = vst [vmem:[%s274 + $0x1b8] sm:$0xff] %v1505
        %1564 = vst [vmem:[%s274 + $0x1c0] sm:$0xff] %v1504
        %1565 = vst [vmem:[%s274 + $0x1c8] sm:$0xff] %v1505
        %1566 = vst [vmem:[%s274 + $0x1d0] sm:$0xff] %v1504
        %1567 = vst [vmem:[%s274 + $0x1d8] sm:$0xff] %v1505
        %1568 = vst [vmem:[%s274 + $0x1e0] sm:$0xff] %v1504
        %1569 = vst [vmem:[%s274 + $0x1e8] sm:$0xff] %v1505
        %1570 = vst [vmem:[%s274 + $0x1f0] sm:$0xff] %v1504
        %1571 = vst [vmem:[%s274 + $0x1f8] sm:$0xff] %v1505
        %s1572 = smul.u32 %s1501, 24
        %s1573 = scalar_lea.vmem [#allocation2], %s1572
        %v1574 = vld [vmem:[%s1573] sm:$0xff]
        %v1575 = vld [vmem:[%s1573 + $0x8] sm:$0xff]
        %v1576 = vld [vmem:[%s1573 + $0x18] sm:$0xff]
        %v1577 = vld [vmem:[%s1573 + $0x20] sm:$0xff]
        %v1578 = vld [vmem:[%s1573 + $0x30] sm:$0xff]
        %v1579 = vld [vmem:[%s1573 + $0x38] sm:$0xff]
        %v1580 = vld [vmem:[%s1573 + $0x48] sm:$0xff]
        %v1581 = vld [vmem:[%s1573 + $0x50] sm:$0xff]
        %v1582 = vld [vmem:[%s1573 + $0x60] sm:$0xff]
        %v1583 = vld [vmem:[%s1573 + $0x68] sm:$0xff]
        %v1584 = vld [vmem:[%s1573 + $0x78] sm:$0xff]
        %v1585 = vld [vmem:[%s1573 + $0x80] sm:$0xff]
        %v1586 = vld [vmem:[%s1573 + $0x90] sm:$0xff]
        %v1587 = vld [vmem:[%s1573 + $0x98] sm:$0xff]
        %v1588 = vld [vmem:[%s1573 + $0xa8] sm:$0xff]
        %v1589 = vld [vmem:[%s1573 + $0xb0] sm:$0xff]
        %v1590 = vld [vmem:[%s1573 + $0xc0] sm:$0xff]
        %v1591 = vld [vmem:[%s1573 + $0xc8] sm:$0xff]
        %v1592 = vld [vmem:[%s1573 + $0xd8] sm:$0xff]
        %v1593 = vld [vmem:[%s1573 + $0xe0] sm:$0xff]
        %v1594 = vld [vmem:[%s1573 + $0xf0] sm:$0xff]
        %v1595 = vld [vmem:[%s1573 + $0xf8] sm:$0xff]
        %v1596 = vld [vmem:[%s1573 + $0x108] sm:$0xff]
        %v1597 = vld [vmem:[%s1573 + $0x110] sm:$0xff]
        %v1598 = vld [vmem:[%s1573 + $0x120] sm:$0xff]
        %v1599 = vld [vmem:[%s1573 + $0x128] sm:$0xff]
        %v1600 = vld [vmem:[%s1573 + $0x138] sm:$0xff]
        %v1601 = vld [vmem:[%s1573 + $0x140] sm:$0xff]
        %v1602 = vld [vmem:[%s1573 + $0x150] sm:$0xff]
        %v1603 = vld [vmem:[%s1573 + $0x158] sm:$0xff]
        %v1604 = vld [vmem:[%s1573 + $0x168] sm:$0xff]
        %v1605 = vld [vmem:[%s1573 + $0x170] sm:$0xff]
        %v1606 = vpack.c.bf16 %v1575, %v1574
        %v1607 = vpack.c.bf16 %v1577, %v1576
        %v1608 = vpack.c.bf16 %v1579, %v1578
        %v1609 = vpack.c.bf16 %v1581, %v1580
        %v1610 = vpack.c.bf16 %v1583, %v1582
        %v1611 = vpack.c.bf16 %v1585, %v1584
        %v1612 = vpack.c.bf16 %v1587, %v1586
        %v1613 = vpack.c.bf16 %v1589, %v1588
        %v1614 = vpack.c.bf16 %v1591, %v1590
        %v1615 = vpack.c.bf16 %v1593, %v1592
        %v1616 = vpack.c.bf16 %v1595, %v1594
        %v1617 = vpack.c.bf16 %v1597, %v1596
        %v1618 = vpack.c.bf16 %v1599, %v1598
        %v1619 = vpack.c.bf16 %v1601, %v1600
        %v1620 = vpack.c.bf16 %v1603, %v1602
        %v1621 = vpack.c.bf16 %v1605, %v1604
        %v1622 = vld [vmem:[%s274] sm:$0xff]
        %v1623 = vld [vmem:[%s274 + $0x8] sm:$0xff]
        %v1624 = vld [vmem:[%s274 + $0x10] sm:$0xff]
        %v1625 = vld [vmem:[%s274 + $0x18] sm:$0xff]
        %v1626 = vld [vmem:[%s274 + $0x20] sm:$0xff]
        %v1627 = vld [vmem:[%s274 + $0x28] sm:$0xff]
        %v1628 = vld [vmem:[%s274 + $0x30] sm:$0xff]
        %v1629 = vld [vmem:[%s274 + $0x38] sm:$0xff]
        %v1630 = vld [vmem:[%s274 + $0x40] sm:$0xff]
        %v1631 = vld [vmem:[%s274 + $0x48] sm:$0xff]
        %v1632 = vld [vmem:[%s274 + $0x50] sm:$0xff]
        %v1633 = vld [vmem:[%s274 + $0x58] sm:$0xff]
        %v1634 = vld [vmem:[%s274 + $0x60] sm:$0xff]
        %v1635 = vld [vmem:[%s274 + $0x68] sm:$0xff]
        %v1636 = vld [vmem:[%s274 + $0x70] sm:$0xff]
        %v1637 = vld [vmem:[%s274 + $0x78] sm:$0xff]
        %v1638 = vld [vmem:[%s274 + $0x80] sm:$0xff]
        %v1639 = vld [vmem:[%s274 + $0x88] sm:$0xff]
        %v1640 = vld [vmem:[%s274 + $0x90] sm:$0xff]
        %v1641 = vld [vmem:[%s274 + $0x98] sm:$0xff]
        %v1642 = vld [vmem:[%s274 + $0xa0] sm:$0xff]
        %v1643 = vld [vmem:[%s274 + $0xa8] sm:$0xff]
        %v1644 = vld [vmem:[%s274 + $0xb0] sm:$0xff]
        %v1645 = vld [vmem:[%s274 + $0xb8] sm:$0xff]
        %v1646 = vld [vmem:[%s274 + $0xc0] sm:$0xff]
        %v1647 = vld [vmem:[%s274 + $0xc8] sm:$0xff]
        %v1648 = vld [vmem:[%s274 + $0xd0] sm:$0xff]
        %v1649 = vld [vmem:[%s274 + $0xd8] sm:$0xff]
        %v1650 = vld [vmem:[%s274 + $0xe0] sm:$0xff]
        %v1651 = vld [vmem:[%s274 + $0xe8] sm:$0xff]
        %v1652 = vld [vmem:[%s274 + $0xf0] sm:$0xff]
        %v1653 = vld [vmem:[%s274 + $0xf8] sm:$0xff]
        %v1654 = vld [vmem:[%s274 + $0x100] sm:$0xff]
        %v1655 = vld [vmem:[%s274 + $0x108] sm:$0xff]
        %v1656 = vld [vmem:[%s274 + $0x110] sm:$0xff]
        %v1657 = vld [vmem:[%s274 + $0x118] sm:$0xff]
        %v1658 = vld [vmem:[%s274 + $0x120] sm:$0xff]
        %v1659 = vld [vmem:[%s274 + $0x128] sm:$0xff]
        %v1660 = vld [vmem:[%s274 + $0x130] sm:$0xff]
        %v1661 = vld [vmem:[%s274 + $0x138] sm:$0xff]
        %v1662 = vld [vmem:[%s274 + $0x140] sm:$0xff]
        %v1663 = vld [vmem:[%s274 + $0x148] sm:$0xff]
        %v1664 = vld [vmem:[%s274 + $0x150] sm:$0xff]
        %v1665 = vld [vmem:[%s274 + $0x158] sm:$0xff]
        %v1666 = vld [vmem:[%s274 + $0x160] sm:$0xff]
        %v1667 = vld [vmem:[%s274 + $0x168] sm:$0xff]
        %v1668 = vld [vmem:[%s274 + $0x170] sm:$0xff]
        %v1669 = vld [vmem:[%s274 + $0x178] sm:$0xff]
        %v1670 = vld [vmem:[%s274 + $0x180] sm:$0xff]
        %v1671 = vld [vmem:[%s274 + $0x188] sm:$0xff]
        %v1672 = vld [vmem:[%s274 + $0x190] sm:$0xff]
        %v1673 = vld [vmem:[%s274 + $0x198] sm:$0xff]
        %v1674 = vld [vmem:[%s274 + $0x1a0] sm:$0xff]
        %v1675 = vld [vmem:[%s274 + $0x1a8] sm:$0xff]
        %v1676 = vld [vmem:[%s274 + $0x1b0] sm:$0xff]
        %v1677 = vld [vmem:[%s274 + $0x1b8] sm:$0xff]
        %v1678 = vld [vmem:[%s274 + $0x1c0] sm:$0xff]
        %v1679 = vld [vmem:[%s274 + $0x1c8] sm:$0xff]
        %v1680 = vld [vmem:[%s274 + $0x1d0] sm:$0xff]
        %v1681 = vld [vmem:[%s274 + $0x1d8] sm:$0xff]
        %v1682 = vld [vmem:[%s274 + $0x1e0] sm:$0xff]
        %v1683 = vld [vmem:[%s274 + $0x1e8] sm:$0xff]
        %v1684 = vld [vmem:[%s274 + $0x1f0] sm:$0xff]
        %v1685 = vld [vmem:[%s274 + $0x1f8] sm:$0xff]
        %v1686 = vld [vmem:[#allocation3] sm:$0xff]
        %v1687 = vld [vmem:[#allocation3 + $0x8] sm:$0xff]
        %v1690 = vunpack.c.l.b16 %v1686
        %v1691 = vunpack.c.h.b16 %v1686
        %v1692 = vunpack.c.l.b16 %v1687
        %v1693 = vunpack.c.h.b16 %v1687
        %v1694 = vpack.c.b16 %v1692, %v1690
        %v1695 = vpack.c.b16 %v1693, %v1691
        %v1699 = vsel %vm487, %v1606, 0
        %v1702 = vsel %vm487, %v1607, 0
        %v1705 = vsel %vm487, %v1608, 0
        %v1708 = vsel %vm487, %v1609, 0
        %v1711 = vsel %vm487, %v1610, 0
        %v1714 = vsel %vm487, %v1611, 0
        %v1717 = vsel %vm487, %v1612, 0
        %v1720 = vsel %vm487, %v1613, 0
        %v1723 = vsel %vm487, %v1614, 0
        %v1726 = vsel %vm487, %v1615, 0
        %v1729 = vsel %vm487, %v1616, 0
        %v1732 = vsel %vm487, %v1617, 0
        %v1735 = vsel %vm487, %v1618, 0
        %v1738 = vsel %vm487, %v1619, 0
        %v1741 = vsel %vm487, %v1620, 0
        %v1744 = vsel %vm487, %v1621, 0
        %1746 = vmatpush.bf16.msra.mxu0 0
        %1747 = vmatpush.bf16.msra.mxu0 0
        %1748 = vmatpush.bf16.msra.mxu0 0
        %1749 = vmatpush.bf16.msra.mxu0 0
        %1750 = vmatpush.bf16.msra.mxu0 0
        %1751 = vmatpush.bf16.msra.mxu0 0
        %1752 = vmatpush.bf16.msra.mxu0 0
        %1753 = vmatpush.bf16.msra.mxu0 %v1694
        %1754 = vmatmul.bf16.gmra.mxu0 %v1699
        %v1755 = vpop.f32.mrf.mxu0
        %v1756 = vadd.f32 0.0, %v1755
        %v1757 = vpop.f32.mrf.mxu0
        %v1758 = vadd.f32 0.0, %v1757
        %1759 = vmatmul.bf16.gmra.mxu0 %v1702
        %v1760 = vpop.f32.mrf.mxu0
        %v1761 = vadd.f32 0.0, %v1760
        %v1762 = vpop.f32.mrf.mxu0
        %v1763 = vadd.f32 0.0, %v1762
        %1764 = vmatmul.bf16.gmra.mxu0 %v1705
        %v1765 = vpop.f32.mrf.mxu0
        %v1766 = vadd.f32 0.0, %v1765
        %v1767 = vpop.f32.mrf.mxu0
        %v1768 = vadd.f32 0.0, %v1767
        %1769 = vmatmul.bf16.gmra.mxu0 %v1708
        %v1770 = vpop.f32.mrf.mxu0
        %v1771 = vadd.f32 0.0, %v1770
        %v1772 = vpop.f32.mrf.mxu0
        %v1773 = vadd.f32 0.0, %v1772
        %1774 = vmatmul.bf16.gmra.mxu0 %v1711
        %v1775 = vpop.f32.mrf.mxu0
        %v1776 = vadd.f32 0.0, %v1775
        %v1777 = vpop.f32.mrf.mxu0
        %v1778 = vadd.f32 0.0, %v1777
        %1779 = vmatmul.bf16.gmra.mxu0 %v1714
        %v1780 = vpop.f32.mrf.mxu0
        %v1781 = vadd.f32 0.0, %v1780
        %v1782 = vpop.f32.mrf.mxu0
        %v1783 = vadd.f32 0.0, %v1782
        %1784 = vmatmul.bf16.gmra.mxu0 %v1717
        %v1785 = vpop.f32.mrf.mxu0
        %v1786 = vadd.f32 0.0, %v1785
        %v1787 = vpop.f32.mrf.mxu0
        %v1788 = vadd.f32 0.0, %v1787
        %1789 = vmatmul.bf16.gmra.mxu0 %v1720
        %v1790 = vpop.f32.mrf.mxu0
        %v1791 = vadd.f32 0.0, %v1790
        %v1792 = vpop.f32.mrf.mxu0
        %v1793 = vadd.f32 0.0, %v1792
        %1794 = vmatmul.bf16.gmra.mxu0 %v1723
        %v1795 = vpop.f32.mrf.mxu0
        %v1796 = vadd.f32 0.0, %v1795
        %v1797 = vpop.f32.mrf.mxu0
        %v1798 = vadd.f32 0.0, %v1797
        %1799 = vmatmul.bf16.gmra.mxu0 %v1726
        %v1800 = vpop.f32.mrf.mxu0
        %v1801 = vadd.f32 0.0, %v1800
        %v1802 = vpop.f32.mrf.mxu0
        %v1803 = vadd.f32 0.0, %v1802
        %1804 = vmatmul.bf16.gmra.mxu0 %v1729
        %v1805 = vpop.f32.mrf.mxu0
        %v1806 = vadd.f32 0.0, %v1805
        %v1807 = vpop.f32.mrf.mxu0
        %v1808 = vadd.f32 0.0, %v1807
        %1809 = vmatmul.bf16.gmra.mxu0 %v1732
        %v1810 = vpop.f32.mrf.mxu0
        %v1811 = vadd.f32 0.0, %v1810
        %v1812 = vpop.f32.mrf.mxu0
        %v1813 = vadd.f32 0.0, %v1812
        %1814 = vmatmul.bf16.gmra.mxu0 %v1735
        %v1815 = vpop.f32.mrf.mxu0
        %v1816 = vadd.f32 0.0, %v1815
        %v1817 = vpop.f32.mrf.mxu0
        %v1818 = vadd.f32 0.0, %v1817
        %1819 = vmatmul.bf16.gmra.mxu0 %v1738
        %v1820 = vpop.f32.mrf.mxu0
        %v1821 = vadd.f32 0.0, %v1820
        %v1822 = vpop.f32.mrf.mxu0
        %v1823 = vadd.f32 0.0, %v1822
        %1824 = vmatmul.bf16.gmra.mxu0 %v1741
        %v1825 = vpop.f32.mrf.mxu0
        %v1826 = vadd.f32 0.0, %v1825
        %v1827 = vpop.f32.mrf.mxu0
        %v1828 = vadd.f32 0.0, %v1827
        %1829 = vmatmul.bf16.gmra.mxu0 %v1744
        %v1830 = vpop.f32.mrf.mxu0
        %v1831 = vadd.f32 0.0, %v1830
        %v1832 = vpop.f32.mrf.mxu0
        %v1833 = vadd.f32 0.0, %v1832
        %1834 = vdwg.mxu0
        %1835 = vmatpush.bf16.msra.mxu0 0
        %1836 = vmatpush.bf16.msra.mxu0 0
        %1837 = vmatpush.bf16.msra.mxu0 0
        %1838 = vmatpush.bf16.msra.mxu0 0
        %1839 = vmatpush.bf16.msra.mxu0 0
        %1840 = vmatpush.bf16.msra.mxu0 0
        %1841 = vmatpush.bf16.msra.mxu0 0
        %1842 = vmatpush.bf16.msra.mxu0 %v1695
        %1843 = vmatmul.bf16.gmra.mxu0 %v1699
        %v1844 = vpop.f32.mrf.mxu0
        %v1845 = vadd.f32 0.0, %v1844
        %v1846 = vpop.f32.mrf.mxu0
        %v1847 = vadd.f32 0.0, %v1846
        %1848 = vmatmul.bf16.gmra.mxu0 %v1702
        %v1849 = vpop.f32.mrf.mxu0
        %v1850 = vadd.f32 0.0, %v1849
        %v1851 = vpop.f32.mrf.mxu0
        %v1852 = vadd.f32 0.0, %v1851
        %1853 = vmatmul.bf16.gmra.mxu0 %v1705
        %v1854 = vpop.f32.mrf.mxu0
        %v1855 = vadd.f32 0.0, %v1854
        %v1856 = vpop.f32.mrf.mxu0
        %v1857 = vadd.f32 0.0, %v1856
        %1858 = vmatmul.bf16.gmra.mxu0 %v1708
        %v1859 = vpop.f32.mrf.mxu0
        %v1860 = vadd.f32 0.0, %v1859
        %v1861 = vpop.f32.mrf.mxu0
        %v1862 = vadd.f32 0.0, %v1861
        %1863 = vmatmul.bf16.gmra.mxu0 %v1711
        %v1864 = vpop.f32.mrf.mxu0
        %v1865 = vadd.f32 0.0, %v1864
        %v1866 = vpop.f32.mrf.mxu0
        %v1867 = vadd.f32 0.0, %v1866
        %1868 = vmatmul.bf16.gmra.mxu0 %v1714
        %v1869 = vpop.f32.mrf.mxu0
        %v1870 = vadd.f32 0.0, %v1869
        %v1871 = vpop.f32.mrf.mxu0
        %v1872 = vadd.f32 0.0, %v1871
        %1873 = vmatmul.bf16.gmra.mxu0 %v1717
        %v1874 = vpop.f32.mrf.mxu0
        %v1875 = vadd.f32 0.0, %v1874
        %v1876 = vpop.f32.mrf.mxu0
        %v1877 = vadd.f32 0.0, %v1876
        %1878 = vmatmul.bf16.gmra.mxu0 %v1720
        %v1879 = vpop.f32.mrf.mxu0
        %v1880 = vadd.f32 0.0, %v1879
        %v1881 = vpop.f32.mrf.mxu0
        %v1882 = vadd.f32 0.0, %v1881
        %1883 = vmatmul.bf16.gmra.mxu0 %v1723
        %v1884 = vpop.f32.mrf.mxu0
        %v1885 = vadd.f32 0.0, %v1884
        %v1886 = vpop.f32.mrf.mxu0
        %v1887 = vadd.f32 0.0, %v1886
        %1888 = vmatmul.bf16.gmra.mxu0 %v1726
        %v1889 = vpop.f32.mrf.mxu0
        %v1890 = vadd.f32 0.0, %v1889
        %v1891 = vpop.f32.mrf.mxu0
        %v1892 = vadd.f32 0.0, %v1891
        %1893 = vmatmul.bf16.gmra.mxu0 %v1729
        %v1894 = vpop.f32.mrf.mxu0
        %v1895 = vadd.f32 0.0, %v1894
        %v1896 = vpop.f32.mrf.mxu0
        %v1897 = vadd.f32 0.0, %v1896
        %1898 = vmatmul.bf16.gmra.mxu0 %v1732
        %v1899 = vpop.f32.mrf.mxu0
        %v1900 = vadd.f32 0.0, %v1899
        %v1901 = vpop.f32.mrf.mxu0
        %v1902 = vadd.f32 0.0, %v1901
        %1903 = vmatmul.bf16.gmra.mxu0 %v1735
        %v1904 = vpop.f32.mrf.mxu0
        %v1905 = vadd.f32 0.0, %v1904
        %v1906 = vpop.f32.mrf.mxu0
        %v1907 = vadd.f32 0.0, %v1906
        %1908 = vmatmul.bf16.gmra.mxu0 %v1738
        %v1909 = vpop.f32.mrf.mxu0
        %v1910 = vadd.f32 0.0, %v1909
        %v1911 = vpop.f32.mrf.mxu0
        %v1912 = vadd.f32 0.0, %v1911
        %1913 = vmatmul.bf16.gmra.mxu0 %v1741
        %v1914 = vpop.f32.mrf.mxu0
        %v1915 = vadd.f32 0.0, %v1914
        %v1916 = vpop.f32.mrf.mxu0
        %v1917 = vadd.f32 0.0, %v1916
        %1918 = vmatmul.bf16.gmra.mxu0 %v1744
        %v1919 = vpop.f32.mrf.mxu0
        %v1920 = vadd.f32 0.0, %v1919
        %v1921 = vpop.f32.mrf.mxu0
        %v1922 = vadd.f32 0.0, %v1921
        %1923 = vdwg.mxu0
        %v1924 = vadd.f32 %v1622, %v1756
        %v1925 = vadd.f32 %v1623, %v1845
        %v1926 = vadd.f32 %v1624, %v1758
        %v1927 = vadd.f32 %v1625, %v1847
        %v1928 = vadd.f32 %v1626, %v1761
        %v1929 = vadd.f32 %v1627, %v1850
        %v1930 = vadd.f32 %v1628, %v1763
        %v1931 = vadd.f32 %v1629, %v1852
        %v1932 = vadd.f32 %v1630, %v1766
        %v1933 = vadd.f32 %v1631, %v1855
        %v1934 = vadd.f32 %v1632, %v1768
        %v1935 = vadd.f32 %v1633, %v1857
        %v1936 = vadd.f32 %v1634, %v1771
        %v1937 = vadd.f32 %v1635, %v1860
        %v1938 = vadd.f32 %v1636, %v1773
        %v1939 = vadd.f32 %v1637, %v1862
        %v1940 = vadd.f32 %v1638, %v1776
        %v1941 = vadd.f32 %v1639, %v1865
        %v1942 = vadd.f32 %v1640, %v1778
        %v1943 = vadd.f32 %v1641, %v1867
        %v1944 = vadd.f32 %v1642, %v1781
        %v1945 = vadd.f32 %v1643, %v1870
        %v1946 = vadd.f32 %v1644, %v1783
        %v1947 = vadd.f32 %v1645, %v1872
        %v1948 = vadd.f32 %v1646, %v1786
        %v1949 = vadd.f32 %v1647, %v1875
        %v1950 = vadd.f32 %v1648, %v1788
        %v1951 = vadd.f32 %v1649, %v1877
        %v1952 = vadd.f32 %v1650, %v1791
        %v1953 = vadd.f32 %v1651, %v1880
        %v1954 = vadd.f32 %v1652, %v1793
        %v1955 = vadd.f32 %v1653, %v1882
        %v1956 = vadd.f32 %v1654, %v1796
        %v1957 = vadd.f32 %v1655, %v1885
        %v1958 = vadd.f32 %v1656, %v1798
        %v1959 = vadd.f32 %v1657, %v1887
        %v1960 = vadd.f32 %v1658, %v1801
        %v1961 = vadd.f32 %v1659, %v1890
        %v1962 = vadd.f32 %v1660, %v1803
        %v1963 = vadd.f32 %v1661, %v1892
        %v1964 = vadd.f32 %v1662, %v1806
        %v1965 = vadd.f32 %v1663, %v1895
        %v1966 = vadd.f32 %v1664, %v1808
        %v1967 = vadd.f32 %v1665, %v1897
        %v1968 = vadd.f32 %v1666, %v1811
        %v1969 = vadd.f32 %v1667, %v1900
        %v1970 = vadd.f32 %v1668, %v1813
        %v1971 = vadd.f32 %v1669, %v1902
        %v1972 = vadd.f32 %v1670, %v1816
        %v1973 = vadd.f32 %v1671, %v1905
        %v1974 = vadd.f32 %v1672, %v1818
        %v1975 = vadd.f32 %v1673, %v1907
        %v1976 = vadd.f32 %v1674, %v1821
        %v1977 = vadd.f32 %v1675, %v1910
        %v1978 = vadd.f32 %v1676, %v1823
        %v1979 = vadd.f32 %v1677, %v1912
        %v1980 = vadd.f32 %v1678, %v1826
        %v1981 = vadd.f32 %v1679, %v1915
        %v1982 = vadd.f32 %v1680, %v1828
        %v1983 = vadd.f32 %v1681, %v1917
        %v1984 = vadd.f32 %v1682, %v1831
        %v1985 = vadd.f32 %v1683, %v1920
        %v1986 = vadd.f32 %v1684, %v1833
        %v1987 = vadd.f32 %v1685, %v1922
        %1988 = vst [vmem:[%s274] sm:$0xff] %v1924
        %1989 = vst [vmem:[%s274 + $0x8] sm:$0xff] %v1925
        %1990 = vst [vmem:[%s274 + $0x10] sm:$0xff] %v1926
        %1991 = vst [vmem:[%s274 + $0x18] sm:$0xff] %v1927
        %1992 = vst [vmem:[%s274 + $0x20] sm:$0xff] %v1928
        %1993 = vst [vmem:[%s274 + $0x28] sm:$0xff] %v1929
        %1994 = vst [vmem:[%s274 + $0x30] sm:$0xff] %v1930
        %1995 = vst [vmem:[%s274 + $0x38] sm:$0xff] %v1931
        %1996 = vst [vmem:[%s274 + $0x40] sm:$0xff] %v1932
        %1997 = vst [vmem:[%s274 + $0x48] sm:$0xff] %v1933
        %1998 = vst [vmem:[%s274 + $0x50] sm:$0xff] %v1934
        %1999 = vst [vmem:[%s274 + $0x58] sm:$0xff] %v1935
        %2000 = vst [vmem:[%s274 + $0x60] sm:$0xff] %v1936
        %2001 = vst [vmem:[%s274 + $0x68] sm:$0xff] %v1937
        %2002 = vst [vmem:[%s274 + $0x70] sm:$0xff] %v1938
        %2003 = vst [vmem:[%s274 + $0x78] sm:$0xff] %v1939
        %2004 = vst [vmem:[%s274 + $0x80] sm:$0xff] %v1940
        %2005 = vst [vmem:[%s274 + $0x88] sm:$0xff] %v1941
        %2006 = vst [vmem:[%s274 + $0x90] sm:$0xff] %v1942
        %2007 = vst [vmem:[%s274 + $0x98] sm:$0xff] %v1943
        %2008 = vst [vmem:[%s274 + $0xa0] sm:$0xff] %v1944
        %2009 = vst [vmem:[%s274 + $0xa8] sm:$0xff] %v1945
        %2010 = vst [vmem:[%s274 + $0xb0] sm:$0xff] %v1946
        %2011 = vst [vmem:[%s274 + $0xb8] sm:$0xff] %v1947
        %2012 = vst [vmem:[%s274 + $0xc0] sm:$0xff] %v1948
        %2013 = vst [vmem:[%s274 + $0xc8] sm:$0xff] %v1949
        %2014 = vst [vmem:[%s274 + $0xd0] sm:$0xff] %v1950
        %2015 = vst [vmem:[%s274 + $0xd8] sm:$0xff] %v1951
        %2016 = vst [vmem:[%s274 + $0xe0] sm:$0xff] %v1952
        %2017 = vst [vmem:[%s274 + $0xe8] sm:$0xff] %v1953
        %2018 = vst [vmem:[%s274 + $0xf0] sm:$0xff] %v1954
        %2019 = vst [vmem:[%s274 + $0xf8] sm:$0xff] %v1955
        %2020 = vst [vmem:[%s274 + $0x100] sm:$0xff] %v1956
        %2021 = vst [vmem:[%s274 + $0x108] sm:$0xff] %v1957
        %2022 = vst [vmem:[%s274 + $0x110] sm:$0xff] %v1958
        %2023 = vst [vmem:[%s274 + $0x118] sm:$0xff] %v1959
        %2024 = vst [vmem:[%s274 + $0x120] sm:$0xff] %v1960
        %2025 = vst [vmem:[%s274 + $0x128] sm:$0xff] %v1961
        %2026 = vst [vmem:[%s274 + $0x130] sm:$0xff] %v1962
        %2027 = vst [vmem:[%s274 + $0x138] sm:$0xff] %v1963
        %2028 = vst [vmem:[%s274 + $0x140] sm:$0xff] %v1964
        %2029 = vst [vmem:[%s274 + $0x148] sm:$0xff] %v1965
        %2030 = vst [vmem:[%s274 + $0x150] sm:$0xff] %v1966
        %2031 = vst [vmem:[%s274 + $0x158] sm:$0xff] %v1967
        %2032 = vst [vmem:[%s274 + $0x160] sm:$0xff] %v1968
        %2033 = vst [vmem:[%s274 + $0x168] sm:$0xff] %v1969
        %2034 = vst [vmem:[%s274 + $0x170] sm:$0xff] %v1970
        %2035 = vst [vmem:[%s274 + $0x178] sm:$0xff] %v1971
        %2036 = vst [vmem:[%s274 + $0x180] sm:$0xff] %v1972
        %2037 = vst [vmem:[%s274 + $0x188] sm:$0xff] %v1973
        %2038 = vst [vmem:[%s274 + $0x190] sm:$0xff] %v1974
        %2039 = vst [vmem:[%s274 + $0x198] sm:$0xff] %v1975
        %2040 = vst [vmem:[%s274 + $0x1a0] sm:$0xff] %v1976
        %2041 = vst [vmem:[%s274 + $0x1a8] sm:$0xff] %v1977
        %2042 = vst [vmem:[%s274 + $0x1b0] sm:$0xff] %v1978
        %2043 = vst [vmem:[%s274 + $0x1b8] sm:$0xff] %v1979
        %2044 = vst [vmem:[%s274 + $0x1c0] sm:$0xff] %v1980
        %2045 = vst [vmem:[%s274 + $0x1c8] sm:$0xff] %v1981
        %2046 = vst [vmem:[%s274 + $0x1d0] sm:$0xff] %v1982
        %2047 = vst [vmem:[%s274 + $0x1d8] sm:$0xff] %v1983
        %2048 = vst [vmem:[%s274 + $0x1e0] sm:$0xff] %v1984
        %2049 = vst [vmem:[%s274 + $0x1e8] sm:$0xff] %v1985
        %2050 = vst [vmem:[%s274 + $0x1f0] sm:$0xff] %v1986
        %2051 = vst [vmem:[%s274 + $0x1f8] sm:$0xff] %v1987
        %v2052 = vld [vmem:[%s1573 + $0x1] sm:$0xff]
        %v2053 = vld [vmem:[%s1573 + $0x9] sm:$0xff]
        %v2054 = vld [vmem:[%s1573 + $0x19] sm:$0xff]
        %v2055 = vld [vmem:[%s1573 + $0x21] sm:$0xff]
        %v2056 = vld [vmem:[%s1573 + $0x31] sm:$0xff]
        %v2057 = vld [vmem:[%s1573 + $0x39] sm:$0xff]
        %v2058 = vld [vmem:[%s1573 + $0x49] sm:$0xff]
        %v2059 = vld [vmem:[%s1573 + $0x51] sm:$0xff]
        %v2060 = vld [vmem:[%s1573 + $0x61] sm:$0xff]
        %v2061 = vld [vmem:[%s1573 + $0x69] sm:$0xff]
        %v2062 = vld [vmem:[%s1573 + $0x79] sm:$0xff]
        %v2063 = vld [vmem:[%s1573 + $0x81] sm:$0xff]
        %v2064 = vld [vmem:[%s1573 + $0x91] sm:$0xff]
        %v2065 = vld [vmem:[%s1573 + $0x99] sm:$0xff]
        %v2066 = vld [vmem:[%s1573 + $0xa9] sm:$0xff]
        %v2067 = vld [vmem:[%s1573 + $0xb1] sm:$0xff]
        %v2068 = vld [vmem:[%s1573 + $0xc1] sm:$0xff]
        %v2069 = vld [vmem:[%s1573 + $0xc9] sm:$0xff]
        %v2070 = vld [vmem:[%s1573 + $0xd9] sm:$0xff]
        %v2071 = vld [vmem:[%s1573 + $0xe1] sm:$0xff]
        %v2072 = vld [vmem:[%s1573 + $0xf1] sm:$0xff]
        %v2073 = vld [vmem:[%s1573 + $0xf9] sm:$0xff]
        %v2074 = vld [vmem:[%s1573 + $0x109] sm:$0xff]
        %v2075 = vld [vmem:[%s1573 + $0x111] sm:$0xff]
        %v2076 = vld [vmem:[%s1573 + $0x121] sm:$0xff]
        %v2077 = vld [vmem:[%s1573 + $0x129] sm:$0xff]
        %v2078 = vld [vmem:[%s1573 + $0x139] sm:$0xff]
        %v2079 = vld [vmem:[%s1573 + $0x141] sm:$0xff]
        %v2080 = vld [vmem:[%s1573 + $0x151] sm:$0xff]
        %v2081 = vld [vmem:[%s1573 + $0x159] sm:$0xff]
        %v2082 = vld [vmem:[%s1573 + $0x169] sm:$0xff]
        %v2083 = vld [vmem:[%s1573 + $0x171] sm:$0xff]
        %v2084 = vpack.c.bf16 %v2053, %v2052
        %v2085 = vpack.c.bf16 %v2055, %v2054
        %v2086 = vpack.c.bf16 %v2057, %v2056
        %v2087 = vpack.c.bf16 %v2059, %v2058
        %v2088 = vpack.c.bf16 %v2061, %v2060
        %v2089 = vpack.c.bf16 %v2063, %v2062
        %v2090 = vpack.c.bf16 %v2065, %v2064
        %v2091 = vpack.c.bf16 %v2067, %v2066
        %v2092 = vpack.c.bf16 %v2069, %v2068
        %v2093 = vpack.c.bf16 %v2071, %v2070
        %v2094 = vpack.c.bf16 %v2073, %v2072
        %v2095 = vpack.c.bf16 %v2075, %v2074
        %v2096 = vpack.c.bf16 %v2077, %v2076
        %v2097 = vpack.c.bf16 %v2079, %v2078
        %v2098 = vpack.c.bf16 %v2081, %v2080
        %v2099 = vpack.c.bf16 %v2083, %v2082
        %v2100 = vld [vmem:[%s274] sm:$0xff]
        %v2101 = vld [vmem:[%s274 + $0x8] sm:$0xff]
        %v2102 = vld [vmem:[%s274 + $0x10] sm:$0xff]
        %v2103 = vld [vmem:[%s274 + $0x18] sm:$0xff]
        %v2104 = vld [vmem:[%s274 + $0x20] sm:$0xff]
        %v2105 = vld [vmem:[%s274 + $0x28] sm:$0xff]
        %v2106 = vld [vmem:[%s274 + $0x30] sm:$0xff]
        %v2107 = vld [vmem:[%s274 + $0x38] sm:$0xff]
        %v2108 = vld [vmem:[%s274 + $0x40] sm:$0xff]
        %v2109 = vld [vmem:[%s274 + $0x48] sm:$0xff]
        %v2110 = vld [vmem:[%s274 + $0x50] sm:$0xff]
        %v2111 = vld [vmem:[%s274 + $0x58] sm:$0xff]
        %v2112 = vld [vmem:[%s274 + $0x60] sm:$0xff]
        %v2113 = vld [vmem:[%s274 + $0x68] sm:$0xff]
        %v2114 = vld [vmem:[%s274 + $0x70] sm:$0xff]
        %v2115 = vld [vmem:[%s274 + $0x78] sm:$0xff]
        %v2116 = vld [vmem:[%s274 + $0x80] sm:$0xff]
        %v2117 = vld [vmem:[%s274 + $0x88] sm:$0xff]
        %v2118 = vld [vmem:[%s274 + $0x90] sm:$0xff]
        %v2119 = vld [vmem:[%s274 + $0x98] sm:$0xff]
        %v2120 = vld [vmem:[%s274 + $0xa0] sm:$0xff]
        %v2121 = vld [vmem:[%s274 + $0xa8] sm:$0xff]
        %v2122 = vld [vmem:[%s274 + $0xb0] sm:$0xff]
        %v2123 = vld [vmem:[%s274 + $0xb8] sm:$0xff]
        %v2124 = vld [vmem:[%s274 + $0xc0] sm:$0xff]
        %v2125 = vld [vmem:[%s274 + $0xc8] sm:$0xff]
        %v2126 = vld [vmem:[%s274 + $0xd0] sm:$0xff]
        %v2127 = vld [vmem:[%s274 + $0xd8] sm:$0xff]
        %v2128 = vld [vmem:[%s274 + $0xe0] sm:$0xff]
        %v2129 = vld [vmem:[%s274 + $0xe8] sm:$0xff]
        %v2130 = vld [vmem:[%s274 + $0xf0] sm:$0xff]
        %v2131 = vld [vmem:[%s274 + $0xf8] sm:$0xff]
        %v2132 = vld [vmem:[%s274 + $0x100] sm:$0xff]
        %v2133 = vld [vmem:[%s274 + $0x108] sm:$0xff]
        %v2134 = vld [vmem:[%s274 + $0x110] sm:$0xff]
        %v2135 = vld [vmem:[%s274 + $0x118] sm:$0xff]
        %v2136 = vld [vmem:[%s274 + $0x120] sm:$0xff]
        %v2137 = vld [vmem:[%s274 + $0x128] sm:$0xff]
        %v2138 = vld [vmem:[%s274 + $0x130] sm:$0xff]
        %v2139 = vld [vmem:[%s274 + $0x138] sm:$0xff]
        %v2140 = vld [vmem:[%s274 + $0x140] sm:$0xff]
        %v2141 = vld [vmem:[%s274 + $0x148] sm:$0xff]
        %v2142 = vld [vmem:[%s274 + $0x150] sm:$0xff]
        %v2143 = vld [vmem:[%s274 + $0x158] sm:$0xff]
        %v2144 = vld [vmem:[%s274 + $0x160] sm:$0xff]
        %v2145 = vld [vmem:[%s274 + $0x168] sm:$0xff]
        %v2146 = vld [vmem:[%s274 + $0x170] sm:$0xff]
        %v2147 = vld [vmem:[%s274 + $0x178] sm:$0xff]
        %v2148 = vld [vmem:[%s274 + $0x180] sm:$0xff]
        %v2149 = vld [vmem:[%s274 + $0x188] sm:$0xff]
        %v2150 = vld [vmem:[%s274 + $0x190] sm:$0xff]
        %v2151 = vld [vmem:[%s274 + $0x198] sm:$0xff]
        %v2152 = vld [vmem:[%s274 + $0x1a0] sm:$0xff]
        %v2153 = vld [vmem:[%s274 + $0x1a8] sm:$0xff]
        %v2154 = vld [vmem:[%s274 + $0x1b0] sm:$0xff]
        %v2155 = vld [vmem:[%s274 + $0x1b8] sm:$0xff]
        %v2156 = vld [vmem:[%s274 + $0x1c0] sm:$0xff]
        %v2157 = vld [vmem:[%s274 + $0x1c8] sm:$0xff]
        %v2158 = vld [vmem:[%s274 + $0x1d0] sm:$0xff]
        %v2159 = vld [vmem:[%s274 + $0x1d8] sm:$0xff]
        %v2160 = vld [vmem:[%s274 + $0x1e0] sm:$0xff]
        %v2161 = vld [vmem:[%s274 + $0x1e8] sm:$0xff]
        %v2162 = vld [vmem:[%s274 + $0x1f0] sm:$0xff]
        %v2163 = vld [vmem:[%s274 + $0x1f8] sm:$0xff]
        %s2164 = scalar_lea.vmem [#allocation3], 16
        %v2165 = vld [vmem:[%s2164] sm:$0xff]
        %v2166 = vld [vmem:[%s2164 + $0x8] sm:$0xff]
        %v2169 = vunpack.c.l.b16 %v2165
        %v2170 = vunpack.c.h.b16 %v2165
        %v2171 = vunpack.c.l.b16 %v2166
        %v2172 = vunpack.c.h.b16 %v2166
        %v2173 = vpack.c.b16 %v2171, %v2169
        %v2174 = vpack.c.b16 %v2172, %v2170
        %v2178 = vsel %vm487, %v2084, 0
        %v2181 = vsel %vm487, %v2085, 0
        %v2184 = vsel %vm487, %v2086, 0
        %v2187 = vsel %vm487, %v2087, 0
        %v2190 = vsel %vm487, %v2088, 0
        %v2193 = vsel %vm487, %v2089, 0
        %v2196 = vsel %vm487, %v2090, 0
        %v2199 = vsel %vm487, %v2091, 0
        %v2202 = vsel %vm487, %v2092, 0
        %v2205 = vsel %vm487, %v2093, 0
        %v2208 = vsel %vm487, %v2094, 0
        %v2211 = vsel %vm487, %v2095, 0
        %v2214 = vsel %vm487, %v2096, 0
        %v2217 = vsel %vm487, %v2097, 0
        %v2220 = vsel %vm487, %v2098, 0
        %v2223 = vsel %vm487, %v2099, 0
        %2225 = vmatpush.bf16.msra.mxu0 0
        %2226 = vmatpush.bf16.msra.mxu0 0
        %2227 = vmatpush.bf16.msra.mxu0 0
        %2228 = vmatpush.bf16.msra.mxu0 0
        %2229 = vmatpush.bf16.msra.mxu0 0
        %2230 = vmatpush.bf16.msra.mxu0 0
        %2231 = vmatpush.bf16.msra.mxu0 0
        %2232 = vmatpush.bf16.msra.mxu0 %v2173
        %2233 = vmatmul.bf16.gmra.mxu0 %v2178
        %v2234 = vpop.f32.mrf.mxu0
        %v2235 = vadd.f32 0.0, %v2234
        %v2236 = vpop.f32.mrf.mxu0
        %v2237 = vadd.f32 0.0, %v2236
        %2238 = vmatmul.bf16.gmra.mxu0 %v2181
        %v2239 = vpop.f32.mrf.mxu0
        %v2240 = vadd.f32 0.0, %v2239
        %v2241 = vpop.f32.mrf.mxu0
        %v2242 = vadd.f32 0.0, %v2241
        %2243 = vmatmul.bf16.gmra.mxu0 %v2184
        %v2244 = vpop.f32.mrf.mxu0
        %v2245 = vadd.f32 0.0, %v2244
        %v2246 = vpop.f32.mrf.mxu0
        %v2247 = vadd.f32 0.0, %v2246
        %2248 = vmatmul.bf16.gmra.mxu0 %v2187
        %v2249 = vpop.f32.mrf.mxu0
        %v2250 = vadd.f32 0.0, %v2249
        %v2251 = vpop.f32.mrf.mxu0
        %v2252 = vadd.f32 0.0, %v2251
        %2253 = vmatmul.bf16.gmra.mxu0 %v2190
        %v2254 = vpop.f32.mrf.mxu0
        %v2255 = vadd.f32 0.0, %v2254
        %v2256 = vpop.f32.mrf.mxu0
        %v2257 = vadd.f32 0.0, %v2256
        %2258 = vmatmul.bf16.gmra.mxu0 %v2193
        %v2259 = vpop.f32.mrf.mxu0
        %v2260 = vadd.f32 0.0, %v2259
        %v2261 = vpop.f32.mrf.mxu0
        %v2262 = vadd.f32 0.0, %v2261
        %2263 = vmatmul.bf16.gmra.mxu0 %v2196
        %v2264 = vpop.f32.mrf.mxu0
        %v2265 = vadd.f32 0.0, %v2264
        %v2266 = vpop.f32.mrf.mxu0
        %v2267 = vadd.f32 0.0, %v2266
        %2268 = vmatmul.bf16.gmra.mxu0 %v2199
        %v2269 = vpop.f32.mrf.mxu0
        %v2270 = vadd.f32 0.0, %v2269
        %v2271 = vpop.f32.mrf.mxu0
        %v2272 = vadd.f32 0.0, %v2271
        %2273 = vmatmul.bf16.gmra.mxu0 %v2202
        %v2274 = vpop.f32.mrf.mxu0
        %v2275 = vadd.f32 0.0, %v2274
        %v2276 = vpop.f32.mrf.mxu0
        %v2277 = vadd.f32 0.0, %v2276
        %2278 = vmatmul.bf16.gmra.mxu0 %v2205
        %v2279 = vpop.f32.mrf.mxu0
        %v2280 = vadd.f32 0.0, %v2279
        %v2281 = vpop.f32.mrf.mxu0
        %v2282 = vadd.f32 0.0, %v2281
        %2283 = vmatmul.bf16.gmra.mxu0 %v2208
        %v2284 = vpop.f32.mrf.mxu0
        %v2285 = vadd.f32 0.0, %v2284
        %v2286 = vpop.f32.mrf.mxu0
        %v2287 = vadd.f32 0.0, %v2286
        %2288 = vmatmul.bf16.gmra.mxu0 %v2211
        %v2289 = vpop.f32.mrf.mxu0
        %v2290 = vadd.f32 0.0, %v2289
        %v2291 = vpop.f32.mrf.mxu0
        %v2292 = vadd.f32 0.0, %v2291
        %2293 = vmatmul.bf16.gmra.mxu0 %v2214
        %v2294 = vpop.f32.mrf.mxu0
        %v2295 = vadd.f32 0.0, %v2294
        %v2296 = vpop.f32.mrf.mxu0
        %v2297 = vadd.f32 0.0, %v2296
        %2298 = vmatmul.bf16.gmra.mxu0 %v2217
        %v2299 = vpop.f32.mrf.mxu0
        %v2300 = vadd.f32 0.0, %v2299
        %v2301 = vpop.f32.mrf.mxu0
        %v2302 = vadd.f32 0.0, %v2301
        %2303 = vmatmul.bf16.gmra.mxu0 %v2220
        %v2304 = vpop.f32.mrf.mxu0
        %v2305 = vadd.f32 0.0, %v2304
        %v2306 = vpop.f32.mrf.mxu0
        %v2307 = vadd.f32 0.0, %v2306
        %2308 = vmatmul.bf16.gmra.mxu0 %v2223
        %v2309 = vpop.f32.mrf.mxu0
        %v2310 = vadd.f32 0.0, %v2309
        %v2311 = vpop.f32.mrf.mxu0
        %v2312 = vadd.f32 0.0, %v2311
        %2313 = vdwg.mxu0
        %2314 = vmatpush.bf16.msra.mxu0 0
        %2315 = vmatpush.bf16.msra.mxu0 0
        %2316 = vmatpush.bf16.msra.mxu0 0
        %2317 = vmatpush.bf16.msra.mxu0 0
        %2318 = vmatpush.bf16.msra.mxu0 0
        %2319 = vmatpush.bf16.msra.mxu0 0
        %2320 = vmatpush.bf16.msra.mxu0 0
        %2321 = vmatpush.bf16.msra.mxu0 %v2174
        %2322 = vmatmul.bf16.gmra.mxu0 %v2178
        %v2323 = vpop.f32.mrf.mxu0
        %v2324 = vadd.f32 0.0, %v2323
        %v2325 = vpop.f32.mrf.mxu0
        %v2326 = vadd.f32 0.0, %v2325
        %2327 = vmatmul.bf16.gmra.mxu0 %v2181
        %v2328 = vpop.f32.mrf.mxu0
        %v2329 = vadd.f32 0.0, %v2328
        %v2330 = vpop.f32.mrf.mxu0
        %v2331 = vadd.f32 0.0, %v2330
        %2332 = vmatmul.bf16.gmra.mxu0 %v2184
        %v2333 = vpop.f32.mrf.mxu0
        %v2334 = vadd.f32 0.0, %v2333
        %v2335 = vpop.f32.mrf.mxu0
        %v2336 = vadd.f32 0.0, %v2335
        %2337 = vmatmul.bf16.gmra.mxu0 %v2187
        %v2338 = vpop.f32.mrf.mxu0
        %v2339 = vadd.f32 0.0, %v2338
        %v2340 = vpop.f32.mrf.mxu0
        %v2341 = vadd.f32 0.0, %v2340
        %2342 = vmatmul.bf16.gmra.mxu0 %v2190
        %v2343 = vpop.f32.mrf.mxu0
        %v2344 = vadd.f32 0.0, %v2343
        %v2345 = vpop.f32.mrf.mxu0
        %v2346 = vadd.f32 0.0, %v2345
        %2347 = vmatmul.bf16.gmra.mxu0 %v2193
        %v2348 = vpop.f32.mrf.mxu0
        %v2349 = vadd.f32 0.0, %v2348
        %v2350 = vpop.f32.mrf.mxu0
        %v2351 = vadd.f32 0.0, %v2350
        %2352 = vmatmul.bf16.gmra.mxu0 %v2196
        %v2353 = vpop.f32.mrf.mxu0
        %v2354 = vadd.f32 0.0, %v2353
        %v2355 = vpop.f32.mrf.mxu0
        %v2356 = vadd.f32 0.0, %v2355
        %2357 = vmatmul.bf16.gmra.mxu0 %v2199
        %v2358 = vpop.f32.mrf.mxu0
        %v2359 = vadd.f32 0.0, %v2358
        %v2360 = vpop.f32.mrf.mxu0
        %v2361 = vadd.f32 0.0, %v2360
        %2362 = vmatmul.bf16.gmra.mxu0 %v2202
        %v2363 = vpop.f32.mrf.mxu0
        %v2364 = vadd.f32 0.0, %v2363
        %v2365 = vpop.f32.mrf.mxu0
        %v2366 = vadd.f32 0.0, %v2365
        %2367 = vmatmul.bf16.gmra.mxu0 %v2205
        %v2368 = vpop.f32.mrf.mxu0
        %v2369 = vadd.f32 0.0, %v2368
        %v2370 = vpop.f32.mrf.mxu0
        %v2371 = vadd.f32 0.0, %v2370
        %2372 = vmatmul.bf16.gmra.mxu0 %v2208
        %v2373 = vpop.f32.mrf.mxu0
        %v2374 = vadd.f32 0.0, %v2373
        %v2375 = vpop.f32.mrf.mxu0
        %v2376 = vadd.f32 0.0, %v2375
        %2377 = vmatmul.bf16.gmra.mxu0 %v2211
        %v2378 = vpop.f32.mrf.mxu0
        %v2379 = vadd.f32 0.0, %v2378
        %v2380 = vpop.f32.mrf.mxu0
        %v2381 = vadd.f32 0.0, %v2380
        %2382 = vmatmul.bf16.gmra.mxu0 %v2214
        %v2383 = vpop.f32.mrf.mxu0
        %v2384 = vadd.f32 0.0, %v2383
        %v2385 = vpop.f32.mrf.mxu0
        %v2386 = vadd.f32 0.0, %v2385
        %2387 = vmatmul.bf16.gmra.mxu0 %v2217
        %v2388 = vpop.f32.mrf.mxu0
        %v2389 = vadd.f32 0.0, %v2388
        %v2390 = vpop.f32.mrf.mxu0
        %v2391 = vadd.f32 0.0, %v2390
        %2392 = vmatmul.bf16.gmra.mxu0 %v2220
        %v2393 = vpop.f32.mrf.mxu0
        %v2394 = vadd.f32 0.0, %v2393
        %v2395 = vpop.f32.mrf.mxu0
        %v2396 = vadd.f32 0.0, %v2395
        %2397 = vmatmul.bf16.gmra.mxu0 %v2223
        %v2398 = vpop.f32.mrf.mxu0
        %v2399 = vadd.f32 0.0, %v2398
        %v2400 = vpop.f32.mrf.mxu0
        %v2401 = vadd.f32 0.0, %v2400
        %2402 = vdwg.mxu0
        %v2403 = vadd.f32 %v2100, %v2235
        %v2404 = vadd.f32 %v2101, %v2324
        %v2405 = vadd.f32 %v2102, %v2237
        %v2406 = vadd.f32 %v2103, %v2326
        %v2407 = vadd.f32 %v2104, %v2240
        %v2408 = vadd.f32 %v2105, %v2329
        %v2409 = vadd.f32 %v2106, %v2242
        %v2410 = vadd.f32 %v2107, %v2331
        %v2411 = vadd.f32 %v2108, %v2245
        %v2412 = vadd.f32 %v2109, %v2334
        %v2413 = vadd.f32 %v2110, %v2247
        %v2414 = vadd.f32 %v2111, %v2336
        %v2415 = vadd.f32 %v2112, %v2250
        %v2416 = vadd.f32 %v2113, %v2339
        %v2417 = vadd.f32 %v2114, %v2252
        %v2418 = vadd.f32 %v2115, %v2341
        %v2419 = vadd.f32 %v2116, %v2255
        %v2420 = vadd.f32 %v2117, %v2344
        %v2421 = vadd.f32 %v2118, %v2257
        %v2422 = vadd.f32 %v2119, %v2346
        %v2423 = vadd.f32 %v2120, %v2260
        %v2424 = vadd.f32 %v2121, %v2349
        %v2425 = vadd.f32 %v2122, %v2262
        %v2426 = vadd.f32 %v2123, %v2351
        %v2427 = vadd.f32 %v2124, %v2265
        %v2428 = vadd.f32 %v2125, %v2354
        %v2429 = vadd.f32 %v2126, %v2267
        %v2430 = vadd.f32 %v2127, %v2356
        %v2431 = vadd.f32 %v2128, %v2270
        %v2432 = vadd.f32 %v2129, %v2359
        %v2433 = vadd.f32 %v2130, %v2272
        %v2434 = vadd.f32 %v2131, %v2361
        %v2435 = vadd.f32 %v2132, %v2275
        %v2436 = vadd.f32 %v2133, %v2364
        %v2437 = vadd.f32 %v2134, %v2277
        %v2438 = vadd.f32 %v2135, %v2366
        %v2439 = vadd.f32 %v2136, %v2280
        %v2440 = vadd.f32 %v2137, %v2369
        %v2441 = vadd.f32 %v2138, %v2282
        %v2442 = vadd.f32 %v2139, %v2371
        %v2443 = vadd.f32 %v2140, %v2285
        %v2444 = vadd.f32 %v2141, %v2374
        %v2445 = vadd.f32 %v2142, %v2287
        %v2446 = vadd.f32 %v2143, %v2376
        %v2447 = vadd.f32 %v2144, %v2290
        %v2448 = vadd.f32 %v2145, %v2379
        %v2449 = vadd.f32 %v2146, %v2292
        %v2450 = vadd.f32 %v2147, %v2381
        %v2451 = vadd.f32 %v2148, %v2295
        %v2452 = vadd.f32 %v2149, %v2384
        %v2453 = vadd.f32 %v2150, %v2297
        %v2454 = vadd.f32 %v2151, %v2386
        %v2455 = vadd.f32 %v2152, %v2300
        %v2456 = vadd.f32 %v2153, %v2389
        %v2457 = vadd.f32 %v2154, %v2302
        %v2458 = vadd.f32 %v2155, %v2391
        %v2459 = vadd.f32 %v2156, %v2305
        %v2460 = vadd.f32 %v2157, %v2394
        %v2461 = vadd.f32 %v2158, %v2307
        %v2462 = vadd.f32 %v2159, %v2396
        %v2463 = vadd.f32 %v2160, %v2310
        %v2464 = vadd.f32 %v2161, %v2399
        %v2465 = vadd.f32 %v2162, %v2312
        %v2466 = vadd.f32 %v2163, %v2401
        %2467 = vst [vmem:[%s274] sm:$0xff] %v2403
        %2468 = vst [vmem:[%s274 + $0x8] sm:$0xff] %v2404
        %2469 = vst [vmem:[%s274 + $0x10] sm:$0xff] %v2405
        %2470 = vst [vmem:[%s274 + $0x18] sm:$0xff] %v2406
        %2471 = vst [vmem:[%s274 + $0x20] sm:$0xff] %v2407
        %2472 = vst [vmem:[%s274 + $0x28] sm:$0xff] %v2408
        %2473 = vst [vmem:[%s274 + $0x30] sm:$0xff] %v2409
        %2474 = vst [vmem:[%s274 + $0x38] sm:$0xff] %v2410
        %2475 = vst [vmem:[%s274 + $0x40] sm:$0xff] %v2411
        %2476 = vst [vmem:[%s274 + $0x48] sm:$0xff] %v2412
        %2477 = vst [vmem:[%s274 + $0x50] sm:$0xff] %v2413
        %2478 = vst [vmem:[%s274 + $0x58] sm:$0xff] %v2414
        %2479 = vst [vmem:[%s274 + $0x60] sm:$0xff] %v2415
        %2480 = vst [vmem:[%s274 + $0x68] sm:$0xff] %v2416
        %2481 = vst [vmem:[%s274 + $0x70] sm:$0xff] %v2417
        %2482 = vst [vmem:[%s274 + $0x78] sm:$0xff] %v2418
        %2483 = vst [vmem:[%s274 + $0x80] sm:$0xff] %v2419
        %2484 = vst [vmem:[%s274 + $0x88] sm:$0xff] %v2420
        %2485 = vst [vmem:[%s274 + $0x90] sm:$0xff] %v2421
        %2486 = vst [vmem:[%s274 + $0x98] sm:$0xff] %v2422
        %2487 = vst [vmem:[%s274 + $0xa0] sm:$0xff] %v2423
        %2488 = vst [vmem:[%s274 + $0xa8] sm:$0xff] %v2424
        %2489 = vst [vmem:[%s274 + $0xb0] sm:$0xff] %v2425
        %2490 = vst [vmem:[%s274 + $0xb8] sm:$0xff] %v2426
        %2491 = vst [vmem:[%s274 + $0xc0] sm:$0xff] %v2427
        %2492 = vst [vmem:[%s274 + $0xc8] sm:$0xff] %v2428
        %2493 = vst [vmem:[%s274 + $0xd0] sm:$0xff] %v2429
        %2494 = vst [vmem:[%s274 + $0xd8] sm:$0xff] %v2430
        %2495 = vst [vmem:[%s274 + $0xe0] sm:$0xff] %v2431
        %2496 = vst [vmem:[%s274 + $0xe8] sm:$0xff] %v2432
        %2497 = vst [vmem:[%s274 + $0xf0] sm:$0xff] %v2433
        %2498 = vst [vmem:[%s274 + $0xf8] sm:$0xff] %v2434
        %2499 = vst [vmem:[%s274 + $0x100] sm:$0xff] %v2435
        %2500 = vst [vmem:[%s274 + $0x108] sm:$0xff] %v2436
        %2501 = vst [vmem:[%s274 + $0x110] sm:$0xff] %v2437
        %2502 = vst [vmem:[%s274 + $0x118] sm:$0xff] %v2438
        %2503 = vst [vmem:[%s274 + $0x120] sm:$0xff] %v2439
        %2504 = vst [vmem:[%s274 + $0x128] sm:$0xff] %v2440
        %2505 = vst [vmem:[%s274 + $0x130] sm:$0xff] %v2441
        %2506 = vst [vmem:[%s274 + $0x138] sm:$0xff] %v2442
        %2507 = vst [vmem:[%s274 + $0x140] sm:$0xff] %v2443
        %2508 = vst [vmem:[%s274 + $0x148] sm:$0xff] %v2444
        %2509 = vst [vmem:[%s274 + $0x150] sm:$0xff] %v2445
        %2510 = vst [vmem:[%s274 + $0x158] sm:$0xff] %v2446
        %2511 = vst [vmem:[%s274 + $0x160] sm:$0xff] %v2447
        %2512 = vst [vmem:[%s274 + $0x168] sm:$0xff] %v2448
        %2513 = vst [vmem:[%s274 + $0x170] sm:$0xff] %v2449
        %2514 = vst [vmem:[%s274 + $0x178] sm:$0xff] %v2450
        %2515 = vst [vmem:[%s274 + $0x180] sm:$0xff] %v2451
        %2516 = vst [vmem:[%s274 + $0x188] sm:$0xff] %v2452
        %2517 = vst [vmem:[%s274 + $0x190] sm:$0xff] %v2453
        %2518 = vst [vmem:[%s274 + $0x198] sm:$0xff] %v2454
        %2519 = vst [vmem:[%s274 + $0x1a0] sm:$0xff] %v2455
        %2520 = vst [vmem:[%s274 + $0x1a8] sm:$0xff] %v2456
        %2521 = vst [vmem:[%s274 + $0x1b0] sm:$0xff] %v2457
        %2522 = vst [vmem:[%s274 + $0x1b8] sm:$0xff] %v2458
        %2523 = vst [vmem:[%s274 + $0x1c0] sm:$0xff] %v2459
        %2524 = vst [vmem:[%s274 + $0x1c8] sm:$0xff] %v2460
        %2525 = vst [vmem:[%s274 + $0x1d0] sm:$0xff] %v2461
        %2526 = vst [vmem:[%s274 + $0x1d8] sm:$0xff] %v2462
        %2527 = vst [vmem:[%s274 + $0x1e0] sm:$0xff] %v2463
        %2528 = vst [vmem:[%s274 + $0x1e8] sm:$0xff] %v2464
        %2529 = vst [vmem:[%s274 + $0x1f0] sm:$0xff] %v2465
        %2530 = vst [vmem:[%s274 + $0x1f8] sm:$0xff] %v2466
        %v2531 = vld [vmem:[%s1573 + $0x2] sm:$0xff]
        %v2532 = vld [vmem:[%s1573 + $0xa] sm:$0xff]
        %v2533 = vld [vmem:[%s1573 + $0x1a] sm:$0xff]
        %v2534 = vld [vmem:[%s1573 + $0x22] sm:$0xff]
        %v2535 = vld [vmem:[%s1573 + $0x32] sm:$0xff]
        %v2536 = vld [vmem:[%s1573 + $0x3a] sm:$0xff]
        %v2537 = vld [vmem:[%s1573 + $0x4a] sm:$0xff]
        %v2538 = vld [vmem:[%s1573 + $0x52] sm:$0xff]
        %v2539 = vld [vmem:[%s1573 + $0x62] sm:$0xff]
        %v2540 = vld [vmem:[%s1573 + $0x6a] sm:$0xff]
        %v2541 = vld [vmem:[%s1573 + $0x7a] sm:$0xff]
        %v2542 = vld [vmem:[%s1573 + $0x82] sm:$0xff]
        %v2543 = vld [vmem:[%s1573 + $0x92] sm:$0xff]
        %v2544 = vld [vmem:[%s1573 + $0x9a] sm:$0xff]
        %v2545 = vld [vmem:[%s1573 + $0xaa] sm:$0xff]
        %v2546 = vld [vmem:[%s1573 + $0xb2] sm:$0xff]
        %v2547 = vld [vmem:[%s1573 + $0xc2] sm:$0xff]
        %v2548 = vld [vmem:[%s1573 + $0xca] sm:$0xff]
        %v2549 = vld [vmem:[%s1573 + $0xda] sm:$0xff]
        %v2550 = vld [vmem:[%s1573 + $0xe2] sm:$0xff]
        %v2551 = vld [vmem:[%s1573 + $0xf2] sm:$0xff]
        %v2552 = vld [vmem:[%s1573 + $0xfa] sm:$0xff]
        %v2553 = vld [vmem:[%s1573 + $0x10a] sm:$0xff]
        %v2554 = vld [vmem:[%s1573 + $0x112] sm:$0xff]
        %v2555 = vld [vmem:[%s1573 + $0x122] sm:$0xff]
        %v2556 = vld [vmem:[%s1573 + $0x12a] sm:$0xff]
        %v2557 = vld [vmem:[%s1573 + $0x13a] sm:$0xff]
        %v2558 = vld [vmem:[%s1573 + $0x142] sm:$0xff]
        %v2559 = vld [vmem:[%s1573 + $0x152] sm:$0xff]
        %v2560 = vld [vmem:[%s1573 + $0x15a] sm:$0xff]
        %v2561 = vld [vmem:[%s1573 + $0x16a] sm:$0xff]
        %v2562 = vld [vmem:[%s1573 + $0x172] sm:$0xff]
        %v2563 = vpack.c.bf16 %v2532, %v2531
        %v2564 = vpack.c.bf16 %v2534, %v2533
        %v2565 = vpack.c.bf16 %v2536, %v2535
        %v2566 = vpack.c.bf16 %v2538, %v2537
        %v2567 = vpack.c.bf16 %v2540, %v2539
        %v2568 = vpack.c.bf16 %v2542, %v2541
        %v2569 = vpack.c.bf16 %v2544, %v2543
        %v2570 = vpack.c.bf16 %v2546, %v2545
        %v2571 = vpack.c.bf16 %v2548, %v2547
        %v2572 = vpack.c.bf16 %v2550, %v2549
        %v2573 = vpack.c.bf16 %v2552, %v2551
        %v2574 = vpack.c.bf16 %v2554, %v2553
        %v2575 = vpack.c.bf16 %v2556, %v2555
        %v2576 = vpack.c.bf16 %v2558, %v2557
        %v2577 = vpack.c.bf16 %v2560, %v2559
        %v2578 = vpack.c.bf16 %v2562, %v2561
        %v2579 = vld [vmem:[%s274] sm:$0xff]
        %v2580 = vld [vmem:[%s274 + $0x8] sm:$0xff]
        %v2581 = vld [vmem:[%s274 + $0x10] sm:$0xff]
        %v2582 = vld [vmem:[%s274 + $0x18] sm:$0xff]
        %v2583 = vld [vmem:[%s274 + $0x20] sm:$0xff]
        %v2584 = vld [vmem:[%s274 + $0x28] sm:$0xff]
        %v2585 = vld [vmem:[%s274 + $0x30] sm:$0xff]
        %v2586 = vld [vmem:[%s274 + $0x38] sm:$0xff]
        %v2587 = vld [vmem:[%s274 + $0x40] sm:$0xff]
        %v2588 = vld [vmem:[%s274 + $0x48] sm:$0xff]
        %v2589 = vld [vmem:[%s274 + $0x50] sm:$0xff]
        %v2590 = vld [vmem:[%s274 + $0x58] sm:$0xff]
        %v2591 = vld [vmem:[%s274 + $0x60] sm:$0xff]
        %v2592 = vld [vmem:[%s274 + $0x68] sm:$0xff]
        %v2593 = vld [vmem:[%s274 + $0x70] sm:$0xff]
        %v2594 = vld [vmem:[%s274 + $0x78] sm:$0xff]
        %v2595 = vld [vmem:[%s274 + $0x80] sm:$0xff]
        %v2596 = vld [vmem:[%s274 + $0x88] sm:$0xff]
        %v2597 = vld [vmem:[%s274 + $0x90] sm:$0xff]
        %v2598 = vld [vmem:[%s274 + $0x98] sm:$0xff]
        %v2599 = vld [vmem:[%s274 + $0xa0] sm:$0xff]
        %v2600 = vld [vmem:[%s274 + $0xa8] sm:$0xff]
        %v2601 = vld [vmem:[%s274 + $0xb0] sm:$0xff]
        %v2602 = vld [vmem:[%s274 + $0xb8] sm:$0xff]
        %v2603 = vld [vmem:[%s274 + $0xc0] sm:$0xff]
        %v2604 = vld [vmem:[%s274 + $0xc8] sm:$0xff]
        %v2605 = vld [vmem:[%s274 + $0xd0] sm:$0xff]
        %v2606 = vld [vmem:[%s274 + $0xd8] sm:$0xff]
        %v2607 = vld [vmem:[%s274 + $0xe0] sm:$0xff]
        %v2608 = vld [vmem:[%s274 + $0xe8] sm:$0xff]
        %v2609 = vld [vmem:[%s274 + $0xf0] sm:$0xff]
        %v2610 = vld [vmem:[%s274 + $0xf8] sm:$0xff]
        %v2611 = vld [vmem:[%s274 + $0x100] sm:$0xff]
        %v2612 = vld [vmem:[%s274 + $0x108] sm:$0xff]
        %v2613 = vld [vmem:[%s274 + $0x110] sm:$0xff]
        %v2614 = vld [vmem:[%s274 + $0x118] sm:$0xff]
        %v2615 = vld [vmem:[%s274 + $0x120] sm:$0xff]
        %v2616 = vld [vmem:[%s274 + $0x128] sm:$0xff]
        %v2617 = vld [vmem:[%s274 + $0x130] sm:$0xff]
        %v2618 = vld [vmem:[%s274 + $0x138] sm:$0xff]
        %v2619 = vld [vmem:[%s274 + $0x140] sm:$0xff]
        %v2620 = vld [vmem:[%s274 + $0x148] sm:$0xff]
        %v2621 = vld [vmem:[%s274 + $0x150] sm:$0xff]
        %v2622 = vld [vmem:[%s274 + $0x158] sm:$0xff]
        %v2623 = vld [vmem:[%s274 + $0x160] sm:$0xff]
        %v2624 = vld [vmem:[%s274 + $0x168] sm:$0xff]
        %v2625 = vld [vmem:[%s274 + $0x170] sm:$0xff]
        %v2626 = vld [vmem:[%s274 + $0x178] sm:$0xff]
        %v2627 = vld [vmem:[%s274 + $0x180] sm:$0xff]
        %v2628 = vld [vmem:[%s274 + $0x188] sm:$0xff]
        %v2629 = vld [vmem:[%s274 + $0x190] sm:$0xff]
        %v2630 = vld [vmem:[%s274 + $0x198] sm:$0xff]
        %v2631 = vld [vmem:[%s274 + $0x1a0] sm:$0xff]
        %v2632 = vld [vmem:[%s274 + $0x1a8] sm:$0xff]
        %v2633 = vld [vmem:[%s274 + $0x1b0] sm:$0xff]
        %v2634 = vld [vmem:[%s274 + $0x1b8] sm:$0xff]
        %v2635 = vld [vmem:[%s274 + $0x1c0] sm:$0xff]
        %v2636 = vld [vmem:[%s274 + $0x1c8] sm:$0xff]
        %v2637 = vld [vmem:[%s274 + $0x1d0] sm:$0xff]
        %v2638 = vld [vmem:[%s274 + $0x1d8] sm:$0xff]
        %v2639 = vld [vmem:[%s274 + $0x1e0] sm:$0xff]
        %v2640 = vld [vmem:[%s274 + $0x1e8] sm:$0xff]
        %v2641 = vld [vmem:[%s274 + $0x1f0] sm:$0xff]
        %v2642 = vld [vmem:[%s274 + $0x1f8] sm:$0xff]
        %s2643 = scalar_lea.vmem [#allocation3], 32
        %v2644 = vld [vmem:[%s2643] sm:$0xff]
        %v2645 = vld [vmem:[%s2643 + $0x8] sm:$0xff]
        %v2648 = vunpack.c.l.b16 %v2644
        %v2649 = vunpack.c.h.b16 %v2644
        %v2650 = vunpack.c.l.b16 %v2645
        %v2651 = vunpack.c.h.b16 %v2645
        %v2652 = vpack.c.b16 %v2650, %v2648
        %v2653 = vpack.c.b16 %v2651, %v2649
        %v2657 = vsel %vm487, %v2563, 0
        %v2660 = vsel %vm487, %v2564, 0
        %v2663 = vsel %vm487, %v2565, 0
        %v2666 = vsel %vm487, %v2566, 0
        %v2669 = vsel %vm487, %v2567, 0
        %v2672 = vsel %vm487, %v2568, 0
        %v2675 = vsel %vm487, %v2569, 0
        %v2678 = vsel %vm487, %v2570, 0
        %v2681 = vsel %vm487, %v2571, 0
        %v2684 = vsel %vm487, %v2572, 0
        %v2687 = vsel %vm487, %v2573, 0
        %v2690 = vsel %vm487, %v2574, 0
        %v2693 = vsel %vm487, %v2575, 0
        %v2696 = vsel %vm487, %v2576, 0
        %v2699 = vsel %vm487, %v2577, 0
        %v2702 = vsel %vm487, %v2578, 0
        %2704 = vmatpush.bf16.msra.mxu0 0
        %2705 = vmatpush.bf16.msra.mxu0 0
        %2706 = vmatpush.bf16.msra.mxu0 0
        %2707 = vmatpush.bf16.msra.mxu0 0
        %2708 = vmatpush.bf16.msra.mxu0 0
        %2709 = vmatpush.bf16.msra.mxu0 0
        %2710 = vmatpush.bf16.msra.mxu0 0
        %2711 = vmatpush.bf16.msra.mxu0 %v2652
        %2712 = vmatmul.bf16.gmra.mxu0 %v2657
        %v2713 = vpop.f32.mrf.mxu0
        %v2714 = vadd.f32 0.0, %v2713
        %v2715 = vpop.f32.mrf.mxu0
        %v2716 = vadd.f32 0.0, %v2715
        %2717 = vmatmul.bf16.gmra.mxu0 %v2660
        %v2718 = vpop.f32.mrf.mxu0
        %v2719 = vadd.f32 0.0, %v2718
        %v2720 = vpop.f32.mrf.mxu0
        %v2721 = vadd.f32 0.0, %v2720
        %2722 = vmatmul.bf16.gmra.mxu0 %v2663
        %v2723 = vpop.f32.mrf.mxu0
        %v2724 = vadd.f32 0.0, %v2723
        %v2725 = vpop.f32.mrf.mxu0
        %v2726 = vadd.f32 0.0, %v2725
        %2727 = vmatmul.bf16.gmra.mxu0 %v2666
        %v2728 = vpop.f32.mrf.mxu0
        %v2729 = vadd.f32 0.0, %v2728
        %v2730 = vpop.f32.mrf.mxu0
        %v2731 = vadd.f32 0.0, %v2730
        %2732 = vmatmul.bf16.gmra.mxu0 %v2669
        %v2733 = vpop.f32.mrf.mxu0
        %v2734 = vadd.f32 0.0, %v2733
        %v2735 = vpop.f32.mrf.mxu0
        %v2736 = vadd.f32 0.0, %v2735
        %2737 = vmatmul.bf16.gmra.mxu0 %v2672
        %v2738 = vpop.f32.mrf.mxu0
        %v2739 = vadd.f32 0.0, %v2738
        %v2740 = vpop.f32.mrf.mxu0
        %v2741 = vadd.f32 0.0, %v2740
        %2742 = vmatmul.bf16.gmra.mxu0 %v2675
        %v2743 = vpop.f32.mrf.mxu0
        %v2744 = vadd.f32 0.0, %v2743
        %v2745 = vpop.f32.mrf.mxu0
        %v2746 = vadd.f32 0.0, %v2745
        %2747 = vmatmul.bf16.gmra.mxu0 %v2678
        %v2748 = vpop.f32.mrf.mxu0
        %v2749 = vadd.f32 0.0, %v2748
        %v2750 = vpop.f32.mrf.mxu0
        %v2751 = vadd.f32 0.0, %v2750
        %2752 = vmatmul.bf16.gmra.mxu0 %v2681
        %v2753 = vpop.f32.mrf.mxu0
        %v2754 = vadd.f32 0.0, %v2753
        %v2755 = vpop.f32.mrf.mxu0
        %v2756 = vadd.f32 0.0, %v2755
        %2757 = vmatmul.bf16.gmra.mxu0 %v2684
        %v2758 = vpop.f32.mrf.mxu0
        %v2759 = vadd.f32 0.0, %v2758
        %v2760 = vpop.f32.mrf.mxu0
        %v2761 = vadd.f32 0.0, %v2760
        %2762 = vmatmul.bf16.gmra.mxu0 %v2687
        %v2763 = vpop.f32.mrf.mxu0
        %v2764 = vadd.f32 0.0, %v2763
        %v2765 = vpop.f32.mrf.mxu0
        %v2766 = vadd.f32 0.0, %v2765
        %2767 = vmatmul.bf16.gmra.mxu0 %v2690
        %v2768 = vpop.f32.mrf.mxu0
        %v2769 = vadd.f32 0.0, %v2768
        %v2770 = vpop.f32.mrf.mxu0
        %v2771 = vadd.f32 0.0, %v2770
        %2772 = vmatmul.bf16.gmra.mxu0 %v2693
        %v2773 = vpop.f32.mrf.mxu0
        %v2774 = vadd.f32 0.0, %v2773
        %v2775 = vpop.f32.mrf.mxu0
        %v2776 = vadd.f32 0.0, %v2775
        %2777 = vmatmul.bf16.gmra.mxu0 %v2696
        %v2778 = vpop.f32.mrf.mxu0
        %v2779 = vadd.f32 0.0, %v2778
        %v2780 = vpop.f32.mrf.mxu0
        %v2781 = vadd.f32 0.0, %v2780
        %2782 = vmatmul.bf16.gmra.mxu0 %v2699
        %v2783 = vpop.f32.mrf.mxu0
        %v2784 = vadd.f32 0.0, %v2783
        %v2785 = vpop.f32.mrf.mxu0
        %v2786 = vadd.f32 0.0, %v2785
        %2787 = vmatmul.bf16.gmra.mxu0 %v2702
        %v2788 = vpop.f32.mrf.mxu0
        %v2789 = vadd.f32 0.0, %v2788
        %v2790 = vpop.f32.mrf.mxu0
        %v2791 = vadd.f32 0.0, %v2790
        %2792 = vdwg.mxu0
        %2793 = vmatpush.bf16.msra.mxu0 0
        %2794 = vmatpush.bf16.msra.mxu0 0
        %2795 = vmatpush.bf16.msra.mxu0 0
        %2796 = vmatpush.bf16.msra.mxu0 0
        %2797 = vmatpush.bf16.msra.mxu0 0
        %2798 = vmatpush.bf16.msra.mxu0 0
        %2799 = vmatpush.bf16.msra.mxu0 0
        %2800 = vmatpush.bf16.msra.mxu0 %v2653
        %2801 = vmatmul.bf16.gmra.mxu0 %v2657
        %v2802 = vpop.f32.mrf.mxu0
        %v2803 = vadd.f32 0.0, %v2802
        %v2804 = vpop.f32.mrf.mxu0
        %v2805 = vadd.f32 0.0, %v2804
        %2806 = vmatmul.bf16.gmra.mxu0 %v2660
        %v2807 = vpop.f32.mrf.mxu0
        %v2808 = vadd.f32 0.0, %v2807
        %v2809 = vpop.f32.mrf.mxu0
        %v2810 = vadd.f32 0.0, %v2809
        %2811 = vmatmul.bf16.gmra.mxu0 %v2663
        %v2812 = vpop.f32.mrf.mxu0
        %v2813 = vadd.f32 0.0, %v2812
        %v2814 = vpop.f32.mrf.mxu0
        %v2815 = vadd.f32 0.0, %v2814
        %2816 = vmatmul.bf16.gmra.mxu0 %v2666
        %v2817 = vpop.f32.mrf.mxu0
        %v2818 = vadd.f32 0.0, %v2817
        %v2819 = vpop.f32.mrf.mxu0
        %v2820 = vadd.f32 0.0, %v2819
        %2821 = vmatmul.bf16.gmra.mxu0 %v2669
        %v2822 = vpop.f32.mrf.mxu0
        %v2823 = vadd.f32 0.0, %v2822
        %v2824 = vpop.f32.mrf.mxu0
        %v2825 = vadd.f32 0.0, %v2824
        %2826 = vmatmul.bf16.gmra.mxu0 %v2672
        %v2827 = vpop.f32.mrf.mxu0
        %v2828 = vadd.f32 0.0, %v2827
        %v2829 = vpop.f32.mrf.mxu0
        %v2830 = vadd.f32 0.0, %v2829
        %2831 = vmatmul.bf16.gmra.mxu0 %v2675
        %v2832 = vpop.f32.mrf.mxu0
        %v2833 = vadd.f32 0.0, %v2832
        %v2834 = vpop.f32.mrf.mxu0
        %v2835 = vadd.f32 0.0, %v2834
        %2836 = vmatmul.bf16.gmra.mxu0 %v2678
        %v2837 = vpop.f32.mrf.mxu0
        %v2838 = vadd.f32 0.0, %v2837
        %v2839 = vpop.f32.mrf.mxu0
        %v2840 = vadd.f32 0.0, %v2839
        %2841 = vmatmul.bf16.gmra.mxu0 %v2681
        %v2842 = vpop.f32.mrf.mxu0
        %v2843 = vadd.f32 0.0, %v2842
        %v2844 = vpop.f32.mrf.mxu0
        %v2845 = vadd.f32 0.0, %v2844
        %2846 = vmatmul.bf16.gmra.mxu0 %v2684
        %v2847 = vpop.f32.mrf.mxu0
        %v2848 = vadd.f32 0.0, %v2847
        %v2849 = vpop.f32.mrf.mxu0
        %v2850 = vadd.f32 0.0, %v2849
        %2851 = vmatmul.bf16.gmra.mxu0 %v2687
        %v2852 = vpop.f32.mrf.mxu0
        %v2853 = vadd.f32 0.0, %v2852
        %v2854 = vpop.f32.mrf.mxu0
        %v2855 = vadd.f32 0.0, %v2854
        %2856 = vmatmul.bf16.gmra.mxu0 %v2690
        %v2857 = vpop.f32.mrf.mxu0
        %v2858 = vadd.f32 0.0, %v2857
        %v2859 = vpop.f32.mrf.mxu0
        %v2860 = vadd.f32 0.0, %v2859
        %2861 = vmatmul.bf16.gmra.mxu0 %v2693
        %v2862 = vpop.f32.mrf.mxu0
        %v2863 = vadd.f32 0.0, %v2862
        %v2864 = vpop.f32.mrf.mxu0
        %v2865 = vadd.f32 0.0, %v2864
        %2866 = vmatmul.bf16.gmra.mxu0 %v2696
        %v2867 = vpop.f32.mrf.mxu0
        %v2868 = vadd.f32 0.0, %v2867
        %v2869 = vpop.f32.mrf.mxu0
        %v2870 = vadd.f32 0.0, %v2869
        %2871 = vmatmul.bf16.gmra.mxu0 %v2699
        %v2872 = vpop.f32.mrf.mxu0
        %v2873 = vadd.f32 0.0, %v2872
        %v2874 = vpop.f32.mrf.mxu0
        %v2875 = vadd.f32 0.0, %v2874
        %2876 = vmatmul.bf16.gmra.mxu0 %v2702
        %v2877 = vpop.f32.mrf.mxu0
        %v2878 = vadd.f32 0.0, %v2877
        %v2879 = vpop.f32.mrf.mxu0
        %v2880 = vadd.f32 0.0, %v2879
        %2881 = vdwg.mxu0
        %v2882 = vadd.f32 %v2579, %v2714
        %v2883 = vadd.f32 %v2580, %v2803
        %v2884 = vadd.f32 %v2581, %v2716
        %v2885 = vadd.f32 %v2582, %v2805
        %v2886 = vadd.f32 %v2583, %v2719
        %v2887 = vadd.f32 %v2584, %v2808
        %v2888 = vadd.f32 %v2585, %v2721
        %v2889 = vadd.f32 %v2586, %v2810
        %v2890 = vadd.f32 %v2587, %v2724
        %v2891 = vadd.f32 %v2588, %v2813
        %v2892 = vadd.f32 %v2589, %v2726
        %v2893 = vadd.f32 %v2590, %v2815
        %v2894 = vadd.f32 %v2591, %v2729
        %v2895 = vadd.f32 %v2592, %v2818
        %v2896 = vadd.f32 %v2593, %v2731
        %v2897 = vadd.f32 %v2594, %v2820
        %v2898 = vadd.f32 %v2595, %v2734
        %v2899 = vadd.f32 %v2596, %v2823
        %v2900 = vadd.f32 %v2597, %v2736
        %v2901 = vadd.f32 %v2598, %v2825
        %v2902 = vadd.f32 %v2599, %v2739
        %v2903 = vadd.f32 %v2600, %v2828
        %v2904 = vadd.f32 %v2601, %v2741
        %v2905 = vadd.f32 %v2602, %v2830
        %v2906 = vadd.f32 %v2603, %v2744
        %v2907 = vadd.f32 %v2604, %v2833
        %v2908 = vadd.f32 %v2605, %v2746
        %v2909 = vadd.f32 %v2606, %v2835
        %v2910 = vadd.f32 %v2607, %v2749
        %v2911 = vadd.f32 %v2608, %v2838
        %v2912 = vadd.f32 %v2609, %v2751
        %v2913 = vadd.f32 %v2610, %v2840
        %v2914 = vadd.f32 %v2611, %v2754
        %v2915 = vadd.f32 %v2612, %v2843
        %v2916 = vadd.f32 %v2613, %v2756
        %v2917 = vadd.f32 %v2614, %v2845
        %v2918 = vadd.f32 %v2615, %v2759
        %v2919 = vadd.f32 %v2616, %v2848
        %v2920 = vadd.f32 %v2617, %v2761
        %v2921 = vadd.f32 %v2618, %v2850
        %v2922 = vadd.f32 %v2619, %v2764
        %v2923 = vadd.f32 %v2620, %v2853
        %v2924 = vadd.f32 %v2621, %v2766
        %v2925 = vadd.f32 %v2622, %v2855
        %v2926 = vadd.f32 %v2623, %v2769
        %v2927 = vadd.f32 %v2624, %v2858
        %v2928 = vadd.f32 %v2625, %v2771
        %v2929 = vadd.f32 %v2626, %v2860
        %v2930 = vadd.f32 %v2627, %v2774
        %v2931 = vadd.f32 %v2628, %v2863
        %v2932 = vadd.f32 %v2629, %v2776
        %v2933 = vadd.f32 %v2630, %v2865
        %v2934 = vadd.f32 %v2631, %v2779
        %v2935 = vadd.f32 %v2632, %v2868
        %v2936 = vadd.f32 %v2633, %v2781
        %v2937 = vadd.f32 %v2634, %v2870
        %v2938 = vadd.f32 %v2635, %v2784
        %v2939 = vadd.f32 %v2636, %v2873
        %v2940 = vadd.f32 %v2637, %v2786
        %v2941 = vadd.f32 %v2638, %v2875
        %v2942 = vadd.f32 %v2639, %v2789
        %v2943 = vadd.f32 %v2640, %v2878
        %v2944 = vadd.f32 %v2641, %v2791
        %v2945 = vadd.f32 %v2642, %v2880
        %2946 = vst [vmem:[%s274] sm:$0xff] %v2882
        %2947 = vst [vmem:[%s274 + $0x8] sm:$0xff] %v2883
        %2948 = vst [vmem:[%s274 + $0x10] sm:$0xff] %v2884
        %2949 = vst [vmem:[%s274 + $0x18] sm:$0xff] %v2885
        %2950 = vst [vmem:[%s274 + $0x20] sm:$0xff] %v2886
        %2951 = vst [vmem:[%s274 + $0x28] sm:$0xff] %v2887
        %2952 = vst [vmem:[%s274 + $0x30] sm:$0xff] %v2888
        %2953 = vst [vmem:[%s274 + $0x38] sm:$0xff] %v2889
        %2954 = vst [vmem:[%s274 + $0x40] sm:$0xff] %v2890
        %2955 = vst [vmem:[%s274 + $0x48] sm:$0xff] %v2891
        %2956 = vst [vmem:[%s274 + $0x50] sm:$0xff] %v2892
        %2957 = vst [vmem:[%s274 + $0x58] sm:$0xff] %v2893
        %2958 = vst [vmem:[%s274 + $0x60] sm:$0xff] %v2894
        %2959 = vst [vmem:[%s274 + $0x68] sm:$0xff] %v2895
        %2960 = vst [vmem:[%s274 + $0x70] sm:$0xff] %v2896
        %2961 = vst [vmem:[%s274 + $0x78] sm:$0xff] %v2897
        %2962 = vst [vmem:[%s274 + $0x80] sm:$0xff] %v2898
        %2963 = vst [vmem:[%s274 + $0x88] sm:$0xff] %v2899
        %2964 = vst [vmem:[%s274 + $0x90] sm:$0xff] %v2900
        %2965 = vst [vmem:[%s274 + $0x98] sm:$0xff] %v2901
        %2966 = vst [vmem:[%s274 + $0xa0] sm:$0xff] %v2902
        %2967 = vst [vmem:[%s274 + $0xa8] sm:$0xff] %v2903
        %2968 = vst [vmem:[%s274 + $0xb0] sm:$0xff] %v2904
        %2969 = vst [vmem:[%s274 + $0xb8] sm:$0xff] %v2905
        %2970 = vst [vmem:[%s274 + $0xc0] sm:$0xff] %v2906
        %2971 = vst [vmem:[%s274 + $0xc8] sm:$0xff] %v2907
        %2972 = vst [vmem:[%s274 + $0xd0] sm:$0xff] %v2908
        %2973 = vst [vmem:[%s274 + $0xd8] sm:$0xff] %v2909
        %2974 = vst [vmem:[%s274 + $0xe0] sm:$0xff] %v2910
        %2975 = vst [vmem:[%s274 + $0xe8] sm:$0xff] %v2911
        %2976 = vst [vmem:[%s274 + $0xf0] sm:$0xff] %v2912
        %2977 = vst [vmem:[%s274 + $0xf8] sm:$0xff] %v2913
        %2978 = vst [vmem:[%s274 + $0x100] sm:$0xff] %v2914
        %2979 = vst [vmem:[%s274 + $0x108] sm:$0xff] %v2915
        %2980 = vst [vmem:[%s274 + $0x110] sm:$0xff] %v2916
        %2981 = vst [vmem:[%s274 + $0x118] sm:$0xff] %v2917
        %2982 = vst [vmem:[%s274 + $0x120] sm:$0xff] %v2918
        %2983 = vst [vmem:[%s274 + $0x128] sm:$0xff] %v2919
        %2984 = vst [vmem:[%s274 + $0x130] sm:$0xff] %v2920
        %2985 = vst [vmem:[%s274 + $0x138] sm:$0xff] %v2921
        %2986 = vst [vmem:[%s274 + $0x140] sm:$0xff] %v2922
        %2987 = vst [vmem:[%s274 + $0x148] sm:$0xff] %v2923
        %2988 = vst [vmem:[%s274 + $0x150] sm:$0xff] %v2924
        %2989 = vst [vmem:[%s274 + $0x158] sm:$0xff] %v2925
        %2990 = vst [vmem:[%s274 + $0x160] sm:$0xff] %v2926
        %2991 = vst [vmem:[%s274 + $0x168] sm:$0xff] %v2927
        %2992 = vst [vmem:[%s274 + $0x170] sm:$0xff] %v2928
        %2993 = vst [vmem:[%s274 + $0x178] sm:$0xff] %v2929
        %2994 = vst [vmem:[%s274 + $0x180] sm:$0xff] %v2930
        %2995 = vst [vmem:[%s274 + $0x188] sm:$0xff] %v2931
        %2996 = vst [vmem:[%s274 + $0x190] sm:$0xff] %v2932
        %2997 = vst [vmem:[%s274 + $0x198] sm:$0xff] %v2933
        %2998 = vst [vmem:[%s274 + $0x1a0] sm:$0xff] %v2934
        %2999 = vst [vmem:[%s274 + $0x1a8] sm:$0xff] %v2935
        %3000 = vst [vmem:[%s274 + $0x1b0] sm:$0xff] %v2936
        %3001 = vst [vmem:[%s274 + $0x1b8] sm:$0xff] %v2937
        %3002 = vst [vmem:[%s274 + $0x1c0] sm:$0xff] %v2938
        %3003 = vst [vmem:[%s274 + $0x1c8] sm:$0xff] %v2939
        %3004 = vst [vmem:[%s274 + $0x1d0] sm:$0xff] %v2940
        %3005 = vst [vmem:[%s274 + $0x1d8] sm:$0xff] %v2941
        %3006 = vst [vmem:[%s274 + $0x1e0] sm:$0xff] %v2942
        %3007 = vst [vmem:[%s274 + $0x1e8] sm:$0xff] %v2943
        %3008 = vst [vmem:[%s274 + $0x1f0] sm:$0xff] %v2944
        %3009 = vst [vmem:[%s274 + $0x1f8] sm:$0xff] %v2945
        %s3010 = sadd.s32 %s1501, 1
        %s3011 = smul.u32 %s3010, 24
        %s3012 = scalar_lea.vmem [#allocation2], %s3011
        %v3013 = vld [vmem:[%s3012] sm:$0xff]
        %v3014 = vld [vmem:[%s3012 + $0x8] sm:$0xff]
        %v3015 = vld [vmem:[%s3012 + $0x18] sm:$0xff]
        %v3016 = vld [vmem:[%s3012 + $0x20] sm:$0xff]
        %v3017 = vld [vmem:[%s3012 + $0x30] sm:$0xff]
        %v3018 = vld [vmem:[%s3012 + $0x38] sm:$0xff]
        %v3019 = vld [vmem:[%s3012 + $0x48] sm:$0xff]
        %v3020 = vld [vmem:[%s3012 + $0x50] sm:$0xff]
        %v3021 = vld [vmem:[%s3012 + $0x60] sm:$0xff]
        %v3022 = vld [vmem:[%s3012 + $0x68] sm:$0xff]
        %v3023 = vld [vmem:[%s3012 + $0x78] sm:$0xff]
        %v3024 = vld [vmem:[%s3012 + $0x80] sm:$0xff]
        %v3025 = vld [vmem:[%s3012 + $0x90] sm:$0xff]
        %v3026 = vld [vmem:[%s3012 + $0x98] sm:$0xff]
        %v3027 = vld [vmem:[%s3012 + $0xa8] sm:$0xff]
        %v3028 = vld [vmem:[%s3012 + $0xb0] sm:$0xff]
        %v3029 = vld [vmem:[%s3012 + $0xc0] sm:$0xff]
        %v3030 = vld [vmem:[%s3012 + $0xc8] sm:$0xff]
        %v3031 = vld [vmem:[%s3012 + $0xd8] sm:$0xff]
        %v3032 = vld [vmem:[%s3012 + $0xe0] sm:$0xff]
        %v3033 = vld [vmem:[%s3012 + $0xf0] sm:$0xff]
        %v3034 = vld [vmem:[%s3012 + $0xf8] sm:$0xff]
        %v3035 = vld [vmem:[%s3012 + $0x108] sm:$0xff]
        %v3036 = vld [vmem:[%s3012 + $0x110] sm:$0xff]
        %v3037 = vld [vmem:[%s3012 + $0x120] sm:$0xff]
        %v3038 = vld [vmem:[%s3012 + $0x128] sm:$0xff]
        %v3039 = vld [vmem:[%s3012 + $0x138] sm:$0xff]
        %v3040 = vld [vmem:[%s3012 + $0x140] sm:$0xff]
        %v3041 = vld [vmem:[%s3012 + $0x150] sm:$0xff]
        %v3042 = vld [vmem:[%s3012 + $0x158] sm:$0xff]
        %v3043 = vld [vmem:[%s3012 + $0x168] sm:$0xff]
        %v3044 = vld [vmem:[%s3012 + $0x170] sm:$0xff]
        %v3045 = vpack.c.bf16 %v3014, %v3013
        %v3046 = vpack.c.bf16 %v3016, %v3015
        %v3047 = vpack.c.bf16 %v3018, %v3017
        %v3048 = vpack.c.bf16 %v3020, %v3019
        %v3049 = vpack.c.bf16 %v3022, %v3021
        %v3050 = vpack.c.bf16 %v3024, %v3023
        %v3051 = vpack.c.bf16 %v3026, %v3025
        %v3052 = vpack.c.bf16 %v3028, %v3027
        %v3053 = vpack.c.bf16 %v3030, %v3029
        %v3054 = vpack.c.bf16 %v3032, %v3031
        %v3055 = vpack.c.bf16 %v3034, %v3033
        %v3056 = vpack.c.bf16 %v3036, %v3035
        %v3057 = vpack.c.bf16 %v3038, %v3037
        %v3058 = vpack.c.bf16 %v3040, %v3039
        %v3059 = vpack.c.bf16 %v3042, %v3041
        %v3060 = vpack.c.bf16 %v3044, %v3043
        %v3061 = vld [vmem:[%s274] sm:$0xff]
        %v3062 = vld [vmem:[%s274 + $0x8] sm:$0xff]
        %v3063 = vld [vmem:[%s274 + $0x10] sm:$0xff]
        %v3064 = vld [vmem:[%s274 + $0x18] sm:$0xff]
        %v3065 = vld [vmem:[%s274 + $0x20] sm:$0xff]
        %v3066 = vld [vmem:[%s274 + $0x28] sm:$0xff]
        %v3067 = vld [vmem:[%s274 + $0x30] sm:$0xff]
        %v3068 = vld [vmem:[%s274 + $0x38] sm:$0xff]
        %v3069 = vld [vmem:[%s274 + $0x40] sm:$0xff]
        %v3070 = vld [vmem:[%s274 + $0x48] sm:$0xff]
        %v3071 = vld [vmem:[%s274 + $0x50] sm:$0xff]
        %v3072 = vld [vmem:[%s274 + $0x58] sm:$0xff]
        %v3073 = vld [vmem:[%s274 + $0x60] sm:$0xff]
        %v3074 = vld [vmem:[%s274 + $0x68] sm:$0xff]
        %v3075 = vld [vmem:[%s274 + $0x70] sm:$0xff]
        %v3076 = vld [vmem:[%s274 + $0x78] sm:$0xff]
        %v3077 = vld [vmem:[%s274 + $0x80] sm:$0xff]
        %v3078 = vld [vmem:[%s274 + $0x88] sm:$0xff]
        %v3079 = vld [vmem:[%s274 + $0x90] sm:$0xff]
        %v3080 = vld [vmem:[%s274 + $0x98] sm:$0xff]
        %v3081 = vld [vmem:[%s274 + $0xa0] sm:$0xff]
        %v3082 = vld [vmem:[%s274 + $0xa8] sm:$0xff]
        %v3083 = vld [vmem:[%s274 + $0xb0] sm:$0xff]
        %v3084 = vld [vmem:[%s274 + $0xb8] sm:$0xff]
        %v3085 = vld [vmem:[%s274 + $0xc0] sm:$0xff]
        %v3086 = vld [vmem:[%s274 + $0xc8] sm:$0xff]
        %v3087 = vld [vmem:[%s274 + $0xd0] sm:$0xff]
        %v3088 = vld [vmem:[%s274 + $0xd8] sm:$0xff]
        %v3089 = vld [vmem:[%s274 + $0xe0] sm:$0xff]
        %v3090 = vld [vmem:[%s274 + $0xe8] sm:$0xff]
        %v3091 = vld [vmem:[%s274 + $0xf0] sm:$0xff]
        %v3092 = vld [vmem:[%s274 + $0xf8] sm:$0xff]
        %v3093 = vld [vmem:[%s274 + $0x100] sm:$0xff]
        %v3094 = vld [vmem:[%s274 + $0x108] sm:$0xff]
        %v3095 = vld [vmem:[%s274 + $0x110] sm:$0xff]
        %v3096 = vld [vmem:[%s274 + $0x118] sm:$0xff]
        %v3097 = vld [vmem:[%s274 + $0x120] sm:$0xff]
        %v3098 = vld [vmem:[%s274 + $0x128] sm:$0xff]
        %v3099 = vld [vmem:[%s274 + $0x130] sm:$0xff]
        %v3100 = vld [vmem:[%s274 + $0x138] sm:$0xff]
        %v3101 = vld [vmem:[%s274 + $0x140] sm:$0xff]
        %v3102 = vld [vmem:[%s274 + $0x148] sm:$0xff]
        %v3103 = vld [vmem:[%s274 + $0x150] sm:$0xff]
        %v3104 = vld [vmem:[%s274 + $0x158] sm:$0xff]
        %v3105 = vld [vmem:[%s274 + $0x160] sm:$0xff]
        %v3106 = vld [vmem:[%s274 + $0x168] sm:$0xff]
        %v3107 = vld [vmem:[%s274 + $0x170] sm:$0xff]
        %v3108 = vld [vmem:[%s274 + $0x178] sm:$0xff]
        %v3109 = vld [vmem:[%s274 + $0x180] sm:$0xff]
        %v3110 = vld [vmem:[%s274 + $0x188] sm:$0xff]
        %v3111 = vld [vmem:[%s274 + $0x190] sm:$0xff]
        %v3112 = vld [vmem:[%s274 + $0x198] sm:$0xff]
        %v3113 = vld [vmem:[%s274 + $0x1a0] sm:$0xff]
        %v3114 = vld [vmem:[%s274 + $0x1a8] sm:$0xff]
        %v3115 = vld [vmem:[%s274 + $0x1b0] sm:$0xff]
        %v3116 = vld [vmem:[%s274 + $0x1b8] sm:$0xff]
        %v3117 = vld [vmem:[%s274 + $0x1c0] sm:$0xff]
        %v3118 = vld [vmem:[%s274 + $0x1c8] sm:$0xff]
        %v3119 = vld [vmem:[%s274 + $0x1d0] sm:$0xff]
        %v3120 = vld [vmem:[%s274 + $0x1d8] sm:$0xff]
        %v3121 = vld [vmem:[%s274 + $0x1e0] sm:$0xff]
        %v3122 = vld [vmem:[%s274 + $0x1e8] sm:$0xff]
        %v3123 = vld [vmem:[%s274 + $0x1f0] sm:$0xff]
        %v3124 = vld [vmem:[%s274 + $0x1f8] sm:$0xff]
        %s3125 = scalar_lea.vmem [#allocation3], 48
        %v3126 = vld [vmem:[%s3125] sm:$0xff]
        %v3127 = vld [vmem:[%s3125 + $0x8] sm:$0xff]
        %v3130 = vunpack.c.l.b16 %v3126
        %v3131 = vunpack.c.h.b16 %v3126
        %v3132 = vunpack.c.l.b16 %v3127
        %v3133 = vunpack.c.h.b16 %v3127
        %v3134 = vpack.c.b16 %v3132, %v3130
        %v3135 = vpack.c.b16 %v3133, %v3131
        %v3139 = vsel %vm487, %v3045, 0
        %v3142 = vsel %vm487, %v3046, 0
        %v3145 = vsel %vm487, %v3047, 0
        %v3148 = vsel %vm487, %v3048, 0
        %v3151 = vsel %vm487, %v3049, 0
        %v3154 = vsel %vm487, %v3050, 0
        %v3157 = vsel %vm487, %v3051, 0
        %v3160 = vsel %vm487, %v3052, 0
        %v3163 = vsel %vm487, %v3053, 0
        %v3166 = vsel %vm487, %v3054, 0
        %v3169 = vsel %vm487, %v3055, 0
        %v3172 = vsel %vm487, %v3056, 0
        %v3175 = vsel %vm487, %v3057, 0
        %v3178 = vsel %vm487, %v3058, 0
        %v3181 = vsel %vm487, %v3059, 0
        %v3184 = vsel %vm487, %v3060, 0
        %3186 = vmatpush.bf16.msra.mxu0 0
        %3187 = vmatpush.bf16.msra.mxu0 0
        %3188 = vmatpush.bf16.msra.mxu0 0
        %3189 = vmatpush.bf16.msra.mxu0 0
        %3190 = vmatpush.bf16.msra.mxu0 0
        %3191 = vmatpush.bf16.msra.mxu0 0
        %3192 = vmatpush.bf16.msra.mxu0 0
        %3193 = vmatpush.bf16.msra.mxu0 %v3134
        %3194 = vmatmul.bf16.gmra.mxu0 %v3139
        %v3195 = vpop.f32.mrf.mxu0
        %v3196 = vadd.f32 0.0, %v3195
        %v3197 = vpop.f32.mrf.mxu0
        %v3198 = vadd.f32 0.0, %v3197
        %3199 = vmatmul.bf16.gmra.mxu0 %v3142
        %v3200 = vpop.f32.mrf.mxu0
        %v3201 = vadd.f32 0.0, %v3200
        %v3202 = vpop.f32.mrf.mxu0
        %v3203 = vadd.f32 0.0, %v3202
        %3204 = vmatmul.bf16.gmra.mxu0 %v3145
        %v3205 = vpop.f32.mrf.mxu0
        %v3206 = vadd.f32 0.0, %v3205
        %v3207 = vpop.f32.mrf.mxu0
        %v3208 = vadd.f32 0.0, %v3207
        %3209 = vmatmul.bf16.gmra.mxu0 %v3148
        %v3210 = vpop.f32.mrf.mxu0
        %v3211 = vadd.f32 0.0, %v3210
        %v3212 = vpop.f32.mrf.mxu0
        %v3213 = vadd.f32 0.0, %v3212
        %3214 = vmatmul.bf16.gmra.mxu0 %v3151
        %v3215 = vpop.f32.mrf.mxu0
        %v3216 = vadd.f32 0.0, %v3215
        %v3217 = vpop.f32.mrf.mxu0
        %v3218 = vadd.f32 0.0, %v3217
        %3219 = vmatmul.bf16.gmra.mxu0 %v3154
        %v3220 = vpop.f32.mrf.mxu0
        %v3221 = vadd.f32 0.0, %v3220
        %v3222 = vpop.f32.mrf.mxu0
        %v3223 = vadd.f32 0.0, %v3222
        %3224 = vmatmul.bf16.gmra.mxu0 %v3157
        %v3225 = vpop.f32.mrf.mxu0
        %v3226 = vadd.f32 0.0, %v3225
        %v3227 = vpop.f32.mrf.mxu0
        %v3228 = vadd.f32 0.0, %v3227
        %3229 = vmatmul.bf16.gmra.mxu0 %v3160
        %v3230 = vpop.f32.mrf.mxu0
        %v3231 = vadd.f32 0.0, %v3230
        %v3232 = vpop.f32.mrf.mxu0
        %v3233 = vadd.f32 0.0, %v3232
        %3234 = vmatmul.bf16.gmra.mxu0 %v3163
        %v3235 = vpop.f32.mrf.mxu0
        %v3236 = vadd.f32 0.0, %v3235
        %v3237 = vpop.f32.mrf.mxu0
        %v3238 = vadd.f32 0.0, %v3237
        %3239 = vmatmul.bf16.gmra.mxu0 %v3166
        %v3240 = vpop.f32.mrf.mxu0
        %v3241 = vadd.f32 0.0, %v3240
        %v3242 = vpop.f32.mrf.mxu0
        %v3243 = vadd.f32 0.0, %v3242
        %3244 = vmatmul.bf16.gmra.mxu0 %v3169
        %v3245 = vpop.f32.mrf.mxu0
        %v3246 = vadd.f32 0.0, %v3245
        %v3247 = vpop.f32.mrf.mxu0
        %v3248 = vadd.f32 0.0, %v3247
        %3249 = vmatmul.bf16.gmra.mxu0 %v3172
        %v3250 = vpop.f32.mrf.mxu0
        %v3251 = vadd.f32 0.0, %v3250
        %v3252 = vpop.f32.mrf.mxu0
        %v3253 = vadd.f32 0.0, %v3252
        %3254 = vmatmul.bf16.gmra.mxu0 %v3175
        %v3255 = vpop.f32.mrf.mxu0
        %v3256 = vadd.f32 0.0, %v3255
        %v3257 = vpop.f32.mrf.mxu0
        %v3258 = vadd.f32 0.0, %v3257
        %3259 = vmatmul.bf16.gmra.mxu0 %v3178
        %v3260 = vpop.f32.mrf.mxu0
        %v3261 = vadd.f32 0.0, %v3260
        %v3262 = vpop.f32.mrf.mxu0
        %v3263 = vadd.f32 0.0, %v3262
        %3264 = vmatmul.bf16.gmra.mxu0 %v3181
        %v3265 = vpop.f32.mrf.mxu0
        %v3266 = vadd.f32 0.0, %v3265
        %v3267 = vpop.f32.mrf.mxu0
        %v3268 = vadd.f32 0.0, %v3267
        %3269 = vmatmul.bf16.gmra.mxu0 %v3184
        %v3270 = vpop.f32.mrf.mxu0
        %v3271 = vadd.f32 0.0, %v3270
        %v3272 = vpop.f32.mrf.mxu0
        %v3273 = vadd.f32 0.0, %v3272
        %3274 = vdwg.mxu0
        %3275 = vmatpush.bf16.msra.mxu0 0
        %3276 = vmatpush.bf16.msra.mxu0 0
        %3277 = vmatpush.bf16.msra.mxu0 0
        %3278 = vmatpush.bf16.msra.mxu0 0
        %3279 = vmatpush.bf16.msra.mxu0 0
        %3280 = vmatpush.bf16.msra.mxu0 0
        %3281 = vmatpush.bf16.msra.mxu0 0
        %3282 = vmatpush.bf16.msra.mxu0 %v3135
        %3283 = vmatmul.bf16.gmra.mxu0 %v3139
        %v3284 = vpop.f32.mrf.mxu0
        %v3285 = vadd.f32 0.0, %v3284
        %v3286 = vpop.f32.mrf.mxu0
        %v3287 = vadd.f32 0.0, %v3286
        %3288 = vmatmul.bf16.gmra.mxu0 %v3142
        %v3289 = vpop.f32.mrf.mxu0
        %v3290 = vadd.f32 0.0, %v3289
        %v3291 = vpop.f32.mrf.mxu0
        %v3292 = vadd.f32 0.0, %v3291
        %3293 = vmatmul.bf16.gmra.mxu0 %v3145
        %v3294 = vpop.f32.mrf.mxu0
        %v3295 = vadd.f32 0.0, %v3294
        %v3296 = vpop.f32.mrf.mxu0
        %v3297 = vadd.f32 0.0, %v3296
        %3298 = vmatmul.bf16.gmra.mxu0 %v3148
        %v3299 = vpop.f32.mrf.mxu0
        %v3300 = vadd.f32 0.0, %v3299
        %v3301 = vpop.f32.mrf.mxu0
        %v3302 = vadd.f32 0.0, %v3301
        %3303 = vmatmul.bf16.gmra.mxu0 %v3151
        %v3304 = vpop.f32.mrf.mxu0
        %v3305 = vadd.f32 0.0, %v3304
        %v3306 = vpop.f32.mrf.mxu0
        %v3307 = vadd.f32 0.0, %v3306
        %3308 = vmatmul.bf16.gmra.mxu0 %v3154
        %v3309 = vpop.f32.mrf.mxu0
        %v3310 = vadd.f32 0.0, %v3309
        %v3311 = vpop.f32.mrf.mxu0
        %v3312 = vadd.f32 0.0, %v3311
        %3313 = vmatmul.bf16.gmra.mxu0 %v3157
        %v3314 = vpop.f32.mrf.mxu0
        %v3315 = vadd.f32 0.0, %v3314
        %v3316 = vpop.f32.mrf.mxu0
        %v3317 = vadd.f32 0.0, %v3316
        %3318 = vmatmul.bf16.gmra.mxu0 %v3160
        %v3319 = vpop.f32.mrf.mxu0
        %v3320 = vadd.f32 0.0, %v3319
        %v3321 = vpop.f32.mrf.mxu0
        %v3322 = vadd.f32 0.0, %v3321
        %3323 = vmatmul.bf16.gmra.mxu0 %v3163
        %v3324 = vpop.f32.mrf.mxu0
        %v3325 = vadd.f32 0.0, %v3324
        %v3326 = vpop.f32.mrf.mxu0
        %v3327 = vadd.f32 0.0, %v3326
        %3328 = vmatmul.bf16.gmra.mxu0 %v3166
        %v3329 = vpop.f32.mrf.mxu0
        %v3330 = vadd.f32 0.0, %v3329
        %v3331 = vpop.f32.mrf.mxu0
        %v3332 = vadd.f32 0.0, %v3331
        %3333 = vmatmul.bf16.gmra.mxu0 %v3169
        %v3334 = vpop.f32.mrf.mxu0
        %v3335 = vadd.f32 0.0, %v3334
        %v3336 = vpop.f32.mrf.mxu0
        %v3337 = vadd.f32 0.0, %v3336
        %3338 = vmatmul.bf16.gmra.mxu0 %v3172
        %v3339 = vpop.f32.mrf.mxu0
        %v3340 = vadd.f32 0.0, %v3339
        %v3341 = vpop.f32.mrf.mxu0
        %v3342 = vadd.f32 0.0, %v3341
        %3343 = vmatmul.bf16.gmra.mxu0 %v3175
        %v3344 = vpop.f32.mrf.mxu0
        %v3345 = vadd.f32 0.0, %v3344
        %v3346 = vpop.f32.mrf.mxu0
        %v3347 = vadd.f32 0.0, %v3346
        %3348 = vmatmul.bf16.gmra.mxu0 %v3178
        %v3349 = vpop.f32.mrf.mxu0
        %v3350 = vadd.f32 0.0, %v3349
        %v3351 = vpop.f32.mrf.mxu0
        %v3352 = vadd.f32 0.0, %v3351
        %3353 = vmatmul.bf16.gmra.mxu0 %v3181
        %v3354 = vpop.f32.mrf.mxu0
        %v3355 = vadd.f32 0.0, %v3354
        %v3356 = vpop.f32.mrf.mxu0
        %v3357 = vadd.f32 0.0, %v3356
        %3358 = vmatmul.bf16.gmra.mxu0 %v3184
        %v3359 = vpop.f32.mrf.mxu0
        %v3360 = vadd.f32 0.0, %v3359
        %v3361 = vpop.f32.mrf.mxu0
        %v3362 = vadd.f32 0.0, %v3361
        %3363 = vdwg.mxu0
        %v3364 = vadd.f32 %v3061, %v3196
        %v3365 = vadd.f32 %v3062, %v3285
        %v3366 = vadd.f32 %v3063, %v3198
        %v3367 = vadd.f32 %v3064, %v3287
        %v3368 = vadd.f32 %v3065, %v3201
        %v3369 = vadd.f32 %v3066, %v3290
        %v3370 = vadd.f32 %v3067, %v3203
        %v3371 = vadd.f32 %v3068, %v3292
        %v3372 = vadd.f32 %v3069, %v3206
        %v3373 = vadd.f32 %v3070, %v3295
        %v3374 = vadd.f32 %v3071, %v3208
        %v3375 = vadd.f32 %v3072, %v3297
        %v3376 = vadd.f32 %v3073, %v3211
        %v3377 = vadd.f32 %v3074, %v3300
        %v3378 = vadd.f32 %v3075, %v3213
        %v3379 = vadd.f32 %v3076, %v3302
        %v3380 = vadd.f32 %v3077, %v3216
        %v3381 = vadd.f32 %v3078, %v3305
        %v3382 = vadd.f32 %v3079, %v3218
        %v3383 = vadd.f32 %v3080, %v3307
        %v3384 = vadd.f32 %v3081, %v3221
        %v3385 = vadd.f32 %v3082, %v3310
        %v3386 = vadd.f32 %v3083, %v3223
        %v3387 = vadd.f32 %v3084, %v3312
        %v3388 = vadd.f32 %v3085, %v3226
        %v3389 = vadd.f32 %v3086, %v3315
        %v3390 = vadd.f32 %v3087, %v3228
        %v3391 = vadd.f32 %v3088, %v3317
        %v3392 = vadd.f32 %v3089, %v3231
        %v3393 = vadd.f32 %v3090, %v3320
        %v3394 = vadd.f32 %v3091, %v3233
        %v3395 = vadd.f32 %v3092, %v3322
        %v3396 = vadd.f32 %v3093, %v3236
        %v3397 = vadd.f32 %v3094, %v3325
        %v3398 = vadd.f32 %v3095, %v3238
        %v3399 = vadd.f32 %v3096, %v3327
        %v3400 = vadd.f32 %v3097, %v3241
        %v3401 = vadd.f32 %v3098, %v3330
        %v3402 = vadd.f32 %v3099, %v3243
        %v3403 = vadd.f32 %v3100, %v3332
        %v3404 = vadd.f32 %v3101, %v3246
        %v3405 = vadd.f32 %v3102, %v3335
        %v3406 = vadd.f32 %v3103, %v3248
        %v3407 = vadd.f32 %v3104, %v3337
        %v3408 = vadd.f32 %v3105, %v3251
        %v3409 = vadd.f32 %v3106, %v3340
        %v3410 = vadd.f32 %v3107, %v3253
        %v3411 = vadd.f32 %v3108, %v3342
        %v3412 = vadd.f32 %v3109, %v3256
        %v3413 = vadd.f32 %v3110, %v3345
        %v3414 = vadd.f32 %v3111, %v3258
        %v3415 = vadd.f32 %v3112, %v3347
        %v3416 = vadd.f32 %v3113, %v3261
        %v3417 = vadd.f32 %v3114, %v3350
        %v3418 = vadd.f32 %v3115, %v3263
        %v3419 = vadd.f32 %v3116, %v3352
        %v3420 = vadd.f32 %v3117, %v3266
        %v3421 = vadd.f32 %v3118, %v3355
        %v3422 = vadd.f32 %v3119, %v3268
        %v3423 = vadd.f32 %v3120, %v3357
        %v3424 = vadd.f32 %v3121, %v3271
        %v3425 = vadd.f32 %v3122, %v3360
        %v3426 = vadd.f32 %v3123, %v3273
        %v3427 = vadd.f32 %v3124, %v3362
        %3428 = vst [vmem:[%s274] sm:$0xff] %v3364
        %3429 = vst [vmem:[%s274 + $0x8] sm:$0xff] %v3365
        %3430 = vst [vmem:[%s274 + $0x10] sm:$0xff] %v3366
        %3431 = vst [vmem:[%s274 + $0x18] sm:$0xff] %v3367
        %3432 = vst [vmem:[%s274 + $0x20] sm:$0xff] %v3368
        %3433 = vst [vmem:[%s274 + $0x28] sm:$0xff] %v3369
        %3434 = vst [vmem:[%s274 + $0x30] sm:$0xff] %v3370
        %3435 = vst [vmem:[%s274 + $0x38] sm:$0xff] %v3371
        %3436 = vst [vmem:[%s274 + $0x40] sm:$0xff] %v3372
        %3437 = vst [vmem:[%s274 + $0x48] sm:$0xff] %v3373
        %3438 = vst [vmem:[%s274 + $0x50] sm:$0xff] %v3374
        %3439 = vst [vmem:[%s274 + $0x58] sm:$0xff] %v3375
        %3440 = vst [vmem:[%s274 + $0x60] sm:$0xff] %v3376
        %3441 = vst [vmem:[%s274 + $0x68] sm:$0xff] %v3377
        %3442 = vst [vmem:[%s274 + $0x70] sm:$0xff] %v3378
        %3443 = vst [vmem:[%s274 + $0x78] sm:$0xff] %v3379
        %3444 = vst [vmem:[%s274 + $0x80] sm:$0xff] %v3380
        %3445 = vst [vmem:[%s274 + $0x88] sm:$0xff] %v3381
        %3446 = vst [vmem:[%s274 + $0x90] sm:$0xff] %v3382
        %3447 = vst [vmem:[%s274 + $0x98] sm:$0xff] %v3383
        %3448 = vst [vmem:[%s274 + $0xa0] sm:$0xff] %v3384
        %3449 = vst [vmem:[%s274 + $0xa8] sm:$0xff] %v3385
        %3450 = vst [vmem:[%s274 + $0xb0] sm:$0xff] %v3386
        %3451 = vst [vmem:[%s274 + $0xb8] sm:$0xff] %v3387
        %3452 = vst [vmem:[%s274 + $0xc0] sm:$0xff] %v3388
        %3453 = vst [vmem:[%s274 + $0xc8] sm:$0xff] %v3389
        %3454 = vst [vmem:[%s274 + $0xd0] sm:$0xff] %v3390
        %3455 = vst [vmem:[%s274 + $0xd8] sm:$0xff] %v3391
        %3456 = vst [vmem:[%s274 + $0xe0] sm:$0xff] %v3392
        %3457 = vst [vmem:[%s274 + $0xe8] sm:$0xff] %v3393
        %3458 = vst [vmem:[%s274 + $0xf0] sm:$0xff] %v3394
        %3459 = vst [vmem:[%s274 + $0xf8] sm:$0xff] %v3395
        %3460 = vst [vmem:[%s274 + $0x100] sm:$0xff] %v3396
        %3461 = vst [vmem:[%s274 + $0x108] sm:$0xff] %v3397
        %3462 = vst [vmem:[%s274 + $0x110] sm:$0xff] %v3398
        %3463 = vst [vmem:[%s274 + $0x118] sm:$0xff] %v3399
        %3464 = vst [vmem:[%s274 + $0x120] sm:$0xff] %v3400
        %3465 = vst [vmem:[%s274 + $0x128] sm:$0xff] %v3401
        %3466 = vst [vmem:[%s274 + $0x130] sm:$0xff] %v3402
        %3467 = vst [vmem:[%s274 + $0x138] sm:$0xff] %v3403
        %3468 = vst [vmem:[%s274 + $0x140] sm:$0xff] %v3404
        %3469 = vst [vmem:[%s274 + $0x148] sm:$0xff] %v3405
        %3470 = vst [vmem:[%s274 + $0x150] sm:$0xff] %v3406
        %3471 = vst [vmem:[%s274 + $0x158] sm:$0xff] %v3407
        %3472 = vst [vmem:[%s274 + $0x160] sm:$0xff] %v3408
        %3473 = vst [vmem:[%s274 + $0x168] sm:$0xff] %v3409
        %3474 = vst [vmem:[%s274 + $0x170] sm:$0xff] %v3410
        %3475 = vst [vmem:[%s274 + $0x178] sm:$0xff] %v3411
        %3476 = vst [vmem:[%s274 + $0x180] sm:$0xff] %v3412
        %3477 = vst [vmem:[%s274 + $0x188] sm:$0xff] %v3413
        %3478 = vst [vmem:[%s274 + $0x190] sm:$0xff] %v3414
        %3479 = vst [vmem:[%s274 + $0x198] sm:$0xff] %v3415
        %3480 = vst [vmem:[%s274 + $0x1a0] sm:$0xff] %v3416
        %3481 = vst [vmem:[%s274 + $0x1a8] sm:$0xff] %v3417
        %3482 = vst [vmem:[%s274 + $0x1b0] sm:$0xff] %v3418
        %3483 = vst [vmem:[%s274 + $0x1b8] sm:$0xff] %v3419
        %3484 = vst [vmem:[%s274 + $0x1c0] sm:$0xff] %v3420
        %3485 = vst [vmem:[%s274 + $0x1c8] sm:$0xff] %v3421
        %3486 = vst [vmem:[%s274 + $0x1d0] sm:$0xff] %v3422
        %3487 = vst [vmem:[%s274 + $0x1d8] sm:$0xff] %v3423
        %3488 = vst [vmem:[%s274 + $0x1e0] sm:$0xff] %v3424
        %3489 = vst [vmem:[%s274 + $0x1e8] sm:$0xff] %v3425
        %3490 = vst [vmem:[%s274 + $0x1f0] sm:$0xff] %v3426
        %3491 = vst [vmem:[%s274 + $0x1f8] sm:$0xff] %v3427
        %v3492 = vld [vmem:[%s3012 + $0x1] sm:$0xff]
        %v3493 = vld [vmem:[%s3012 + $0x9] sm:$0xff]
        %v3494 = vld [vmem:[%s3012 + $0x19] sm:$0xff]
        %v3495 = vld [vmem:[%s3012 + $0x21] sm:$0xff]
        %v3496 = vld [vmem:[%s3012 + $0x31] sm:$0xff]
        %v3497 = vld [vmem:[%s3012 + $0x39] sm:$0xff]
        %v3498 = vld [vmem:[%s3012 + $0x49] sm:$0xff]
        %v3499 = vld [vmem:[%s3012 + $0x51] sm:$0xff]
        %v3500 = vld [vmem:[%s3012 + $0x61] sm:$0xff]
        %v3501 = vld [vmem:[%s3012 + $0x69] sm:$0xff]
        %v3502 = vld [vmem:[%s3012 + $0x79] sm:$0xff]
        %v3503 = vld [vmem:[%s3012 + $0x81] sm:$0xff]
        %v3504 = vld [vmem:[%s3012 + $0x91] sm:$0xff]
        %v3505 = vld [vmem:[%s3012 + $0x99] sm:$0xff]
        %v3506 = vld [vmem:[%s3012 + $0xa9] sm:$0xff]
        %v3507 = vld [vmem:[%s3012 + $0xb1] sm:$0xff]
        %v3508 = vld [vmem:[%s3012 + $0xc1] sm:$0xff]
        %v3509 = vld [vmem:[%s3012 + $0xc9] sm:$0xff]
        %v3510 = vld [vmem:[%s3012 + $0xd9] sm:$0xff]
        %v3511 = vld [vmem:[%s3012 + $0xe1] sm:$0xff]
        %v3512 = vld [vmem:[%s3012 + $0xf1] sm:$0xff]
        %v3513 = vld [vmem:[%s3012 + $0xf9] sm:$0xff]
        %v3514 = vld [vmem:[%s3012 + $0x109] sm:$0xff]
        %v3515 = vld [vmem:[%s3012 + $0x111] sm:$0xff]
        %v3516 = vld [vmem:[%s3012 + $0x121] sm:$0xff]
        %v3517 = vld [vmem:[%s3012 + $0x129] sm:$0xff]
        %v3518 = vld [vmem:[%s3012 + $0x139] sm:$0xff]
        %v3519 = vld [vmem:[%s3012 + $0x141] sm:$0xff]
        %v3520 = vld [vmem:[%s3012 + $0x151] sm:$0xff]
        %v3521 = vld [vmem:[%s3012 + $0x159] sm:$0xff]
        %v3522 = vld [vmem:[%s3012 + $0x169] sm:$0xff]
        %v3523 = vld [vmem:[%s3012 + $0x171] sm:$0xff]
        %v3524 = vpack.c.bf16 %v3493, %v3492
        %v3525 = vpack.c.bf16 %v3495, %v3494
        %v3526 = vpack.c.bf16 %v3497, %v3496
        %v3527 = vpack.c.bf16 %v3499, %v3498
        %v3528 = vpack.c.bf16 %v3501, %v3500
        %v3529 = vpack.c.bf16 %v3503, %v3502
        %v3530 = vpack.c.bf16 %v3505, %v3504
        %v3531 = vpack.c.bf16 %v3507, %v3506
        %v3532 = vpack.c.bf16 %v3509, %v3508
        %v3533 = vpack.c.bf16 %v3511, %v3510
        %v3534 = vpack.c.bf16 %v3513, %v3512
        %v3535 = vpack.c.bf16 %v3515, %v3514
        %v3536 = vpack.c.bf16 %v3517, %v3516
        %v3537 = vpack.c.bf16 %v3519, %v3518
        %v3538 = vpack.c.bf16 %v3521, %v3520
        %v3539 = vpack.c.bf16 %v3523, %v3522
        %v3540 = vld [vmem:[%s274] sm:$0xff]
        %v3541 = vld [vmem:[%s274 + $0x8] sm:$0xff]
        %v3542 = vld [vmem:[%s274 + $0x10] sm:$0xff]
        %v3543 = vld [vmem:[%s274 + $0x18] sm:$0xff]
        %v3544 = vld [vmem:[%s274 + $0x20] sm:$0xff]
        %v3545 = vld [vmem:[%s274 + $0x28] sm:$0xff]
        %v3546 = vld [vmem:[%s274 + $0x30] sm:$0xff]
        %v3547 = vld [vmem:[%s274 + $0x38] sm:$0xff]
        %v3548 = vld [vmem:[%s274 + $0x40] sm:$0xff]
        %v3549 = vld [vmem:[%s274 + $0x48] sm:$0xff]
        %v3550 = vld [vmem:[%s274 + $0x50] sm:$0xff]
        %v3551 = vld [vmem:[%s274 + $0x58] sm:$0xff]
        %v3552 = vld [vmem:[%s274 + $0x60] sm:$0xff]
        %v3553 = vld [vmem:[%s274 + $0x68] sm:$0xff]
        %v3554 = vld [vmem:[%s274 + $0x70] sm:$0xff]
        %v3555 = vld [vmem:[%s274 + $0x78] sm:$0xff]
        %v3556 = vld [vmem:[%s274 + $0x80] sm:$0xff]
        %v3557 = vld [vmem:[%s274 + $0x88] sm:$0xff]
        %v3558 = vld [vmem:[%s274 + $0x90] sm:$0xff]
        %v3559 = vld [vmem:[%s274 + $0x98] sm:$0xff]
        %v3560 = vld [vmem:[%s274 + $0xa0] sm:$0xff]
        %v3561 = vld [vmem:[%s274 + $0xa8] sm:$0xff]
        %v3562 = vld [vmem:[%s274 + $0xb0] sm:$0xff]
        %v3563 = vld [vmem:[%s274 + $0xb8] sm:$0xff]
        %v3564 = vld [vmem:[%s274 + $0xc0] sm:$0xff]
        %v3565 = vld [vmem:[%s274 + $0xc8] sm:$0xff]
        %v3566 = vld [vmem:[%s274 + $0xd0] sm:$0xff]
        %v3567 = vld [vmem:[%s274 + $0xd8] sm:$0xff]
        %v3568 = vld [vmem:[%s274 + $0xe0] sm:$0xff]
        %v3569 = vld [vmem:[%s274 + $0xe8] sm:$0xff]
        %v3570 = vld [vmem:[%s274 + $0xf0] sm:$0xff]
        %v3571 = vld [vmem:[%s274 + $0xf8] sm:$0xff]
        %v3572 = vld [vmem:[%s274 + $0x100] sm:$0xff]
        %v3573 = vld [vmem:[%s274 + $0x108] sm:$0xff]
        %v3574 = vld [vmem:[%s274 + $0x110] sm:$0xff]
        %v3575 = vld [vmem:[%s274 + $0x118] sm:$0xff]
        %v3576 = vld [vmem:[%s274 + $0x120] sm:$0xff]
        %v3577 = vld [vmem:[%s274 + $0x128] sm:$0xff]
        %v3578 = vld [vmem:[%s274 + $0x130] sm:$0xff]
        %v3579 = vld [vmem:[%s274 + $0x138] sm:$0xff]
        %v3580 = vld [vmem:[%s274 + $0x140] sm:$0xff]
        %v3581 = vld [vmem:[%s274 + $0x148] sm:$0xff]
        %v3582 = vld [vmem:[%s274 + $0x150] sm:$0xff]
        %v3583 = vld [vmem:[%s274 + $0x158] sm:$0xff]
        %v3584 = vld [vmem:[%s274 + $0x160] sm:$0xff]
        %v3585 = vld [vmem:[%s274 + $0x168] sm:$0xff]
        %v3586 = vld [vmem:[%s274 + $0x170] sm:$0xff]
        %v3587 = vld [vmem:[%s274 + $0x178] sm:$0xff]
        %v3588 = vld [vmem:[%s274 + $0x180] sm:$0xff]
        %v3589 = vld [vmem:[%s274 + $0x188] sm:$0xff]
        %v3590 = vld [vmem:[%s274 + $0x190] sm:$0xff]
        %v3591 = vld [vmem:[%s274 + $0x198] sm:$0xff]
        %v3592 = vld [vmem:[%s274 + $0x1a0] sm:$0xff]
        %v3593 = vld [vmem:[%s274 + $0x1a8] sm:$0xff]
        %v3594 = vld [vmem:[%s274 + $0x1b0] sm:$0xff]
        %v3595 = vld [vmem:[%s274 + $0x1b8] sm:$0xff]
        %v3596 = vld [vmem:[%s274 + $0x1c0] sm:$0xff]
        %v3597 = vld [vmem:[%s274 + $0x1c8] sm:$0xff]
        %v3598 = vld [vmem:[%s274 + $0x1d0] sm:$0xff]
        %v3599 = vld [vmem:[%s274 + $0x1d8] sm:$0xff]
        %v3600 = vld [vmem:[%s274 + $0x1e0] sm:$0xff]
        %v3601 = vld [vmem:[%s274 + $0x1e8] sm:$0xff]
        %v3602 = vld [vmem:[%s274 + $0x1f0] sm:$0xff]
        %v3603 = vld [vmem:[%s274 + $0x1f8] sm:$0xff]
        %s3604 = scalar_lea.vmem [#allocation3], 64
        %v3605 = vld [vmem:[%s3604] sm:$0xff]
        %v3606 = vld [vmem:[%s3604 + $0x8] sm:$0xff]
        %v3609 = vunpack.c.l.b16 %v3605
        %v3610 = vunpack.c.h.b16 %v3605
        %v3611 = vunpack.c.l.b16 %v3606
        %v3612 = vunpack.c.h.b16 %v3606
        %v3613 = vpack.c.b16 %v3611, %v3609
        %v3614 = vpack.c.b16 %v3612, %v3610
        %v3618 = vsel %vm487, %v3524, 0
        %v3621 = vsel %vm487, %v3525, 0
        %v3624 = vsel %vm487, %v3526, 0
        %v3627 = vsel %vm487, %v3527, 0
        %v3630 = vsel %vm487, %v3528, 0
        %v3633 = vsel %vm487, %v3529, 0
        %v3636 = vsel %vm487, %v3530, 0
        %v3639 = vsel %vm487, %v3531, 0
        %v3642 = vsel %vm487, %v3532, 0
        %v3645 = vsel %vm487, %v3533, 0
        %v3648 = vsel %vm487, %v3534, 0
        %v3651 = vsel %vm487, %v3535, 0
        %v3654 = vsel %vm487, %v3536, 0
        %v3657 = vsel %vm487, %v3537, 0
        %v3660 = vsel %vm487, %v3538, 0
        %v3663 = vsel %vm487, %v3539, 0
        %3665 = vmatpush.bf16.msra.mxu0 0
        %3666 = vmatpush.bf16.msra.mxu0 0
        %3667 = vmatpush.bf16.msra.mxu0 0
        %3668 = vmatpush.bf16.msra.mxu0 0
        %3669 = vmatpush.bf16.msra.mxu0 0
        %3670 = vmatpush.bf16.msra.mxu0 0
        %3671 = vmatpush.bf16.msra.mxu0 0
        %3672 = vmatpush.bf16.msra.mxu0 %v3613
        %3673 = vmatmul.bf16.gmra.mxu0 %v3618
        %v3674 = vpop.f32.mrf.mxu0
        %v3675 = vadd.f32 0.0, %v3674
        %v3676 = vpop.f32.mrf.mxu0
        %v3677 = vadd.f32 0.0, %v3676
        %3678 = vmatmul.bf16.gmra.mxu0 %v3621
        %v3679 = vpop.f32.mrf.mxu0
        %v3680 = vadd.f32 0.0, %v3679
        %v3681 = vpop.f32.mrf.mxu0
        %v3682 = vadd.f32 0.0, %v3681
        %3683 = vmatmul.bf16.gmra.mxu0 %v3624
        %v3684 = vpop.f32.mrf.mxu0
        %v3685 = vadd.f32 0.0, %v3684
        %v3686 = vpop.f32.mrf.mxu0
        %v3687 = vadd.f32 0.0, %v3686
        %3688 = vmatmul.bf16.gmra.mxu0 %v3627
        %v3689 = vpop.f32.mrf.mxu0
        %v3690 = vadd.f32 0.0, %v3689
        %v3691 = vpop.f32.mrf.mxu0
        %v3692 = vadd.f32 0.0, %v3691
        %3693 = vmatmul.bf16.gmra.mxu0 %v3630
        %v3694 = vpop.f32.mrf.mxu0
        %v3695 = vadd.f32 0.0, %v3694
        %v3696 = vpop.f32.mrf.mxu0
        %v3697 = vadd.f32 0.0, %v3696
        %3698 = vmatmul.bf16.gmra.mxu0 %v3633
        %v3699 = vpop.f32.mrf.mxu0
        %v3700 = vadd.f32 0.0, %v3699
        %v3701 = vpop.f32.mrf.mxu0
        %v3702 = vadd.f32 0.0, %v3701
        %3703 = vmatmul.bf16.gmra.mxu0 %v3636
        %v3704 = vpop.f32.mrf.mxu0
        %v3705 = vadd.f32 0.0, %v3704
        %v3706 = vpop.f32.mrf.mxu0
        %v3707 = vadd.f32 0.0, %v3706
        %3708 = vmatmul.bf16.gmra.mxu0 %v3639
        %v3709 = vpop.f32.mrf.mxu0
        %v3710 = vadd.f32 0.0, %v3709
        %v3711 = vpop.f32.mrf.mxu0
        %v3712 = vadd.f32 0.0, %v3711
        %3713 = vmatmul.bf16.gmra.mxu0 %v3642
        %v3714 = vpop.f32.mrf.mxu0
        %v3715 = vadd.f32 0.0, %v3714
        %v3716 = vpop.f32.mrf.mxu0
        %v3717 = vadd.f32 0.0, %v3716
        %3718 = vmatmul.bf16.gmra.mxu0 %v3645
        %v3719 = vpop.f32.mrf.mxu0
        %v3720 = vadd.f32 0.0, %v3719
        %v3721 = vpop.f32.mrf.mxu0
        %v3722 = vadd.f32 0.0, %v3721
        %3723 = vmatmul.bf16.gmra.mxu0 %v3648
        %v3724 = vpop.f32.mrf.mxu0
        %v3725 = vadd.f32 0.0, %v3724
        %v3726 = vpop.f32.mrf.mxu0
        %v3727 = vadd.f32 0.0, %v3726
        %3728 = vmatmul.bf16.gmra.mxu0 %v3651
        %v3729 = vpop.f32.mrf.mxu0
        %v3730 = vadd.f32 0.0, %v3729
        %v3731 = vpop.f32.mrf.mxu0
        %v3732 = vadd.f32 0.0, %v3731
        %3733 = vmatmul.bf16.gmra.mxu0 %v3654
        %v3734 = vpop.f32.mrf.mxu0
        %v3735 = vadd.f32 0.0, %v3734
        %v3736 = vpop.f32.mrf.mxu0
        %v3737 = vadd.f32 0.0, %v3736
        %3738 = vmatmul.bf16.gmra.mxu0 %v3657
        %v3739 = vpop.f32.mrf.mxu0
        %v3740 = vadd.f32 0.0, %v3739
        %v3741 = vpop.f32.mrf.mxu0
        %v3742 = vadd.f32 0.0, %v3741
        %3743 = vmatmul.bf16.gmra.mxu0 %v3660
        %v3744 = vpop.f32.mrf.mxu0
        %v3745 = vadd.f32 0.0, %v3744
        %v3746 = vpop.f32.mrf.mxu0
        %v3747 = vadd.f32 0.0, %v3746
        %3748 = vmatmul.bf16.gmra.mxu0 %v3663
        %v3749 = vpop.f32.mrf.mxu0
        %v3750 = vadd.f32 0.0, %v3749
        %v3751 = vpop.f32.mrf.mxu0
        %v3752 = vadd.f32 0.0, %v3751
        %3753 = vdwg.mxu0
        %3754 = vmatpush.bf16.msra.mxu0 0
        %3755 = vmatpush.bf16.msra.mxu0 0
        %3756 = vmatpush.bf16.msra.mxu0 0
        %3757 = vmatpush.bf16.msra.mxu0 0
        %3758 = vmatpush.bf16.msra.mxu0 0
        %3759 = vmatpush.bf16.msra.mxu0 0
        %3760 = vmatpush.bf16.msra.mxu0 0
        %3761 = vmatpush.bf16.msra.mxu0 %v3614
        %3762 = vmatmul.bf16.gmra.mxu0 %v3618
        %v3763 = vpop.f32.mrf.mxu0
        %v3764 = vadd.f32 0.0, %v3763
        %v3765 = vpop.f32.mrf.mxu0
        %v3766 = vadd.f32 0.0, %v3765
        %3767 = vmatmul.bf16.gmra.mxu0 %v3621
        %v3768 = vpop.f32.mrf.mxu0
        %v3769 = vadd.f32 0.0, %v3768
        %v3770 = vpop.f32.mrf.mxu0
        %v3771 = vadd.f32 0.0, %v3770
        %3772 = vmatmul.bf16.gmra.mxu0 %v3624
        %v3773 = vpop.f32.mrf.mxu0
        %v3774 = vadd.f32 0.0, %v3773
        %v3775 = vpop.f32.mrf.mxu0
        %v3776 = vadd.f32 0.0, %v3775
        %3777 = vmatmul.bf16.gmra.mxu0 %v3627
        %v3778 = vpop.f32.mrf.mxu0
        %v3779 = vadd.f32 0.0, %v3778
        %v3780 = vpop.f32.mrf.mxu0
        %v3781 = vadd.f32 0.0, %v3780
        %3782 = vmatmul.bf16.gmra.mxu0 %v3630
        %v3783 = vpop.f32.mrf.mxu0
        %v3784 = vadd.f32 0.0, %v3783
        %v3785 = vpop.f32.mrf.mxu0
        %v3786 = vadd.f32 0.0, %v3785
        %3787 = vmatmul.bf16.gmra.mxu0 %v3633
        %v3788 = vpop.f32.mrf.mxu0
        %v3789 = vadd.f32 0.0, %v3788
        %v3790 = vpop.f32.mrf.mxu0
        %v3791 = vadd.f32 0.0, %v3790
        %3792 = vmatmul.bf16.gmra.mxu0 %v3636
        %v3793 = vpop.f32.mrf.mxu0
        %v3794 = vadd.f32 0.0, %v3793
        %v3795 = vpop.f32.mrf.mxu0
        %v3796 = vadd.f32 0.0, %v3795
        %3797 = vmatmul.bf16.gmra.mxu0 %v3639
        %v3798 = vpop.f32.mrf.mxu0
        %v3799 = vadd.f32 0.0, %v3798
        %v3800 = vpop.f32.mrf.mxu0
        %v3801 = vadd.f32 0.0, %v3800
        %3802 = vmatmul.bf16.gmra.mxu0 %v3642
        %v3803 = vpop.f32.mrf.mxu0
        %v3804 = vadd.f32 0.0, %v3803
        %v3805 = vpop.f32.mrf.mxu0
        %v3806 = vadd.f32 0.0, %v3805
        %3807 = vmatmul.bf16.gmra.mxu0 %v3645
        %v3808 = vpop.f32.mrf.mxu0
        %v3809 = vadd.f32 0.0, %v3808
        %v3810 = vpop.f32.mrf.mxu0
        %v3811 = vadd.f32 0.0, %v3810
        %3812 = vmatmul.bf16.gmra.mxu0 %v3648
        %v3813 = vpop.f32.mrf.mxu0
        %v3814 = vadd.f32 0.0, %v3813
        %v3815 = vpop.f32.mrf.mxu0
        %v3816 = vadd.f32 0.0, %v3815
        %3817 = vmatmul.bf16.gmra.mxu0 %v3651
        %v3818 = vpop.f32.mrf.mxu0
        %v3819 = vadd.f32 0.0, %v3818
        %v3820 = vpop.f32.mrf.mxu0
        %v3821 = vadd.f32 0.0, %v3820
        %3822 = vmatmul.bf16.gmra.mxu0 %v3654
        %v3823 = vpop.f32.mrf.mxu0
        %v3824 = vadd.f32 0.0, %v3823
        %v3825 = vpop.f32.mrf.mxu0
        %v3826 = vadd.f32 0.0, %v3825
        %3827 = vmatmul.bf16.gmra.mxu0 %v3657
        %v3828 = vpop.f32.mrf.mxu0
        %v3829 = vadd.f32 0.0, %v3828
        %v3830 = vpop.f32.mrf.mxu0
        %v3831 = vadd.f32 0.0, %v3830
        %3832 = vmatmul.bf16.gmra.mxu0 %v3660
        %v3833 = vpop.f32.mrf.mxu0
        %v3834 = vadd.f32 0.0, %v3833
        %v3835 = vpop.f32.mrf.mxu0
        %v3836 = vadd.f32 0.0, %v3835
        %3837 = vmatmul.bf16.gmra.mxu0 %v3663
        %v3838 = vpop.f32.mrf.mxu0
        %v3839 = vadd.f32 0.0, %v3838
        %v3840 = vpop.f32.mrf.mxu0
        %v3841 = vadd.f32 0.0, %v3840
        %3842 = vdwg.mxu0
        %v3843 = vadd.f32 %v3540, %v3675
        %v3844 = vadd.f32 %v3541, %v3764
        %v3845 = vadd.f32 %v3542, %v3677
        %v3846 = vadd.f32 %v3543, %v3766
        %v3847 = vadd.f32 %v3544, %v3680
        %v3848 = vadd.f32 %v3545, %v3769
        %v3849 = vadd.f32 %v3546, %v3682
        %v3850 = vadd.f32 %v3547, %v3771
        %v3851 = vadd.f32 %v3548, %v3685
        %v3852 = vadd.f32 %v3549, %v3774
        %v3853 = vadd.f32 %v3550, %v3687
        %v3854 = vadd.f32 %v3551, %v3776
        %v3855 = vadd.f32 %v3552, %v3690
        %v3856 = vadd.f32 %v3553, %v3779
        %v3857 = vadd.f32 %v3554, %v3692
        %v3858 = vadd.f32 %v3555, %v3781
        %v3859 = vadd.f32 %v3556, %v3695
        %v3860 = vadd.f32 %v3557, %v3784
        %v3861 = vadd.f32 %v3558, %v3697
        %v3862 = vadd.f32 %v3559, %v3786
        %v3863 = vadd.f32 %v3560, %v3700
        %v3864 = vadd.f32 %v3561, %v3789
        %v3865 = vadd.f32 %v3562, %v3702
        %v3866 = vadd.f32 %v3563, %v3791
        %v3867 = vadd.f32 %v3564, %v3705
        %v3868 = vadd.f32 %v3565, %v3794
        %v3869 = vadd.f32 %v3566, %v3707
        %v3870 = vadd.f32 %v3567, %v3796
        %v3871 = vadd.f32 %v3568, %v3710
        %v3872 = vadd.f32 %v3569, %v3799
        %v3873 = vadd.f32 %v3570, %v3712
        %v3874 = vadd.f32 %v3571, %v3801
        %v3875 = vadd.f32 %v3572, %v3715
        %v3876 = vadd.f32 %v3573, %v3804
        %v3877 = vadd.f32 %v3574, %v3717
        %v3878 = vadd.f32 %v3575, %v3806
        %v3879 = vadd.f32 %v3576, %v3720
        %v3880 = vadd.f32 %v3577, %v3809
        %v3881 = vadd.f32 %v3578, %v3722
        %v3882 = vadd.f32 %v3579, %v3811
        %v3883 = vadd.f32 %v3580, %v3725
        %v3884 = vadd.f32 %v3581, %v3814
        %v3885 = vadd.f32 %v3582, %v3727
        %v3886 = vadd.f32 %v3583, %v3816
        %v3887 = vadd.f32 %v3584, %v3730
        %v3888 = vadd.f32 %v3585, %v3819
        %v3889 = vadd.f32 %v3586, %v3732
        %v3890 = vadd.f32 %v3587, %v3821
        %v3891 = vadd.f32 %v3588, %v3735
        %v3892 = vadd.f32 %v3589, %v3824
        %v3893 = vadd.f32 %v3590, %v3737
        %v3894 = vadd.f32 %v3591, %v3826
        %v3895 = vadd.f32 %v3592, %v3740
        %v3896 = vadd.f32 %v3593, %v3829
        %v3897 = vadd.f32 %v3594, %v3742
        %v3898 = vadd.f32 %v3595, %v3831
        %v3899 = vadd.f32 %v3596, %v3745
        %v3900 = vadd.f32 %v3597, %v3834
        %v3901 = vadd.f32 %v3598, %v3747
        %v3902 = vadd.f32 %v3599, %v3836
        %v3903 = vadd.f32 %v3600, %v3750
        %v3904 = vadd.f32 %v3601, %v3839
        %v3905 = vadd.f32 %v3602, %v3752
        %v3906 = vadd.f32 %v3603, %v3841
        %3907 = vst [vmem:[%s274] sm:$0xff] %v3843
        %3908 = vst [vmem:[%s274 + $0x8] sm:$0xff] %v3844
        %3909 = vst [vmem:[%s274 + $0x10] sm:$0xff] %v3845
        %3910 = vst [vmem:[%s274 + $0x18] sm:$0xff] %v3846
        %3911 = vst [vmem:[%s274 + $0x20] sm:$0xff] %v3847
        %3912 = vst [vmem:[%s274 + $0x28] sm:$0xff] %v3848
        %3913 = vst [vmem:[%s274 + $0x30] sm:$0xff] %v3849
        %3914 = vst [vmem:[%s274 + $0x38] sm:$0xff] %v3850
        %3915 = vst [vmem:[%s274 + $0x40] sm:$0xff] %v3851
        %3916 = vst [vmem:[%s274 + $0x48] sm:$0xff] %v3852
        %3917 = vst [vmem:[%s274 + $0x50] sm:$0xff] %v3853
        %3918 = vst [vmem:[%s274 + $0x58] sm:$0xff] %v3854
        %3919 = vst [vmem:[%s274 + $0x60] sm:$0xff] %v3855
        %3920 = vst [vmem:[%s274 + $0x68] sm:$0xff] %v3856
        %3921 = vst [vmem:[%s274 + $0x70] sm:$0xff] %v3857
        %3922 = vst [vmem:[%s274 + $0x78] sm:$0xff] %v3858
        %3923 = vst [vmem:[%s274 + $0x80] sm:$0xff] %v3859
        %3924 = vst [vmem:[%s274 + $0x88] sm:$0xff] %v3860
        %3925 = vst [vmem:[%s274 + $0x90] sm:$0xff] %v3861
        %3926 = vst [vmem:[%s274 + $0x98] sm:$0xff] %v3862
        %3927 = vst [vmem:[%s274 + $0xa0] sm:$0xff] %v3863
        %3928 = vst [vmem:[%s274 + $0xa8] sm:$0xff] %v3864
        %3929 = vst [vmem:[%s274 + $0xb0] sm:$0xff] %v3865
        %3930 = vst [vmem:[%s274 + $0xb8] sm:$0xff] %v3866
        %3931 = vst [vmem:[%s274 + $0xc0] sm:$0xff] %v3867
        %3932 = vst [vmem:[%s274 + $0xc8] sm:$0xff] %v3868
        %3933 = vst [vmem:[%s274 + $0xd0] sm:$0xff] %v3869
        %3934 = vst [vmem:[%s274 + $0xd8] sm:$0xff] %v3870
        %3935 = vst [vmem:[%s274 + $0xe0] sm:$0xff] %v3871
        %3936 = vst [vmem:[%s274 + $0xe8] sm:$0xff] %v3872
        %3937 = vst [vmem:[%s274 + $0xf0] sm:$0xff] %v3873
        %3938 = vst [vmem:[%s274 + $0xf8] sm:$0xff] %v3874
        %3939 = vst [vmem:[%s274 + $0x100] sm:$0xff] %v3875
        %3940 = vst [vmem:[%s274 + $0x108] sm:$0xff] %v3876
        %3941 = vst [vmem:[%s274 + $0x110] sm:$0xff] %v3877
        %3942 = vst [vmem:[%s274 + $0x118] sm:$0xff] %v3878
        %3943 = vst [vmem:[%s274 + $0x120] sm:$0xff] %v3879
        %3944 = vst [vmem:[%s274 + $0x128] sm:$0xff] %v3880
        %3945 = vst [vmem:[%s274 + $0x130] sm:$0xff] %v3881
        %3946 = vst [vmem:[%s274 + $0x138] sm:$0xff] %v3882
        %3947 = vst [vmem:[%s274 + $0x140] sm:$0xff] %v3883
        %3948 = vst [vmem:[%s274 + $0x148] sm:$0xff] %v3884
        %3949 = vst [vmem:[%s274 + $0x150] sm:$0xff] %v3885
        %3950 = vst [vmem:[%s274 + $0x158] sm:$0xff] %v3886
        %3951 = vst [vmem:[%s274 + $0x160] sm:$0xff] %v3887
        %3952 = vst [vmem:[%s274 + $0x168] sm:$0xff] %v3888
        %3953 = vst [vmem:[%s274 + $0x170] sm:$0xff] %v3889
        %3954 = vst [vmem:[%s274 + $0x178] sm:$0xff] %v3890
        %3955 = vst [vmem:[%s274 + $0x180] sm:$0xff] %v3891
        %3956 = vst [vmem:[%s274 + $0x188] sm:$0xff] %v3892
        %3957 = vst [vmem:[%s274 + $0x190] sm:$0xff] %v3893
        %3958 = vst [vmem:[%s274 + $0x198] sm:$0xff] %v3894
        %3959 = vst [vmem:[%s274 + $0x1a0] sm:$0xff] %v3895
        %3960 = vst [vmem:[%s274 + $0x1a8] sm:$0xff] %v3896
        %3961 = vst [vmem:[%s274 + $0x1b0] sm:$0xff] %v3897
        %3962 = vst [vmem:[%s274 + $0x1b8] sm:$0xff] %v3898
        %3963 = vst [vmem:[%s274 + $0x1c0] sm:$0xff] %v3899
        %3964 = vst [vmem:[%s274 + $0x1c8] sm:$0xff] %v3900
        %3965 = vst [vmem:[%s274 + $0x1d0] sm:$0xff] %v3901
        %3966 = vst [vmem:[%s274 + $0x1d8] sm:$0xff] %v3902
        %3967 = vst [vmem:[%s274 + $0x1e0] sm:$0xff] %v3903
        %3968 = vst [vmem:[%s274 + $0x1e8] sm:$0xff] %v3904
        %3969 = vst [vmem:[%s274 + $0x1f0] sm:$0xff] %v3905
        %3970 = vst [vmem:[%s274 + $0x1f8] sm:$0xff] %v3906
        %v3971 = vld [vmem:[%s3012 + $0x2] sm:$0xff]
        %v3972 = vld [vmem:[%s3012 + $0xa] sm:$0xff]
        %v3973 = vld [vmem:[%s3012 + $0x1a] sm:$0xff]
        %v3974 = vld [vmem:[%s3012 + $0x22] sm:$0xff]
        %v3975 = vld [vmem:[%s3012 + $0x32] sm:$0xff]
        %v3976 = vld [vmem:[%s3012 + $0x3a] sm:$0xff]
        %v3977 = vld [vmem:[%s3012 + $0x4a] sm:$0xff]
        %v3978 = vld [vmem:[%s3012 + $0x52] sm:$0xff]
        %v3979 = vld [vmem:[%s3012 + $0x62] sm:$0xff]
        %v3980 = vld [vmem:[%s3012 + $0x6a] sm:$0xff]
        %v3981 = vld [vmem:[%s3012 + $0x7a] sm:$0xff]
        %v3982 = vld [vmem:[%s3012 + $0x82] sm:$0xff]
        %v3983 = vld [vmem:[%s3012 + $0x92] sm:$0xff]
        %v3984 = vld [vmem:[%s3012 + $0x9a] sm:$0xff]
        %v3985 = vld [vmem:[%s3012 + $0xaa] sm:$0xff]
        %v3986 = vld [vmem:[%s3012 + $0xb2] sm:$0xff]
        %v3987 = vld [vmem:[%s3012 + $0xc2] sm:$0xff]
        %v3988 = vld [vmem:[%s3012 + $0xca] sm:$0xff]
        %v3989 = vld [vmem:[%s3012 + $0xda] sm:$0xff]
        %v3990 = vld [vmem:[%s3012 + $0xe2] sm:$0xff]
        %v3991 = vld [vmem:[%s3012 + $0xf2] sm:$0xff]
        %v3992 = vld [vmem:[%s3012 + $0xfa] sm:$0xff]
        %v3993 = vld [vmem:[%s3012 + $0x10a] sm:$0xff]
        %v3994 = vld [vmem:[%s3012 + $0x112] sm:$0xff]
        %v3995 = vld [vmem:[%s3012 + $0x122] sm:$0xff]
        %v3996 = vld [vmem:[%s3012 + $0x12a] sm:$0xff]
        %v3997 = vld [vmem:[%s3012 + $0x13a] sm:$0xff]
        %v3998 = vld [vmem:[%s3012 + $0x142] sm:$0xff]
        %v3999 = vld [vmem:[%s3012 + $0x152] sm:$0xff]
        %v4000 = vld [vmem:[%s3012 + $0x15a] sm:$0xff]
        %v4001 = vld [vmem:[%s3012 + $0x16a] sm:$0xff]
        %v4002 = vld [vmem:[%s3012 + $0x172] sm:$0xff]
        %v4003 = vpack.c.bf16 %v3972, %v3971
        %v4004 = vpack.c.bf16 %v3974, %v3973
        %v4005 = vpack.c.bf16 %v3976, %v3975
        %v4006 = vpack.c.bf16 %v3978, %v3977
        %v4007 = vpack.c.bf16 %v3980, %v3979
        %v4008 = vpack.c.bf16 %v3982, %v3981
        %v4009 = vpack.c.bf16 %v3984, %v3983
        %v4010 = vpack.c.bf16 %v3986, %v3985
        %v4011 = vpack.c.bf16 %v3988, %v3987
        %v4012 = vpack.c.bf16 %v3990, %v3989
        %v4013 = vpack.c.bf16 %v3992, %v3991
        %v4014 = vpack.c.bf16 %v3994, %v3993
        %v4015 = vpack.c.bf16 %v3996, %v3995
        %v4016 = vpack.c.bf16 %v3998, %v3997
        %v4017 = vpack.c.bf16 %v4000, %v3999
        %v4018 = vpack.c.bf16 %v4002, %v4001
        %v4019 = vld [vmem:[%s274] sm:$0xff]
        %v4020 = vld [vmem:[%s274 + $0x8] sm:$0xff]
        %v4021 = vld [vmem:[%s274 + $0x10] sm:$0xff]
        %v4022 = vld [vmem:[%s274 + $0x18] sm:$0xff]
        %v4023 = vld [vmem:[%s274 + $0x20] sm:$0xff]
        %v4024 = vld [vmem:[%s274 + $0x28] sm:$0xff]
        %v4025 = vld [vmem:[%s274 + $0x30] sm:$0xff]
        %v4026 = vld [vmem:[%s274 + $0x38] sm:$0xff]
        %v4027 = vld [vmem:[%s274 + $0x40] sm:$0xff]
        %v4028 = vld [vmem:[%s274 + $0x48] sm:$0xff]
        %v4029 = vld [vmem:[%s274 + $0x50] sm:$0xff]
        %v4030 = vld [vmem:[%s274 + $0x58] sm:$0xff]
        %v4031 = vld [vmem:[%s274 + $0x60] sm:$0xff]
        %v4032 = vld [vmem:[%s274 + $0x68] sm:$0xff]
        %v4033 = vld [vmem:[%s274 + $0x70] sm:$0xff]
        %v4034 = vld [vmem:[%s274 + $0x78] sm:$0xff]
        %v4035 = vld [vmem:[%s274 + $0x80] sm:$0xff]
        %v4036 = vld [vmem:[%s274 + $0x88] sm:$0xff]
        %v4037 = vld [vmem:[%s274 + $0x90] sm:$0xff]
        %v4038 = vld [vmem:[%s274 + $0x98] sm:$0xff]
        %v4039 = vld [vmem:[%s274 + $0xa0] sm:$0xff]
        %v4040 = vld [vmem:[%s274 + $0xa8] sm:$0xff]
        %v4041 = vld [vmem:[%s274 + $0xb0] sm:$0xff]
        %v4042 = vld [vmem:[%s274 + $0xb8] sm:$0xff]
        %v4043 = vld [vmem:[%s274 + $0xc0] sm:$0xff]
        %v4044 = vld [vmem:[%s274 + $0xc8] sm:$0xff]
        %v4045 = vld [vmem:[%s274 + $0xd0] sm:$0xff]
        %v4046 = vld [vmem:[%s274 + $0xd8] sm:$0xff]
        %v4047 = vld [vmem:[%s274 + $0xe0] sm:$0xff]
        %v4048 = vld [vmem:[%s274 + $0xe8] sm:$0xff]
        %v4049 = vld [vmem:[%s274 + $0xf0] sm:$0xff]
        %v4050 = vld [vmem:[%s274 + $0xf8] sm:$0xff]
        %v4051 = vld [vmem:[%s274 + $0x100] sm:$0xff]
        %v4052 = vld [vmem:[%s274 + $0x108] sm:$0xff]
        %v4053 = vld [vmem:[%s274 + $0x110] sm:$0xff]
        %v4054 = vld [vmem:[%s274 + $0x118] sm:$0xff]
        %v4055 = vld [vmem:[%s274 + $0x120] sm:$0xff]
        %v4056 = vld [vmem:[%s274 + $0x128] sm:$0xff]
        %v4057 = vld [vmem:[%s274 + $0x130] sm:$0xff]
        %v4058 = vld [vmem:[%s274 + $0x138] sm:$0xff]
        %v4059 = vld [vmem:[%s274 + $0x140] sm:$0xff]
        %v4060 = vld [vmem:[%s274 + $0x148] sm:$0xff]
        %v4061 = vld [vmem:[%s274 + $0x150] sm:$0xff]
        %v4062 = vld [vmem:[%s274 + $0x158] sm:$0xff]
        %v4063 = vld [vmem:[%s274 + $0x160] sm:$0xff]
        %v4064 = vld [vmem:[%s274 + $0x168] sm:$0xff]
        %v4065 = vld [vmem:[%s274 + $0x170] sm:$0xff]
        %v4066 = vld [vmem:[%s274 + $0x178] sm:$0xff]
        %v4067 = vld [vmem:[%s274 + $0x180] sm:$0xff]
        %v4068 = vld [vmem:[%s274 + $0x188] sm:$0xff]
        %v4069 = vld [vmem:[%s274 + $0x190] sm:$0xff]
        %v4070 = vld [vmem:[%s274 + $0x198] sm:$0xff]
        %v4071 = vld [vmem:[%s274 + $0x1a0] sm:$0xff]
        %v4072 = vld [vmem:[%s274 + $0x1a8] sm:$0xff]
        %v4073 = vld [vmem:[%s274 + $0x1b0] sm:$0xff]
        %v4074 = vld [vmem:[%s274 + $0x1b8] sm:$0xff]
        %v4075 = vld [vmem:[%s274 + $0x1c0] sm:$0xff]
        %v4076 = vld [vmem:[%s274 + $0x1c8] sm:$0xff]
        %v4077 = vld [vmem:[%s274 + $0x1d0] sm:$0xff]
        %v4078 = vld [vmem:[%s274 + $0x1d8] sm:$0xff]
        %v4079 = vld [vmem:[%s274 + $0x1e0] sm:$0xff]
        %v4080 = vld [vmem:[%s274 + $0x1e8] sm:$0xff]
        %v4081 = vld [vmem:[%s274 + $0x1f0] sm:$0xff]
        %v4082 = vld [vmem:[%s274 + $0x1f8] sm:$0xff]
        %s4083 = scalar_lea.vmem [#allocation3], 80
        %v4084 = vld [vmem:[%s4083] sm:$0xff]
        %v4085 = vld [vmem:[%s4083 + $0x8] sm:$0xff]
        %v4088 = vunpack.c.l.b16 %v4084
        %v4089 = vunpack.c.h.b16 %v4084
        %v4090 = vunpack.c.l.b16 %v4085
        %v4091 = vunpack.c.h.b16 %v4085
        %v4092 = vpack.c.b16 %v4090, %v4088
        %v4093 = vpack.c.b16 %v4091, %v4089
        %v4097 = vsel %vm487, %v4003, 0
        %v4100 = vsel %vm487, %v4004, 0
        %v4103 = vsel %vm487, %v4005, 0
        %v4106 = vsel %vm487, %v4006, 0
        %v4109 = vsel %vm487, %v4007, 0
        %v4112 = vsel %vm487, %v4008, 0
        %v4115 = vsel %vm487, %v4009, 0
        %v4118 = vsel %vm487, %v4010, 0
        %v4121 = vsel %vm487, %v4011, 0
        %v4124 = vsel %vm487, %v4012, 0
        %v4127 = vsel %vm487, %v4013, 0
        %v4130 = vsel %vm487, %v4014, 0
        %v4133 = vsel %vm487, %v4015, 0
        %v4136 = vsel %vm487, %v4016, 0
        %v4139 = vsel %vm487, %v4017, 0
        %v4142 = vsel %vm487, %v4018, 0
        %4144 = vmatpush.bf16.msra.mxu0 0
        %4145 = vmatpush.bf16.msra.mxu0 0
        %4146 = vmatpush.bf16.msra.mxu0 0
        %4147 = vmatpush.bf16.msra.mxu0 0
        %4148 = vmatpush.bf16.msra.mxu0 0
        %4149 = vmatpush.bf16.msra.mxu0 0
        %4150 = vmatpush.bf16.msra.mxu0 0
        %4151 = vmatpush.bf16.msra.mxu0 %v4092
        %4152 = vmatmul.bf16.gmra.mxu0 %v4097
        %v4153 = vpop.f32.mrf.mxu0
        %v4154 = vadd.f32 0.0, %v4153
        %v4155 = vpop.f32.mrf.mxu0
        %v4156 = vadd.f32 0.0, %v4155
        %4157 = vmatmul.bf16.gmra.mxu0 %v4100
        %v4158 = vpop.f32.mrf.mxu0
        %v4159 = vadd.f32 0.0, %v4158
        %v4160 = vpop.f32.mrf.mxu0
        %v4161 = vadd.f32 0.0, %v4160
        %4162 = vmatmul.bf16.gmra.mxu0 %v4103
        %v4163 = vpop.f32.mrf.mxu0
        %v4164 = vadd.f32 0.0, %v4163
        %v4165 = vpop.f32.mrf.mxu0
        %v4166 = vadd.f32 0.0, %v4165
        %4167 = vmatmul.bf16.gmra.mxu0 %v4106
        %v4168 = vpop.f32.mrf.mxu0
        %v4169 = vadd.f32 0.0, %v4168
        %v4170 = vpop.f32.mrf.mxu0
        %v4171 = vadd.f32 0.0, %v4170
        %4172 = vmatmul.bf16.gmra.mxu0 %v4109
        %v4173 = vpop.f32.mrf.mxu0
        %v4174 = vadd.f32 0.0, %v4173
        %v4175 = vpop.f32.mrf.mxu0
        %v4176 = vadd.f32 0.0, %v4175
        %4177 = vmatmul.bf16.gmra.mxu0 %v4112
        %v4178 = vpop.f32.mrf.mxu0
        %v4179 = vadd.f32 0.0, %v4178
        %v4180 = vpop.f32.mrf.mxu0
        %v4181 = vadd.f32 0.0, %v4180
        %4182 = vmatmul.bf16.gmra.mxu0 %v4115
        %v4183 = vpop.f32.mrf.mxu0
        %v4184 = vadd.f32 0.0, %v4183
        %v4185 = vpop.f32.mrf.mxu0
        %v4186 = vadd.f32 0.0, %v4185
        %4187 = vmatmul.bf16.gmra.mxu0 %v4118
        %v4188 = vpop.f32.mrf.mxu0
        %v4189 = vadd.f32 0.0, %v4188
        %v4190 = vpop.f32.mrf.mxu0
        %v4191 = vadd.f32 0.0, %v4190
        %4192 = vmatmul.bf16.gmra.mxu0 %v4121
        %v4193 = vpop.f32.mrf.mxu0
        %v4194 = vadd.f32 0.0, %v4193
        %v4195 = vpop.f32.mrf.mxu0
        %v4196 = vadd.f32 0.0, %v4195
        %4197 = vmatmul.bf16.gmra.mxu0 %v4124
        %v4198 = vpop.f32.mrf.mxu0
        %v4199 = vadd.f32 0.0, %v4198
        %v4200 = vpop.f32.mrf.mxu0
        %v4201 = vadd.f32 0.0, %v4200
        %4202 = vmatmul.bf16.gmra.mxu0 %v4127
        %v4203 = vpop.f32.mrf.mxu0
        %v4204 = vadd.f32 0.0, %v4203
        %v4205 = vpop.f32.mrf.mxu0
        %v4206 = vadd.f32 0.0, %v4205
        %4207 = vmatmul.bf16.gmra.mxu0 %v4130
        %v4208 = vpop.f32.mrf.mxu0
        %v4209 = vadd.f32 0.0, %v4208
        %v4210 = vpop.f32.mrf.mxu0
        %v4211 = vadd.f32 0.0, %v4210
        %4212 = vmatmul.bf16.gmra.mxu0 %v4133
        %v4213 = vpop.f32.mrf.mxu0
        %v4214 = vadd.f32 0.0, %v4213
        %v4215 = vpop.f32.mrf.mxu0
        %v4216 = vadd.f32 0.0, %v4215
        %4217 = vmatmul.bf16.gmra.mxu0 %v4136
        %v4218 = vpop.f32.mrf.mxu0
        %v4219 = vadd.f32 0.0, %v4218
        %v4220 = vpop.f32.mrf.mxu0
        %v4221 = vadd.f32 0.0, %v4220
        %4222 = vmatmul.bf16.gmra.mxu0 %v4139
        %v4223 = vpop.f32.mrf.mxu0
        %v4224 = vadd.f32 0.0, %v4223
        %v4225 = vpop.f32.mrf.mxu0
        %v4226 = vadd.f32 0.0, %v4225
        %4227 = vmatmul.bf16.gmra.mxu0 %v4142
        %v4228 = vpop.f32.mrf.mxu0
        %v4229 = vadd.f32 0.0, %v4228
        %v4230 = vpop.f32.mrf.mxu0
        %v4231 = vadd.f32 0.0, %v4230
        %4232 = vdwg.mxu0
        %4233 = vmatpush.bf16.msra.mxu0 0
        %4234 = vmatpush.bf16.msra.mxu0 0
        %4235 = vmatpush.bf16.msra.mxu0 0
        %4236 = vmatpush.bf16.msra.mxu0 0
        %4237 = vmatpush.bf16.msra.mxu0 0
        %4238 = vmatpush.bf16.msra.mxu0 0
        %4239 = vmatpush.bf16.msra.mxu0 0
        %4240 = vmatpush.bf16.msra.mxu0 %v4093
        %4241 = vmatmul.bf16.gmra.mxu0 %v4097
        %v4242 = vpop.f32.mrf.mxu0
        %v4243 = vadd.f32 0.0, %v4242
        %v4244 = vpop.f32.mrf.mxu0
        %v4245 = vadd.f32 0.0, %v4244
        %4246 = vmatmul.bf16.gmra.mxu0 %v4100
        %v4247 = vpop.f32.mrf.mxu0
        %v4248 = vadd.f32 0.0, %v4247
        %v4249 = vpop.f32.mrf.mxu0
        %v4250 = vadd.f32 0.0, %v4249
        %4251 = vmatmul.bf16.gmra.mxu0 %v4103
        %v4252 = vpop.f32.mrf.mxu0
        %v4253 = vadd.f32 0.0, %v4252
        %v4254 = vpop.f32.mrf.mxu0
        %v4255 = vadd.f32 0.0, %v4254
        %4256 = vmatmul.bf16.gmra.mxu0 %v4106
        %v4257 = vpop.f32.mrf.mxu0
        %v4258 = vadd.f32 0.0, %v4257
        %v4259 = vpop.f32.mrf.mxu0
        %v4260 = vadd.f32 0.0, %v4259
        %4261 = vmatmul.bf16.gmra.mxu0 %v4109
        %v4262 = vpop.f32.mrf.mxu0
        %v4263 = vadd.f32 0.0, %v4262
        %v4264 = vpop.f32.mrf.mxu0
        %v4265 = vadd.f32 0.0, %v4264
        %4266 = vmatmul.bf16.gmra.mxu0 %v4112
        %v4267 = vpop.f32.mrf.mxu0
        %v4268 = vadd.f32 0.0, %v4267
        %v4269 = vpop.f32.mrf.mxu0
        %v4270 = vadd.f32 0.0, %v4269
        %4271 = vmatmul.bf16.gmra.mxu0 %v4115
        %v4272 = vpop.f32.mrf.mxu0
        %v4273 = vadd.f32 0.0, %v4272
        %v4274 = vpop.f32.mrf.mxu0
        %v4275 = vadd.f32 0.0, %v4274
        %4276 = vmatmul.bf16.gmra.mxu0 %v4118
        %v4277 = vpop.f32.mrf.mxu0
        %v4278 = vadd.f32 0.0, %v4277
        %v4279 = vpop.f32.mrf.mxu0
        %v4280 = vadd.f32 0.0, %v4279
        %4281 = vmatmul.bf16.gmra.mxu0 %v4121
        %v4282 = vpop.f32.mrf.mxu0
        %v4283 = vadd.f32 0.0, %v4282
        %v4284 = vpop.f32.mrf.mxu0
        %v4285 = vadd.f32 0.0, %v4284
        %4286 = vmatmul.bf16.gmra.mxu0 %v4124
        %v4287 = vpop.f32.mrf.mxu0
        %v4288 = vadd.f32 0.0, %v4287
        %v4289 = vpop.f32.mrf.mxu0
        %v4290 = vadd.f32 0.0, %v4289
        %4291 = vmatmul.bf16.gmra.mxu0 %v4127
        %v4292 = vpop.f32.mrf.mxu0
        %v4293 = vadd.f32 0.0, %v4292
        %v4294 = vpop.f32.mrf.mxu0
        %v4295 = vadd.f32 0.0, %v4294
        %4296 = vmatmul.bf16.gmra.mxu0 %v4130
        %v4297 = vpop.f32.mrf.mxu0
        %v4298 = vadd.f32 0.0, %v4297
        %v4299 = vpop.f32.mrf.mxu0
        %v4300 = vadd.f32 0.0, %v4299
        %4301 = vmatmul.bf16.gmra.mxu0 %v4133
        %v4302 = vpop.f32.mrf.mxu0
        %v4303 = vadd.f32 0.0, %v4302
        %v4304 = vpop.f32.mrf.mxu0
        %v4305 = vadd.f32 0.0, %v4304
        %4306 = vmatmul.bf16.gmra.mxu0 %v4136
        %v4307 = vpop.f32.mrf.mxu0
        %v4308 = vadd.f32 0.0, %v4307
        %v4309 = vpop.f32.mrf.mxu0
        %v4310 = vadd.f32 0.0, %v4309
        %4311 = vmatmul.bf16.gmra.mxu0 %v4139
        %v4312 = vpop.f32.mrf.mxu0
        %v4313 = vadd.f32 0.0, %v4312
        %v4314 = vpop.f32.mrf.mxu0
        %v4315 = vadd.f32 0.0, %v4314
        %4316 = vmatmul.bf16.gmra.mxu0 %v4142
        %v4317 = vpop.f32.mrf.mxu0
        %v4318 = vadd.f32 0.0, %v4317
        %v4319 = vpop.f32.mrf.mxu0
        %v4320 = vadd.f32 0.0, %v4319
        %4321 = vdwg.mxu0
        %v4322 = vadd.f32 %v4019, %v4154
        %v4323 = vadd.f32 %v4020, %v4243
        %v4324 = vadd.f32 %v4021, %v4156
        %v4325 = vadd.f32 %v4022, %v4245
        %v4326 = vadd.f32 %v4023, %v4159
        %v4327 = vadd.f32 %v4024, %v4248
        %v4328 = vadd.f32 %v4025, %v4161
        %v4329 = vadd.f32 %v4026, %v4250
        %v4330 = vadd.f32 %v4027, %v4164
        %v4331 = vadd.f32 %v4028, %v4253
        %v4332 = vadd.f32 %v4029, %v4166
        %v4333 = vadd.f32 %v4030, %v4255
        %v4334 = vadd.f32 %v4031, %v4169
        %v4335 = vadd.f32 %v4032, %v4258
        %v4336 = vadd.f32 %v4033, %v4171
        %v4337 = vadd.f32 %v4034, %v4260
        %v4338 = vadd.f32 %v4035, %v4174
        %v4339 = vadd.f32 %v4036, %v4263
        %v4340 = vadd.f32 %v4037, %v4176
        %v4341 = vadd.f32 %v4038, %v4265
        %v4342 = vadd.f32 %v4039, %v4179
        %v4343 = vadd.f32 %v4040, %v4268
        %v4344 = vadd.f32 %v4041, %v4181
        %v4345 = vadd.f32 %v4042, %v4270
        %v4346 = vadd.f32 %v4043, %v4184
        %v4347 = vadd.f32 %v4044, %v4273
        %v4348 = vadd.f32 %v4045, %v4186
        %v4349 = vadd.f32 %v4046, %v4275
        %v4350 = vadd.f32 %v4047, %v4189
        %v4351 = vadd.f32 %v4048, %v4278
        %v4352 = vadd.f32 %v4049, %v4191
        %v4353 = vadd.f32 %v4050, %v4280
        %v4354 = vadd.f32 %v4051, %v4194
        %v4355 = vadd.f32 %v4052, %v4283
        %v4356 = vadd.f32 %v4053, %v4196
        %v4357 = vadd.f32 %v4054, %v4285
        %v4358 = vadd.f32 %v4055, %v4199
        %v4359 = vadd.f32 %v4056, %v4288
        %v4360 = vadd.f32 %v4057, %v4201
        %v4361 = vadd.f32 %v4058, %v4290
        %v4362 = vadd.f32 %v4059, %v4204
        %v4363 = vadd.f32 %v4060, %v4293
        %v4364 = vadd.f32 %v4061, %v4206
        %v4365 = vadd.f32 %v4062, %v4295
        %v4366 = vadd.f32 %v4063, %v4209
        %v4367 = vadd.f32 %v4064, %v4298
        %v4368 = vadd.f32 %v4065, %v4211
        %v4369 = vadd.f32 %v4066, %v4300
        %v4370 = vadd.f32 %v4067, %v4214
        %v4371 = vadd.f32 %v4068, %v4303
        %v4372 = vadd.f32 %v4069, %v4216
        %v4373 = vadd.f32 %v4070, %v4305
        %v4374 = vadd.f32 %v4071, %v4219
        %v4375 = vadd.f32 %v4072, %v4308
        %v4376 = vadd.f32 %v4073, %v4221
        %v4377 = vadd.f32 %v4074, %v4310
        %v4378 = vadd.f32 %v4075, %v4224
        %v4379 = vadd.f32 %v4076, %v4313
        %v4380 = vadd.f32 %v4077, %v4226
        %v4381 = vadd.f32 %v4078, %v4315
        %v4382 = vadd.f32 %v4079, %v4229
        %v4383 = vadd.f32 %v4080, %v4318
        %v4384 = vadd.f32 %v4081, %v4231
        %v4385 = vadd.f32 %v4082, %v4320
        %4386 = vst [vmem:[%s274] sm:$0xff] %v4322
        %4387 = vst [vmem:[%s274 + $0x8] sm:$0xff] %v4323
        %4388 = vst [vmem:[%s274 + $0x10] sm:$0xff] %v4324
        %4389 = vst [vmem:[%s274 + $0x18] sm:$0xff] %v4325
        %4390 = vst [vmem:[%s274 + $0x20] sm:$0xff] %v4326
        %4391 = vst [vmem:[%s274 + $0x28] sm:$0xff] %v4327
        %4392 = vst [vmem:[%s274 + $0x30] sm:$0xff] %v4328
        %4393 = vst [vmem:[%s274 + $0x38] sm:$0xff] %v4329
        %4394 = vst [vmem:[%s274 + $0x40] sm:$0xff] %v4330
        %4395 = vst [vmem:[%s274 + $0x48] sm:$0xff] %v4331
        %4396 = vst [vmem:[%s274 + $0x50] sm:$0xff] %v4332
        %4397 = vst [vmem:[%s274 + $0x58] sm:$0xff] %v4333
        %4398 = vst [vmem:[%s274 + $0x60] sm:$0xff] %v4334
        %4399 = vst [vmem:[%s274 + $0x68] sm:$0xff] %v4335
        %4400 = vst [vmem:[%s274 + $0x70] sm:$0xff] %v4336
        %4401 = vst [vmem:[%s274 + $0x78] sm:$0xff] %v4337
        %4402 = vst [vmem:[%s274 + $0x80] sm:$0xff] %v4338
        %4403 = vst [vmem:[%s274 + $0x88] sm:$0xff] %v4339
        %4404 = vst [vmem:[%s274 + $0x90] sm:$0xff] %v4340
        %4405 = vst [vmem:[%s274 + $0x98] sm:$0xff] %v4341
        %4406 = vst [vmem:[%s274 + $0xa0] sm:$0xff] %v4342
        %4407 = vst [vmem:[%s274 + $0xa8] sm:$0xff] %v4343
        %4408 = vst [vmem:[%s274 + $0xb0] sm:$0xff] %v4344
        %4409 = vst [vmem:[%s274 + $0xb8] sm:$0xff] %v4345
        %4410 = vst [vmem:[%s274 + $0xc0] sm:$0xff] %v4346
        %4411 = vst [vmem:[%s274 + $0xc8] sm:$0xff] %v4347
        %4412 = vst [vmem:[%s274 + $0xd0] sm:$0xff] %v4348
        %4413 = vst [vmem:[%s274 + $0xd8] sm:$0xff] %v4349
        %4414 = vst [vmem:[%s274 + $0xe0] sm:$0xff] %v4350
        %4415 = vst [vmem:[%s274 + $0xe8] sm:$0xff] %v4351
        %4416 = vst [vmem:[%s274 + $0xf0] sm:$0xff] %v4352
        %4417 = vst [vmem:[%s274 + $0xf8] sm:$0xff] %v4353
        %4418 = vst [vmem:[%s274 + $0x100] sm:$0xff] %v4354
        %4419 = vst [vmem:[%s274 + $0x108] sm:$0xff] %v4355
        %4420 = vst [vmem:[%s274 + $0x110] sm:$0xff] %v4356
        %4421 = vst [vmem:[%s274 + $0x118] sm:$0xff] %v4357
        %4422 = vst [vmem:[%s274 + $0x120] sm:$0xff] %v4358
        %4423 = vst [vmem:[%s274 + $0x128] sm:$0xff] %v4359
        %4424 = vst [vmem:[%s274 + $0x130] sm:$0xff] %v4360
        %4425 = vst [vmem:[%s274 + $0x138] sm:$0xff] %v4361
        %4426 = vst [vmem:[%s274 + $0x140] sm:$0xff] %v4362
        %4427 = vst [vmem:[%s274 + $0x148] sm:$0xff] %v4363
        %4428 = vst [vmem:[%s274 + $0x150] sm:$0xff] %v4364
        %4429 = vst [vmem:[%s274 + $0x158] sm:$0xff] %v4365
        %4430 = vst [vmem:[%s274 + $0x160] sm:$0xff] %v4366
        %4431 = vst [vmem:[%s274 + $0x168] sm:$0xff] %v4367
        %4432 = vst [vmem:[%s274 + $0x170] sm:$0xff] %v4368
        %4433 = vst [vmem:[%s274 + $0x178] sm:$0xff] %v4369
        %4434 = vst [vmem:[%s274 + $0x180] sm:$0xff] %v4370
        %4435 = vst [vmem:[%s274 + $0x188] sm:$0xff] %v4371
        %4436 = vst [vmem:[%s274 + $0x190] sm:$0xff] %v4372
        %4437 = vst [vmem:[%s274 + $0x198] sm:$0xff] %v4373
        %4438 = vst [vmem:[%s274 + $0x1a0] sm:$0xff] %v4374
        %4439 = vst [vmem:[%s274 + $0x1a8] sm:$0xff] %v4375
        %4440 = vst [vmem:[%s274 + $0x1b0] sm:$0xff] %v4376
        %4441 = vst [vmem:[%s274 + $0x1b8] sm:$0xff] %v4377
        %4442 = vst [vmem:[%s274 + $0x1c0] sm:$0xff] %v4378
        %4443 = vst [vmem:[%s274 + $0x1c8] sm:$0xff] %v4379
        %4444 = vst [vmem:[%s274 + $0x1d0] sm:$0xff] %v4380
        %4445 = vst [vmem:[%s274 + $0x1d8] sm:$0xff] %v4381
        %4446 = vst [vmem:[%s274 + $0x1e0] sm:$0xff] %v4382
        %4447 = vst [vmem:[%s274 + $0x1e8] sm:$0xff] %v4383
        %4448 = vst [vmem:[%s274 + $0x1f0] sm:$0xff] %v4384
        %4449 = vst [vmem:[%s274 + $0x1f8] sm:$0xff] %v4385
        %s4450 = sadd.s32 %s1501, 2
        %s4451 = smul.u32 %s4450, 24
        %s4452 = scalar_lea.vmem [#allocation2], %s4451
        %v4453 = vld [vmem:[%s4452] sm:$0xff]
        %v4454 = vld [vmem:[%s4452 + $0x8] sm:$0xff]
        %v4455 = vld [vmem:[%s4452 + $0x18] sm:$0xff]
        %v4456 = vld [vmem:[%s4452 + $0x20] sm:$0xff]
        %v4457 = vld [vmem:[%s4452 + $0x30] sm:$0xff]
        %v4458 = vld [vmem:[%s4452 + $0x38] sm:$0xff]
        %v4459 = vld [vmem:[%s4452 + $0x48] sm:$0xff]
        %v4460 = vld [vmem:[%s4452 + $0x50] sm:$0xff]
        %v4461 = vld [vmem:[%s4452 + $0x60] sm:$0xff]
        %v4462 = vld [vmem:[%s4452 + $0x68] sm:$0xff]
        %v4463 = vld [vmem:[%s4452 + $0x78] sm:$0xff]
        %v4464 = vld [vmem:[%s4452 + $0x80] sm:$0xff]
        %v4465 = vld [vmem:[%s4452 + $0x90] sm:$0xff]
        %v4466 = vld [vmem:[%s4452 + $0x98] sm:$0xff]
        %v4467 = vld [vmem:[%s4452 + $0xa8] sm:$0xff]
        %v4468 = vld [vmem:[%s4452 + $0xb0] sm:$0xff]
        %v4469 = vld [vmem:[%s4452 + $0xc0] sm:$0xff]
        %v4470 = vld [vmem:[%s4452 + $0xc8] sm:$0xff]
        %v4471 = vld [vmem:[%s4452 + $0xd8] sm:$0xff]
        %v4472 = vld [vmem:[%s4452 + $0xe0] sm:$0xff]
        %v4473 = vld [vmem:[%s4452 + $0xf0] sm:$0xff]
        %v4474 = vld [vmem:[%s4452 + $0xf8] sm:$0xff]
        %v4475 = vld [vmem:[%s4452 + $0x108] sm:$0xff]
        %v4476 = vld [vmem:[%s4452 + $0x110] sm:$0xff]
        %v4477 = vld [vmem:[%s4452 + $0x120] sm:$0xff]
        %v4478 = vld [vmem:[%s4452 + $0x128] sm:$0xff]
        %v4479 = vld [vmem:[%s4452 + $0x138] sm:$0xff]
        %v4480 = vld [vmem:[%s4452 + $0x140] sm:$0xff]
        %v4481 = vld [vmem:[%s4452 + $0x150] sm:$0xff]
        %v4482 = vld [vmem:[%s4452 + $0x158] sm:$0xff]
        %v4483 = vld [vmem:[%s4452 + $0x168] sm:$0xff]
        %v4484 = vld [vmem:[%s4452 + $0x170] sm:$0xff]
        %v4485 = vpack.c.bf16 %v4454, %v4453
        %v4486 = vpack.c.bf16 %v4456, %v4455
        %v4487 = vpack.c.bf16 %v4458, %v4457
        %v4488 = vpack.c.bf16 %v4460, %v4459
        %v4489 = vpack.c.bf16 %v4462, %v4461
        %v4490 = vpack.c.bf16 %v4464, %v4463
        %v4491 = vpack.c.bf16 %v4466, %v4465
        %v4492 = vpack.c.bf16 %v4468, %v4467
        %v4493 = vpack.c.bf16 %v4470, %v4469
        %v4494 = vpack.c.bf16 %v4472, %v4471
        %v4495 = vpack.c.bf16 %v4474, %v4473
        %v4496 = vpack.c.bf16 %v4476, %v4475
        %v4497 = vpack.c.bf16 %v4478, %v4477
        %v4498 = vpack.c.bf16 %v4480, %v4479
        %v4499 = vpack.c.bf16 %v4482, %v4481
        %v4500 = vpack.c.bf16 %v4484, %v4483
        %v4501 = vld [vmem:[%s274] sm:$0xff]
        %v4502 = vld [vmem:[%s274 + $0x8] sm:$0xff]
        %v4503 = vld [vmem:[%s274 + $0x10] sm:$0xff]
        %v4504 = vld [vmem:[%s274 + $0x18] sm:$0xff]
        %v4505 = vld [vmem:[%s274 + $0x20] sm:$0xff]
        %v4506 = vld [vmem:[%s274 + $0x28] sm:$0xff]
        %v4507 = vld [vmem:[%s274 + $0x30] sm:$0xff]
        %v4508 = vld [vmem:[%s274 + $0x38] sm:$0xff]
        %v4509 = vld [vmem:[%s274 + $0x40] sm:$0xff]
        %v4510 = vld [vmem:[%s274 + $0x48] sm:$0xff]
        %v4511 = vld [vmem:[%s274 + $0x50] sm:$0xff]
        %v4512 = vld [vmem:[%s274 + $0x58] sm:$0xff]
        %v4513 = vld [vmem:[%s274 + $0x60] sm:$0xff]
        %v4514 = vld [vmem:[%s274 + $0x68] sm:$0xff]
        %v4515 = vld [vmem:[%s274 + $0x70] sm:$0xff]
        %v4516 = vld [vmem:[%s274 + $0x78] sm:$0xff]
        %v4517 = vld [vmem:[%s274 + $0x80] sm:$0xff]
        %v4518 = vld [vmem:[%s274 + $0x88] sm:$0xff]
        %v4519 = vld [vmem:[%s274 + $0x90] sm:$0xff]
        %v4520 = vld [vmem:[%s274 + $0x98] sm:$0xff]
        %v4521 = vld [vmem:[%s274 + $0xa0] sm:$0xff]
        %v4522 = vld [vmem:[%s274 + $0xa8] sm:$0xff]
        %v4523 = vld [vmem:[%s274 + $0xb0] sm:$0xff]
        %v4524 = vld [vmem:[%s274 + $0xb8] sm:$0xff]
        %v4525 = vld [vmem:[%s274 + $0xc0] sm:$0xff]
        %v4526 = vld [vmem:[%s274 + $0xc8] sm:$0xff]
        %v4527 = vld [vmem:[%s274 + $0xd0] sm:$0xff]
        %v4528 = vld [vmem:[%s274 + $0xd8] sm:$0xff]
        %v4529 = vld [vmem:[%s274 + $0xe0] sm:$0xff]
        %v4530 = vld [vmem:[%s274 + $0xe8] sm:$0xff]
        %v4531 = vld [vmem:[%s274 + $0xf0] sm:$0xff]
        %v4532 = vld [vmem:[%s274 + $0xf8] sm:$0xff]
        %v4533 = vld [vmem:[%s274 + $0x100] sm:$0xff]
        %v4534 = vld [vmem:[%s274 + $0x108] sm:$0xff]
        %v4535 = vld [vmem:[%s274 + $0x110] sm:$0xff]
        %v4536 = vld [vmem:[%s274 + $0x118] sm:$0xff]
        %v4537 = vld [vmem:[%s274 + $0x120] sm:$0xff]
        %v4538 = vld [vmem:[%s274 + $0x128] sm:$0xff]
        %v4539 = vld [vmem:[%s274 + $0x130] sm:$0xff]
        %v4540 = vld [vmem:[%s274 + $0x138] sm:$0xff]
        %v4541 = vld [vmem:[%s274 + $0x140] sm:$0xff]
        %v4542 = vld [vmem:[%s274 + $0x148] sm:$0xff]
        %v4543 = vld [vmem:[%s274 + $0x150] sm:$0xff]
        %v4544 = vld [vmem:[%s274 + $0x158] sm:$0xff]
        %v4545 = vld [vmem:[%s274 + $0x160] sm:$0xff]
        %v4546 = vld [vmem:[%s274 + $0x168] sm:$0xff]
        %v4547 = vld [vmem:[%s274 + $0x170] sm:$0xff]
        %v4548 = vld [vmem:[%s274 + $0x178] sm:$0xff]
        %v4549 = vld [vmem:[%s274 + $0x180] sm:$0xff]
        %v4550 = vld [vmem:[%s274 + $0x188] sm:$0xff]
        %v4551 = vld [vmem:[%s274 + $0x190] sm:$0xff]
        %v4552 = vld [vmem:[%s274 + $0x198] sm:$0xff]
        %v4553 = vld [vmem:[%s274 + $0x1a0] sm:$0xff]
        %v4554 = vld [vmem:[%s274 + $0x1a8] sm:$0xff]
        %v4555 = vld [vmem:[%s274 + $0x1b0] sm:$0xff]
        %v4556 = vld [vmem:[%s274 + $0x1b8] sm:$0xff]
        %v4557 = vld [vmem:[%s274 + $0x1c0] sm:$0xff]
        %v4558 = vld [vmem:[%s274 + $0x1c8] sm:$0xff]
        %v4559 = vld [vmem:[%s274 + $0x1d0] sm:$0xff]
        %v4560 = vld [vmem:[%s274 + $0x1d8] sm:$0xff]
        %v4561 = vld [vmem:[%s274 + $0x1e0] sm:$0xff]
        %v4562 = vld [vmem:[%s274 + $0x1e8] sm:$0xff]
        %v4563 = vld [vmem:[%s274 + $0x1f0] sm:$0xff]
        %v4564 = vld [vmem:[%s274 + $0x1f8] sm:$0xff]
        %s4565 = scalar_lea.vmem [#allocation3], 96
        %v4566 = vld [vmem:[%s4565] sm:$0xff]
        %v4567 = vld [vmem:[%s4565 + $0x8] sm:$0xff]
        %v4570 = vunpack.c.l.b16 %v4566
        %v4571 = vunpack.c.h.b16 %v4566
        %v4572 = vunpack.c.l.b16 %v4567
        %v4573 = vunpack.c.h.b16 %v4567
        %v4574 = vpack.c.b16 %v4572, %v4570
        %v4575 = vpack.c.b16 %v4573, %v4571
        %v4579 = vsel %vm487, %v4485, 0
        %v4582 = vsel %vm487, %v4486, 0
        %v4585 = vsel %vm487, %v4487, 0
        %v4588 = vsel %vm487, %v4488, 0
        %v4591 = vsel %vm487, %v4489, 0
        %v4594 = vsel %vm487, %v4490, 0
        %v4597 = vsel %vm487, %v4491, 0
        %v4600 = vsel %vm487, %v4492, 0
        %v4603 = vsel %vm487, %v4493, 0
        %v4606 = vsel %vm487, %v4494, 0
        %v4609 = vsel %vm487, %v4495, 0
        %v4612 = vsel %vm487, %v4496, 0
        %v4615 = vsel %vm487, %v4497, 0
        %v4618 = vsel %vm487, %v4498, 0
        %v4621 = vsel %vm487, %v4499, 0
        %v4624 = vsel %vm487, %v4500, 0
        %4626 = vmatpush.bf16.msra.mxu0 0
        %4627 = vmatpush.bf16.msra.mxu0 0
        %4628 = vmatpush.bf16.msra.mxu0 0
        %4629 = vmatpush.bf16.msra.mxu0 0
        %4630 = vmatpush.bf16.msra.mxu0 0
        %4631 = vmatpush.bf16.msra.mxu0 0
        %4632 = vmatpush.bf16.msra.mxu0 0
        %4633 = vmatpush.bf16.msra.mxu0 %v4574
        %4634 = vmatmul.bf16.gmra.mxu0 %v4579
        %v4635 = vpop.f32.mrf.mxu0
        %v4636 = vadd.f32 0.0, %v4635
        %v4637 = vpop.f32.mrf.mxu0
        %v4638 = vadd.f32 0.0, %v4637
        %4639 = vmatmul.bf16.gmra.mxu0 %v4582
        %v4640 = vpop.f32.mrf.mxu0
        %v4641 = vadd.f32 0.0, %v4640
        %v4642 = vpop.f32.mrf.mxu0
        %v4643 = vadd.f32 0.0, %v4642
        %4644 = vmatmul.bf16.gmra.mxu0 %v4585
        %v4645 = vpop.f32.mrf.mxu0
        %v4646 = vadd.f32 0.0, %v4645
        %v4647 = vpop.f32.mrf.mxu0
        %v4648 = vadd.f32 0.0, %v4647
        %4649 = vmatmul.bf16.gmra.mxu0 %v4588
        %v4650 = vpop.f32.mrf.mxu0
        %v4651 = vadd.f32 0.0, %v4650
        %v4652 = vpop.f32.mrf.mxu0
        %v4653 = vadd.f32 0.0, %v4652
        %4654 = vmatmul.bf16.gmra.mxu0 %v4591
        %v4655 = vpop.f32.mrf.mxu0
        %v4656 = vadd.f32 0.0, %v4655
        %v4657 = vpop.f32.mrf.mxu0
        %v4658 = vadd.f32 0.0, %v4657
        %4659 = vmatmul.bf16.gmra.mxu0 %v4594
        %v4660 = vpop.f32.mrf.mxu0
        %v4661 = vadd.f32 0.0, %v4660
        %v4662 = vpop.f32.mrf.mxu0
        %v4663 = vadd.f32 0.0, %v4662
        %4664 = vmatmul.bf16.gmra.mxu0 %v4597
        %v4665 = vpop.f32.mrf.mxu0
        %v4666 = vadd.f32 0.0, %v4665
        %v4667 = vpop.f32.mrf.mxu0
        %v4668 = vadd.f32 0.0, %v4667
        %4669 = vmatmul.bf16.gmra.mxu0 %v4600
        %v4670 = vpop.f32.mrf.mxu0
        %v4671 = vadd.f32 0.0, %v4670
        %v4672 = vpop.f32.mrf.mxu0
        %v4673 = vadd.f32 0.0, %v4672
        %4674 = vmatmul.bf16.gmra.mxu0 %v4603
        %v4675 = vpop.f32.mrf.mxu0
        %v4676 = vadd.f32 0.0, %v4675
        %v4677 = vpop.f32.mrf.mxu0
        %v4678 = vadd.f32 0.0, %v4677
        %4679 = vmatmul.bf16.gmra.mxu0 %v4606
        %v4680 = vpop.f32.mrf.mxu0
        %v4681 = vadd.f32 0.0, %v4680
        %v4682 = vpop.f32.mrf.mxu0
        %v4683 = vadd.f32 0.0, %v4682
        %4684 = vmatmul.bf16.gmra.mxu0 %v4609
        %v4685 = vpop.f32.mrf.mxu0
        %v4686 = vadd.f32 0.0, %v4685
        %v4687 = vpop.f32.mrf.mxu0
        %v4688 = vadd.f32 0.0, %v4687
        %4689 = vmatmul.bf16.gmra.mxu0 %v4612
        %v4690 = vpop.f32.mrf.mxu0
        %v4691 = vadd.f32 0.0, %v4690
        %v4692 = vpop.f32.mrf.mxu0
        %v4693 = vadd.f32 0.0, %v4692
        %4694 = vmatmul.bf16.gmra.mxu0 %v4615
        %v4695 = vpop.f32.mrf.mxu0
        %v4696 = vadd.f32 0.0, %v4695
        %v4697 = vpop.f32.mrf.mxu0
        %v4698 = vadd.f32 0.0, %v4697
        %4699 = vmatmul.bf16.gmra.mxu0 %v4618
        %v4700 = vpop.f32.mrf.mxu0
        %v4701 = vadd.f32 0.0, %v4700
        %v4702 = vpop.f32.mrf.mxu0
        %v4703 = vadd.f32 0.0, %v4702
        %4704 = vmatmul.bf16.gmra.mxu0 %v4621
        %v4705 = vpop.f32.mrf.mxu0
        %v4706 = vadd.f32 0.0, %v4705
        %v4707 = vpop.f32.mrf.mxu0
        %v4708 = vadd.f32 0.0, %v4707
        %4709 = vmatmul.bf16.gmra.mxu0 %v4624
        %v4710 = vpop.f32.mrf.mxu0
        %v4711 = vadd.f32 0.0, %v4710
        %v4712 = vpop.f32.mrf.mxu0
        %v4713 = vadd.f32 0.0, %v4712
        %4714 = vdwg.mxu0
        %4715 = vmatpush.bf16.msra.mxu0 0
        %4716 = vmatpush.bf16.msra.mxu0 0
        %4717 = vmatpush.bf16.msra.mxu0 0
        %4718 = vmatpush.bf16.msra.mxu0 0
        %4719 = vmatpush.bf16.msra.mxu0 0
        %4720 = vmatpush.bf16.msra.mxu0 0
        %4721 = vmatpush.bf16.msra.mxu0 0
        %4722 = vmatpush.bf16.msra.mxu0 %v4575
        %4723 = vmatmul.bf16.gmra.mxu0 %v4579
        %v4724 = vpop.f32.mrf.mxu0
        %v4725 = vadd.f32 0.0, %v4724
        %v4726 = vpop.f32.mrf.mxu0
        %v4727 = vadd.f32 0.0, %v4726
        %4728 = vmatmul.bf16.gmra.mxu0 %v4582
        %v4729 = vpop.f32.mrf.mxu0
        %v4730 = vadd.f32 0.0, %v4729
        %v4731 = vpop.f32.mrf.mxu0
        %v4732 = vadd.f32 0.0, %v4731
        %4733 = vmatmul.bf16.gmra.mxu0 %v4585
        %v4734 = vpop.f32.mrf.mxu0
        %v4735 = vadd.f32 0.0, %v4734
        %v4736 = vpop.f32.mrf.mxu0
        %v4737 = vadd.f32 0.0, %v4736
        %4738 = vmatmul.bf16.gmra.mxu0 %v4588
        %v4739 = vpop.f32.mrf.mxu0
        %v4740 = vadd.f32 0.0, %v4739
        %v4741 = vpop.f32.mrf.mxu0
        %v4742 = vadd.f32 0.0, %v4741
        %4743 = vmatmul.bf16.gmra.mxu0 %v4591
        %v4744 = vpop.f32.mrf.mxu0
        %v4745 = vadd.f32 0.0, %v4744
        %v4746 = vpop.f32.mrf.mxu0
        %v4747 = vadd.f32 0.0, %v4746
        %4748 = vmatmul.bf16.gmra.mxu0 %v4594
        %v4749 = vpop.f32.mrf.mxu0
        %v4750 = vadd.f32 0.0, %v4749
        %v4751 = vpop.f32.mrf.mxu0
        %v4752 = vadd.f32 0.0, %v4751
        %4753 = vmatmul.bf16.gmra.mxu0 %v4597
        %v4754 = vpop.f32.mrf.mxu0
        %v4755 = vadd.f32 0.0, %v4754
        %v4756 = vpop.f32.mrf.mxu0
        %v4757 = vadd.f32 0.0, %v4756
        %4758 = vmatmul.bf16.gmra.mxu0 %v4600
        %v4759 = vpop.f32.mrf.mxu0
        %v4760 = vadd.f32 0.0, %v4759
        %v4761 = vpop.f32.mrf.mxu0
        %v4762 = vadd.f32 0.0, %v4761
        %4763 = vmatmul.bf16.gmra.mxu0 %v4603
        %v4764 = vpop.f32.mrf.mxu0
        %v4765 = vadd.f32 0.0, %v4764
        %v4766 = vpop.f32.mrf.mxu0
        %v4767 = vadd.f32 0.0, %v4766
        %4768 = vmatmul.bf16.gmra.mxu0 %v4606
        %v4769 = vpop.f32.mrf.mxu0
        %v4770 = vadd.f32 0.0, %v4769
        %v4771 = vpop.f32.mrf.mxu0
        %v4772 = vadd.f32 0.0, %v4771
        %4773 = vmatmul.bf16.gmra.mxu0 %v4609
        %v4774 = vpop.f32.mrf.mxu0
        %v4775 = vadd.f32 0.0, %v4774
        %v4776 = vpop.f32.mrf.mxu0
        %v4777 = vadd.f32 0.0, %v4776
        %4778 = vmatmul.bf16.gmra.mxu0 %v4612
        %v4779 = vpop.f32.mrf.mxu0
        %v4780 = vadd.f32 0.0, %v4779
        %v4781 = vpop.f32.mrf.mxu0
        %v4782 = vadd.f32 0.0, %v4781
        %4783 = vmatmul.bf16.gmra.mxu0 %v4615
        %v4784 = vpop.f32.mrf.mxu0
        %v4785 = vadd.f32 0.0, %v4784
        %v4786 = vpop.f32.mrf.mxu0
        %v4787 = vadd.f32 0.0, %v4786
        %4788 = vmatmul.bf16.gmra.mxu0 %v4618
        %v4789 = vpop.f32.mrf.mxu0
        %v4790 = vadd.f32 0.0, %v4789
        %v4791 = vpop.f32.mrf.mxu0
        %v4792 = vadd.f32 0.0, %v4791
        %4793 = vmatmul.bf16.gmra.mxu0 %v4621
        %v4794 = vpop.f32.mrf.mxu0
        %v4795 = vadd.f32 0.0, %v4794
        %v4796 = vpop.f32.mrf.mxu0
        %v4797 = vadd.f32 0.0, %v4796
        %4798 = vmatmul.bf16.gmra.mxu0 %v4624
        %v4799 = vpop.f32.mrf.mxu0
        %v4800 = vadd.f32 0.0, %v4799
        %v4801 = vpop.f32.mrf.mxu0
        %v4802 = vadd.f32 0.0, %v4801
        %4803 = vdwg.mxu0
        %v4804 = vadd.f32 %v4501, %v4636
        %v4805 = vadd.f32 %v4502, %v4725
        %v4806 = vadd.f32 %v4503, %v4638
        %v4807 = vadd.f32 %v4504, %v4727
        %v4808 = vadd.f32 %v4505, %v4641
        %v4809 = vadd.f32 %v4506, %v4730
        %v4810 = vadd.f32 %v4507, %v4643
        %v4811 = vadd.f32 %v4508, %v4732
        %v4812 = vadd.f32 %v4509, %v4646
        %v4813 = vadd.f32 %v4510, %v4735
        %v4814 = vadd.f32 %v4511, %v4648
        %v4815 = vadd.f32 %v4512, %v4737
        %v4816 = vadd.f32 %v4513, %v4651
        %v4817 = vadd.f32 %v4514, %v4740
        %v4818 = vadd.f32 %v4515, %v4653
        %v4819 = vadd.f32 %v4516, %v4742
        %v4820 = vadd.f32 %v4517, %v4656
        %v4821 = vadd.f32 %v4518, %v4745
        %v4822 = vadd.f32 %v4519, %v4658
        %v4823 = vadd.f32 %v4520, %v4747
        %v4824 = vadd.f32 %v4521, %v4661
        %v4825 = vadd.f32 %v4522, %v4750
        %v4826 = vadd.f32 %v4523, %v4663
        %v4827 = vadd.f32 %v4524, %v4752
        %v4828 = vadd.f32 %v4525, %v4666
        %v4829 = vadd.f32 %v4526, %v4755
        %v4830 = vadd.f32 %v4527, %v4668
        %v4831 = vadd.f32 %v4528, %v4757
        %v4832 = vadd.f32 %v4529, %v4671
        %v4833 = vadd.f32 %v4530, %v4760
        %v4834 = vadd.f32 %v4531, %v4673
        %v4835 = vadd.f32 %v4532, %v4762
        %v4836 = vadd.f32 %v4533, %v4676
        %v4837 = vadd.f32 %v4534, %v4765
        %v4838 = vadd.f32 %v4535, %v4678
        %v4839 = vadd.f32 %v4536, %v4767
        %v4840 = vadd.f32 %v4537, %v4681
        %v4841 = vadd.f32 %v4538, %v4770
        %v4842 = vadd.f32 %v4539, %v4683
        %v4843 = vadd.f32 %v4540, %v4772
        %v4844 = vadd.f32 %v4541, %v4686
        %v4845 = vadd.f32 %v4542, %v4775
        %v4846 = vadd.f32 %v4543, %v4688
        %v4847 = vadd.f32 %v4544, %v4777
        %v4848 = vadd.f32 %v4545, %v4691
        %v4849 = vadd.f32 %v4546, %v4780
        %v4850 = vadd.f32 %v4547, %v4693
        %v4851 = vadd.f32 %v4548, %v4782
        %v4852 = vadd.f32 %v4549, %v4696
        %v4853 = vadd.f32 %v4550, %v4785
        %v4854 = vadd.f32 %v4551, %v4698
        %v4855 = vadd.f32 %v4552, %v4787
        %v4856 = vadd.f32 %v4553, %v4701
        %v4857 = vadd.f32 %v4554, %v4790
        %v4858 = vadd.f32 %v4555, %v4703
        %v4859 = vadd.f32 %v4556, %v4792
        %v4860 = vadd.f32 %v4557, %v4706
        %v4861 = vadd.f32 %v4558, %v4795
        %v4862 = vadd.f32 %v4559, %v4708
        %v4863 = vadd.f32 %v4560, %v4797
        %v4864 = vadd.f32 %v4561, %v4711
        %v4865 = vadd.f32 %v4562, %v4800
        %v4866 = vadd.f32 %v4563, %v4713
        %v4867 = vadd.f32 %v4564, %v4802
        %4868 = vst [vmem:[%s274] sm:$0xff] %v4804
        %4869 = vst [vmem:[%s274 + $0x8] sm:$0xff] %v4805
        %4870 = vst [vmem:[%s274 + $0x10] sm:$0xff] %v4806
        %4871 = vst [vmem:[%s274 + $0x18] sm:$0xff] %v4807
        %4872 = vst [vmem:[%s274 + $0x20] sm:$0xff] %v4808
        %4873 = vst [vmem:[%s274 + $0x28] sm:$0xff] %v4809
        %4874 = vst [vmem:[%s274 + $0x30] sm:$0xff] %v4810
        %4875 = vst [vmem:[%s274 + $0x38] sm:$0xff] %v4811
        %4876 = vst [vmem:[%s274 + $0x40] sm:$0xff] %v4812
        %4877 = vst [vmem:[%s274 + $0x48] sm:$0xff] %v4813
        %4878 = vst [vmem:[%s274 + $0x50] sm:$0xff] %v4814
        %4879 = vst [vmem:[%s274 + $0x58] sm:$0xff] %v4815
        %4880 = vst [vmem:[%s274 + $0x60] sm:$0xff] %v4816
        %4881 = vst [vmem:[%s274 + $0x68] sm:$0xff] %v4817
        %4882 = vst [vmem:[%s274 + $0x70] sm:$0xff] %v4818
        %4883 = vst [vmem:[%s274 + $0x78] sm:$0xff] %v4819
        %4884 = vst [vmem:[%s274 + $0x80] sm:$0xff] %v4820
        %4885 = vst [vmem:[%s274 + $0x88] sm:$0xff] %v4821
        %4886 = vst [vmem:[%s274 + $0x90] sm:$0xff] %v4822
        %4887 = vst [vmem:[%s274 + $0x98] sm:$0xff] %v4823
        %4888 = vst [vmem:[%s274 + $0xa0] sm:$0xff] %v4824
        %4889 = vst [vmem:[%s274 + $0xa8] sm:$0xff] %v4825
        %4890 = vst [vmem:[%s274 + $0xb0] sm:$0xff] %v4826
        %4891 = vst [vmem:[%s274 + $0xb8] sm:$0xff] %v4827
        %4892 = vst [vmem:[%s274 + $0xc0] sm:$0xff] %v4828
        %4893 = vst [vmem:[%s274 + $0xc8] sm:$0xff] %v4829
        %4894 = vst [vmem:[%s274 + $0xd0] sm:$0xff] %v4830
        %4895 = vst [vmem:[%s274 + $0xd8] sm:$0xff] %v4831
        %4896 = vst [vmem:[%s274 + $0xe0] sm:$0xff] %v4832
        %4897 = vst [vmem:[%s274 + $0xe8] sm:$0xff] %v4833
        %4898 = vst [vmem:[%s274 + $0xf0] sm:$0xff] %v4834
        %4899 = vst [vmem:[%s274 + $0xf8] sm:$0xff] %v4835
        %4900 = vst [vmem:[%s274 + $0x100] sm:$0xff] %v4836
        %4901 = vst [vmem:[%s274 + $0x108] sm:$0xff] %v4837
        %4902 = vst [vmem:[%s274 + $0x110] sm:$0xff] %v4838
        %4903 = vst [vmem:[%s274 + $0x118] sm:$0xff] %v4839
        %4904 = vst [vmem:[%s274 + $0x120] sm:$0xff] %v4840
        %4905 = vst [vmem:[%s274 + $0x128] sm:$0xff] %v4841
        %4906 = vst [vmem:[%s274 + $0x130] sm:$0xff] %v4842
        %4907 = vst [vmem:[%s274 + $0x138] sm:$0xff] %v4843
        %4908 = vst [vmem:[%s274 + $0x140] sm:$0xff] %v4844
        %4909 = vst [vmem:[%s274 + $0x148] sm:$0xff] %v4845
        %4910 = vst [vmem:[%s274 + $0x150] sm:$0xff] %v4846
        %4911 = vst [vmem:[%s274 + $0x158] sm:$0xff] %v4847
        %4912 = vst [vmem:[%s274 + $0x160] sm:$0xff] %v4848
        %4913 = vst [vmem:[%s274 + $0x168] sm:$0xff] %v4849
        %4914 = vst [vmem:[%s274 + $0x170] sm:$0xff] %v4850
        %4915 = vst [vmem:[%s274 + $0x178] sm:$0xff] %v4851
        %4916 = vst [vmem:[%s274 + $0x180] sm:$0xff] %v4852
        %4917 = vst [vmem:[%s274 + $0x188] sm:$0xff] %v4853
        %4918 = vst [vmem:[%s274 + $0x190] sm:$0xff] %v4854
        %4919 = vst [vmem:[%s274 + $0x198] sm:$0xff] %v4855
        %4920 = vst [vmem:[%s274 + $0x1a0] sm:$0xff] %v4856
        %4921 = vst [vmem:[%s274 + $0x1a8] sm:$0xff] %v4857
        %4922 = vst [vmem:[%s274 + $0x1b0] sm:$0xff] %v4858
        %4923 = vst [vmem:[%s274 + $0x1b8] sm:$0xff] %v4859
        %4924 = vst [vmem:[%s274 + $0x1c0] sm:$0xff] %v4860
        %4925 = vst [vmem:[%s274 + $0x1c8] sm:$0xff] %v4861
        %4926 = vst [vmem:[%s274 + $0x1d0] sm:$0xff] %v4862
        %4927 = vst [vmem:[%s274 + $0x1d8] sm:$0xff] %v4863
        %4928 = vst [vmem:[%s274 + $0x1e0] sm:$0xff] %v4864
        %4929 = vst [vmem:[%s274 + $0x1e8] sm:$0xff] %v4865
        %4930 = vst [vmem:[%s274 + $0x1f0] sm:$0xff] %v4866
        %4931 = vst [vmem:[%s274 + $0x1f8] sm:$0xff] %v4867
        %v4932 = vld [vmem:[%s4452 + $0x1] sm:$0xff]
        %v4933 = vld [vmem:[%s4452 + $0x9] sm:$0xff]
        %v4934 = vld [vmem:[%s4452 + $0x19] sm:$0xff]
        %v4935 = vld [vmem:[%s4452 + $0x21] sm:$0xff]
        %v4936 = vld [vmem:[%s4452 + $0x31] sm:$0xff]
        %v4937 = vld [vmem:[%s4452 + $0x39] sm:$0xff]
        %v4938 = vld [vmem:[%s4452 + $0x49] sm:$0xff]
        %v4939 = vld [vmem:[%s4452 + $0x51] sm:$0xff]
        %v4940 = vld [vmem:[%s4452 + $0x61] sm:$0xff]
        %v4941 = vld [vmem:[%s4452 + $0x69] sm:$0xff]
        %v4942 = vld [vmem:[%s4452 + $0x79] sm:$0xff]
        %v4943 = vld [vmem:[%s4452 + $0x81] sm:$0xff]
        %v4944 = vld [vmem:[%s4452 + $0x91] sm:$0xff]
        %v4945 = vld [vmem:[%s4452 + $0x99] sm:$0xff]
        %v4946 = vld [vmem:[%s4452 + $0xa9] sm:$0xff]
        %v4947 = vld [vmem:[%s4452 + $0xb1] sm:$0xff]
        %v4948 = vld [vmem:[%s4452 + $0xc1] sm:$0xff]
        %v4949 = vld [vmem:[%s4452 + $0xc9] sm:$0xff]
        %v4950 = vld [vmem:[%s4452 + $0xd9] sm:$0xff]
        %v4951 = vld [vmem:[%s4452 + $0xe1] sm:$0xff]
        %v4952 = vld [vmem:[%s4452 + $0xf1] sm:$0xff]
        %v4953 = vld [vmem:[%s4452 + $0xf9] sm:$0xff]
        %v4954 = vld [vmem:[%s4452 + $0x109] sm:$0xff]
        %v4955 = vld [vmem:[%s4452 + $0x111] sm:$0xff]
        %v4956 = vld [vmem:[%s4452 + $0x121] sm:$0xff]
        %v4957 = vld [vmem:[%s4452 + $0x129] sm:$0xff]
        %v4958 = vld [vmem:[%s4452 + $0x139] sm:$0xff]
        %v4959 = vld [vmem:[%s4452 + $0x141] sm:$0xff]
        %v4960 = vld [vmem:[%s4452 + $0x151] sm:$0xff]
        %v4961 = vld [vmem:[%s4452 + $0x159] sm:$0xff]
        %v4962 = vld [vmem:[%s4452 + $0x169] sm:$0xff]
        %v4963 = vld [vmem:[%s4452 + $0x171] sm:$0xff]
        %v4964 = vpack.c.bf16 %v4933, %v4932
        %v4965 = vpack.c.bf16 %v4935, %v4934
        %v4966 = vpack.c.bf16 %v4937, %v4936
        %v4967 = vpack.c.bf16 %v4939, %v4938
        %v4968 = vpack.c.bf16 %v4941, %v4940
        %v4969 = vpack.c.bf16 %v4943, %v4942
        %v4970 = vpack.c.bf16 %v4945, %v4944
        %v4971 = vpack.c.bf16 %v4947, %v4946
        %v4972 = vpack.c.bf16 %v4949, %v4948
        %v4973 = vpack.c.bf16 %v4951, %v4950
        %v4974 = vpack.c.bf16 %v4953, %v4952
        %v4975 = vpack.c.bf16 %v4955, %v4954
        %v4976 = vpack.c.bf16 %v4957, %v4956
        %v4977 = vpack.c.bf16 %v4959, %v4958
        %v4978 = vpack.c.bf16 %v4961, %v4960
        %v4979 = vpack.c.bf16 %v4963, %v4962
        %v4980 = vld [vmem:[%s274] sm:$0xff]
        %v4981 = vld [vmem:[%s274 + $0x8] sm:$0xff]
        %v4982 = vld [vmem:[%s274 + $0x10] sm:$0xff]
        %v4983 = vld [vmem:[%s274 + $0x18] sm:$0xff]
        %v4984 = vld [vmem:[%s274 + $0x20] sm:$0xff]
        %v4985 = vld [vmem:[%s274 + $0x28] sm:$0xff]
        %v4986 = vld [vmem:[%s274 + $0x30] sm:$0xff]
        %v4987 = vld [vmem:[%s274 + $0x38] sm:$0xff]
        %v4988 = vld [vmem:[%s274 + $0x40] sm:$0xff]
        %v4989 = vld [vmem:[%s274 + $0x48] sm:$0xff]
        %v4990 = vld [vmem:[%s274 + $0x50] sm:$0xff]
        %v4991 = vld [vmem:[%s274 + $0x58] sm:$0xff]
        %v4992 = vld [vmem:[%s274 + $0x60] sm:$0xff]
        %v4993 = vld [vmem:[%s274 + $0x68] sm:$0xff]
        %v4994 = vld [vmem:[%s274 + $0x70] sm:$0xff]
        %v4995 = vld [vmem:[%s274 + $0x78] sm:$0xff]
        %v4996 = vld [vmem:[%s274 + $0x80] sm:$0xff]
        %v4997 = vld [vmem:[%s274 + $0x88] sm:$0xff]
        %v4998 = vld [vmem:[%s274 + $0x90] sm:$0xff]
        %v4999 = vld [vmem:[%s274 + $0x98] sm:$0xff]
        %v5000 = vld [vmem:[%s274 + $0xa0] sm:$0xff]
        %v5001 = vld [vmem:[%s274 + $0xa8] sm:$0xff]
        %v5002 = vld [vmem:[%s274 + $0xb0] sm:$0xff]
        %v5003 = vld [vmem:[%s274 + $0xb8] sm:$0xff]
        %v5004 = vld [vmem:[%s274 + $0xc0] sm:$0xff]
        %v5005 = vld [vmem:[%s274 + $0xc8] sm:$0xff]
        %v5006 = vld [vmem:[%s274 + $0xd0] sm:$0xff]
        %v5007 = vld [vmem:[%s274 + $0xd8] sm:$0xff]
        %v5008 = vld [vmem:[%s274 + $0xe0] sm:$0xff]
        %v5009 = vld [vmem:[%s274 + $0xe8] sm:$0xff]
        %v5010 = vld [vmem:[%s274 + $0xf0] sm:$0xff]
        %v5011 = vld [vmem:[%s274 + $0xf8] sm:$0xff]
        %v5012 = vld [vmem:[%s274 + $0x100] sm:$0xff]
        %v5013 = vld [vmem:[%s274 + $0x108] sm:$0xff]
        %v5014 = vld [vmem:[%s274 + $0x110] sm:$0xff]
        %v5015 = vld [vmem:[%s274 + $0x118] sm:$0xff]
        %v5016 = vld [vmem:[%s274 + $0x120] sm:$0xff]
        %v5017 = vld [vmem:[%s274 + $0x128] sm:$0xff]
        %v5018 = vld [vmem:[%s274 + $0x130] sm:$0xff]
        %v5019 = vld [vmem:[%s274 + $0x138] sm:$0xff]
        %v5020 = vld [vmem:[%s274 + $0x140] sm:$0xff]
        %v5021 = vld [vmem:[%s274 + $0x148] sm:$0xff]
        %v5022 = vld [vmem:[%s274 + $0x150] sm:$0xff]
        %v5023 = vld [vmem:[%s274 + $0x158] sm:$0xff]
        %v5024 = vld [vmem:[%s274 + $0x160] sm:$0xff]
        %v5025 = vld [vmem:[%s274 + $0x168] sm:$0xff]
        %v5026 = vld [vmem:[%s274 + $0x170] sm:$0xff]
        %v5027 = vld [vmem:[%s274 + $0x178] sm:$0xff]
        %v5028 = vld [vmem:[%s274 + $0x180] sm:$0xff]
        %v5029 = vld [vmem:[%s274 + $0x188] sm:$0xff]
        %v5030 = vld [vmem:[%s274 + $0x190] sm:$0xff]
        %v5031 = vld [vmem:[%s274 + $0x198] sm:$0xff]
        %v5032 = vld [vmem:[%s274 + $0x1a0] sm:$0xff]
        %v5033 = vld [vmem:[%s274 + $0x1a8] sm:$0xff]
        %v5034 = vld [vmem:[%s274 + $0x1b0] sm:$0xff]
        %v5035 = vld [vmem:[%s274 + $0x1b8] sm:$0xff]
        %v5036 = vld [vmem:[%s274 + $0x1c0] sm:$0xff]
        %v5037 = vld [vmem:[%s274 + $0x1c8] sm:$0xff]
        %v5038 = vld [vmem:[%s274 + $0x1d0] sm:$0xff]
        %v5039 = vld [vmem:[%s274 + $0x1d8] sm:$0xff]
        %v5040 = vld [vmem:[%s274 + $0x1e0] sm:$0xff]
        %v5041 = vld [vmem:[%s274 + $0x1e8] sm:$0xff]
        %v5042 = vld [vmem:[%s274 + $0x1f0] sm:$0xff]
        %v5043 = vld [vmem:[%s274 + $0x1f8] sm:$0xff]
        %s5044 = scalar_lea.vmem [#allocation3], 112
        %v5045 = vld [vmem:[%s5044] sm:$0xff]
        %v5046 = vld [vmem:[%s5044 + $0x8] sm:$0xff]
        %v5049 = vunpack.c.l.b16 %v5045
        %v5050 = vunpack.c.h.b16 %v5045
        %v5051 = vunpack.c.l.b16 %v5046
        %v5052 = vunpack.c.h.b16 %v5046
        %v5053 = vpack.c.b16 %v5051, %v5049
        %v5054 = vpack.c.b16 %v5052, %v5050
        %v5058 = vsel %vm487, %v4964, 0
        %v5061 = vsel %vm487, %v4965, 0
        %v5064 = vsel %vm487, %v4966, 0
        %v5067 = vsel %vm487, %v4967, 0
        %v5070 = vsel %vm487, %v4968, 0
        %v5073 = vsel %vm487, %v4969, 0
        %v5076 = vsel %vm487, %v4970, 0
        %v5079 = vsel %vm487, %v4971, 0
        %v5082 = vsel %vm487, %v4972, 0
        %v5085 = vsel %vm487, %v4973, 0
        %v5088 = vsel %vm487, %v4974, 0
        %v5091 = vsel %vm487, %v4975, 0
        %v5094 = vsel %vm487, %v4976, 0
        %v5097 = vsel %vm487, %v4977, 0
        %v5100 = vsel %vm487, %v4978, 0
        %v5103 = vsel %vm487, %v4979, 0
        %5105 = vmatpush.bf16.msra.mxu0 0
        %5106 = vmatpush.bf16.msra.mxu0 0
        %5107 = vmatpush.bf16.msra.mxu0 0
        %5108 = vmatpush.bf16.msra.mxu0 0
        %5109 = vmatpush.bf16.msra.mxu0 0
        %5110 = vmatpush.bf16.msra.mxu0 0
        %5111 = vmatpush.bf16.msra.mxu0 0
        %5112 = vmatpush.bf16.msra.mxu0 %v5053
        %5113 = vmatmul.bf16.gmra.mxu0 %v5058
        %v5114 = vpop.f32.mrf.mxu0
        %v5115 = vadd.f32 0.0, %v5114
        %v5116 = vpop.f32.mrf.mxu0
        %v5117 = vadd.f32 0.0, %v5116
        %5118 = vmatmul.bf16.gmra.mxu0 %v5061
        %v5119 = vpop.f32.mrf.mxu0
        %v5120 = vadd.f32 0.0, %v5119
        %v5121 = vpop.f32.mrf.mxu0
        %v5122 = vadd.f32 0.0, %v5121
        %5123 = vmatmul.bf16.gmra.mxu0 %v5064
        %v5124 = vpop.f32.mrf.mxu0
        %v5125 = vadd.f32 0.0, %v5124
        %v5126 = vpop.f32.mrf.mxu0
        %v5127 = vadd.f32 0.0, %v5126
        %5128 = vmatmul.bf16.gmra.mxu0 %v5067
        %v5129 = vpop.f32.mrf.mxu0
        %v5130 = vadd.f32 0.0, %v5129
        %v5131 = vpop.f32.mrf.mxu0
        %v5132 = vadd.f32 0.0, %v5131
        %5133 = vmatmul.bf16.gmra.mxu0 %v5070
        %v5134 = vpop.f32.mrf.mxu0
        %v5135 = vadd.f32 0.0, %v5134
        %v5136 = vpop.f32.mrf.mxu0
        %v5137 = vadd.f32 0.0, %v5136
        %5138 = vmatmul.bf16.gmra.mxu0 %v5073
        %v5139 = vpop.f32.mrf.mxu0
        %v5140 = vadd.f32 0.0, %v5139
        %v5141 = vpop.f32.mrf.mxu0
        %v5142 = vadd.f32 0.0, %v5141
        %5143 = vmatmul.bf16.gmra.mxu0 %v5076
        %v5144 = vpop.f32.mrf.mxu0
        %v5145 = vadd.f32 0.0, %v5144
        %v5146 = vpop.f32.mrf.mxu0
        %v5147 = vadd.f32 0.0, %v5146
        %5148 = vmatmul.bf16.gmra.mxu0 %v5079
        %v5149 = vpop.f32.mrf.mxu0
        %v5150 = vadd.f32 0.0, %v5149
        %v5151 = vpop.f32.mrf.mxu0
        %v5152 = vadd.f32 0.0, %v5151
        %5153 = vmatmul.bf16.gmra.mxu0 %v5082
        %v5154 = vpop.f32.mrf.mxu0
        %v5155 = vadd.f32 0.0, %v5154
        %v5156 = vpop.f32.mrf.mxu0
        %v5157 = vadd.f32 0.0, %v5156
        %5158 = vmatmul.bf16.gmra.mxu0 %v5085
        %v5159 = vpop.f32.mrf.mxu0
        %v5160 = vadd.f32 0.0, %v5159
        %v5161 = vpop.f32.mrf.mxu0
        %v5162 = vadd.f32 0.0, %v5161
        %5163 = vmatmul.bf16.gmra.mxu0 %v5088
        %v5164 = vpop.f32.mrf.mxu0
        %v5165 = vadd.f32 0.0, %v5164
        %v5166 = vpop.f32.mrf.mxu0
        %v5167 = vadd.f32 0.0, %v5166
        %5168 = vmatmul.bf16.gmra.mxu0 %v5091
        %v5169 = vpop.f32.mrf.mxu0
        %v5170 = vadd.f32 0.0, %v5169
        %v5171 = vpop.f32.mrf.mxu0
        %v5172 = vadd.f32 0.0, %v5171
        %5173 = vmatmul.bf16.gmra.mxu0 %v5094
        %v5174 = vpop.f32.mrf.mxu0
        %v5175 = vadd.f32 0.0, %v5174
        %v5176 = vpop.f32.mrf.mxu0
        %v5177 = vadd.f32 0.0, %v5176
        %5178 = vmatmul.bf16.gmra.mxu0 %v5097
        %v5179 = vpop.f32.mrf.mxu0
        %v5180 = vadd.f32 0.0, %v5179
        %v5181 = vpop.f32.mrf.mxu0
        %v5182 = vadd.f32 0.0, %v5181
        %5183 = vmatmul.bf16.gmra.mxu0 %v5100
        %v5184 = vpop.f32.mrf.mxu0
        %v5185 = vadd.f32 0.0, %v5184
        %v5186 = vpop.f32.mrf.mxu0
        %v5187 = vadd.f32 0.0, %v5186
        %5188 = vmatmul.bf16.gmra.mxu0 %v5103
        %v5189 = vpop.f32.mrf.mxu0
        %v5190 = vadd.f32 0.0, %v5189
        %v5191 = vpop.f32.mrf.mxu0
        %v5192 = vadd.f32 0.0, %v5191
        %5193 = vdwg.mxu0
        %5194 = vmatpush.bf16.msra.mxu0 0
        %5195 = vmatpush.bf16.msra.mxu0 0
        %5196 = vmatpush.bf16.msra.mxu0 0
        %5197 = vmatpush.bf16.msra.mxu0 0
        %5198 = vmatpush.bf16.msra.mxu0 0
        %5199 = vmatpush.bf16.msra.mxu0 0
        %5200 = vmatpush.bf16.msra.mxu0 0
        %5201 = vmatpush.bf16.msra.mxu0 %v5054
        %5202 = vmatmul.bf16.gmra.mxu0 %v5058
        %v5203 = vpop.f32.mrf.mxu0
        %v5204 = vadd.f32 0.0, %v5203
        %v5205 = vpop.f32.mrf.mxu0
        %v5206 = vadd.f32 0.0, %v5205
        %5207 = vmatmul.bf16.gmra.mxu0 %v5061
        %v5208 = vpop.f32.mrf.mxu0
        %v5209 = vadd.f32 0.0, %v5208
        %v5210 = vpop.f32.mrf.mxu0
        %v5211 = vadd.f32 0.0, %v5210
        %5212 = vmatmul.bf16.gmra.mxu0 %v5064
        %v5213 = vpop.f32.mrf.mxu0
        %v5214 = vadd.f32 0.0, %v5213
        %v5215 = vpop.f32.mrf.mxu0
        %v5216 = vadd.f32 0.0, %v5215
        %5217 = vmatmul.bf16.gmra.mxu0 %v5067
        %v5218 = vpop.f32.mrf.mxu0
        %v5219 = vadd.f32 0.0, %v5218
        %v5220 = vpop.f32.mrf.mxu0
        %v5221 = vadd.f32 0.0, %v5220
        %5222 = vmatmul.bf16.gmra.mxu0 %v5070
        %v5223 = vpop.f32.mrf.mxu0
        %v5224 = vadd.f32 0.0, %v5223
        %v5225 = vpop.f32.mrf.mxu0
        %v5226 = vadd.f32 0.0, %v5225
        %5227 = vmatmul.bf16.gmra.mxu0 %v5073
        %v5228 = vpop.f32.mrf.mxu0
        %v5229 = vadd.f32 0.0, %v5228
        %v5230 = vpop.f32.mrf.mxu0
        %v5231 = vadd.f32 0.0, %v5230
        %5232 = vmatmul.bf16.gmra.mxu0 %v5076
        %v5233 = vpop.f32.mrf.mxu0
        %v5234 = vadd.f32 0.0, %v5233
        %v5235 = vpop.f32.mrf.mxu0
        %v5236 = vadd.f32 0.0, %v5235
        %5237 = vmatmul.bf16.gmra.mxu0 %v5079
        %v5238 = vpop.f32.mrf.mxu0
        %v5239 = vadd.f32 0.0, %v5238
        %v5240 = vpop.f32.mrf.mxu0
        %v5241 = vadd.f32 0.0, %v5240
        %5242 = vmatmul.bf16.gmra.mxu0 %v5082
        %v5243 = vpop.f32.mrf.mxu0
        %v5244 = vadd.f32 0.0, %v5243
        %v5245 = vpop.f32.mrf.mxu0
        %v5246 = vadd.f32 0.0, %v5245
        %5247 = vmatmul.bf16.gmra.mxu0 %v5085
        %v5248 = vpop.f32.mrf.mxu0
        %v5249 = vadd.f32 0.0, %v5248
        %v5250 = vpop.f32.mrf.mxu0
        %v5251 = vadd.f32 0.0, %v5250
        %5252 = vmatmul.bf16.gmra.mxu0 %v5088
        %v5253 = vpop.f32.mrf.mxu0
        %v5254 = vadd.f32 0.0, %v5253
        %v5255 = vpop.f32.mrf.mxu0
        %v5256 = vadd.f32 0.0, %v5255
        %5257 = vmatmul.bf16.gmra.mxu0 %v5091
        %v5258 = vpop.f32.mrf.mxu0
        %v5259 = vadd.f32 0.0, %v5258
        %v5260 = vpop.f32.mrf.mxu0
        %v5261 = vadd.f32 0.0, %v5260
        %5262 = vmatmul.bf16.gmra.mxu0 %v5094
        %v5263 = vpop.f32.mrf.mxu0
        %v5264 = vadd.f32 0.0, %v5263
        %v5265 = vpop.f32.mrf.mxu0
        %v5266 = vadd.f32 0.0, %v5265
        %5267 = vmatmul.bf16.gmra.mxu0 %v5097
        %v5268 = vpop.f32.mrf.mxu0
        %v5269 = vadd.f32 0.0, %v5268
        %v5270 = vpop.f32.mrf.mxu0
        %v5271 = vadd.f32 0.0, %v5270
        %5272 = vmatmul.bf16.gmra.mxu0 %v5100
        %v5273 = vpop.f32.mrf.mxu0
        %v5274 = vadd.f32 0.0, %v5273
        %v5275 = vpop.f32.mrf.mxu0
        %v5276 = vadd.f32 0.0, %v5275
        %5277 = vmatmul.bf16.gmra.mxu0 %v5103
        %v5278 = vpop.f32.mrf.mxu0
        %v5279 = vadd.f32 0.0, %v5278
        %v5280 = vpop.f32.mrf.mxu0
        %v5281 = vadd.f32 0.0, %v5280
        %5282 = vdwg.mxu0
        %v5283 = vadd.f32 %v4980, %v5115
        %v5284 = vadd.f32 %v4981, %v5204
        %v5285 = vadd.f32 %v4982, %v5117
        %v5286 = vadd.f32 %v4983, %v5206
        %v5287 = vadd.f32 %v4984, %v5120
        %v5288 = vadd.f32 %v4985, %v5209
        %v5289 = vadd.f32 %v4986, %v5122
        %v5290 = vadd.f32 %v4987, %v5211
        %v5291 = vadd.f32 %v4988, %v5125
        %v5292 = vadd.f32 %v4989, %v5214
        %v5293 = vadd.f32 %v4990, %v5127
        %v5294 = vadd.f32 %v4991, %v5216
        %v5295 = vadd.f32 %v4992, %v5130
        %v5296 = vadd.f32 %v4993, %v5219
        %v5297 = vadd.f32 %v4994, %v5132
        %v5298 = vadd.f32 %v4995, %v5221
        %v5299 = vadd.f32 %v4996, %v5135
        %v5300 = vadd.f32 %v4997, %v5224
        %v5301 = vadd.f32 %v4998, %v5137
        %v5302 = vadd.f32 %v4999, %v5226
        %v5303 = vadd.f32 %v5000, %v5140
        %v5304 = vadd.f32 %v5001, %v5229
        %v5305 = vadd.f32 %v5002, %v5142
        %v5306 = vadd.f32 %v5003, %v5231
        %v5307 = vadd.f32 %v5004, %v5145
        %v5308 = vadd.f32 %v5005, %v5234
        %v5309 = vadd.f32 %v5006, %v5147
        %v5310 = vadd.f32 %v5007, %v5236
        %v5311 = vadd.f32 %v5008, %v5150
        %v5312 = vadd.f32 %v5009, %v5239
        %v5313 = vadd.f32 %v5010, %v5152
        %v5314 = vadd.f32 %v5011, %v5241
        %v5315 = vadd.f32 %v5012, %v5155
        %v5316 = vadd.f32 %v5013, %v5244
        %v5317 = vadd.f32 %v5014, %v5157
        %v5318 = vadd.f32 %v5015, %v5246
        %v5319 = vadd.f32 %v5016, %v5160
        %v5320 = vadd.f32 %v5017, %v5249
        %v5321 = vadd.f32 %v5018, %v5162
        %v5322 = vadd.f32 %v5019, %v5251
        %v5323 = vadd.f32 %v5020, %v5165
        %v5324 = vadd.f32 %v5021, %v5254
        %v5325 = vadd.f32 %v5022, %v5167
        %v5326 = vadd.f32 %v5023, %v5256
        %v5327 = vadd.f32 %v5024, %v5170
        %v5328 = vadd.f32 %v5025, %v5259
        %v5329 = vadd.f32 %v5026, %v5172
        %v5330 = vadd.f32 %v5027, %v5261
        %v5331 = vadd.f32 %v5028, %v5175
        %v5332 = vadd.f32 %v5029, %v5264
        %v5333 = vadd.f32 %v5030, %v5177
        %v5334 = vadd.f32 %v5031, %v5266
        %v5335 = vadd.f32 %v5032, %v5180
        %v5336 = vadd.f32 %v5033, %v5269
        %v5337 = vadd.f32 %v5034, %v5182
        %v5338 = vadd.f32 %v5035, %v5271
        %v5339 = vadd.f32 %v5036, %v5185
        %v5340 = vadd.f32 %v5037, %v5274
        %v5341 = vadd.f32 %v5038, %v5187
        %v5342 = vadd.f32 %v5039, %v5276
        %v5343 = vadd.f32 %v5040, %v5190
        %v5344 = vadd.f32 %v5041, %v5279
        %v5345 = vadd.f32 %v5042, %v5192
        %v5346 = vadd.f32 %v5043, %v5281
        %5347 = vst [vmem:[%s274] sm:$0xff] %v5283
        %5348 = vst [vmem:[%s274 + $0x8] sm:$0xff] %v5284
        %5349 = vst [vmem:[%s274 + $0x10] sm:$0xff] %v5285
        %5350 = vst [vmem:[%s274 + $0x18] sm:$0xff] %v5286
        %5351 = vst [vmem:[%s274 + $0x20] sm:$0xff] %v5287
        %5352 = vst [vmem:[%s274 + $0x28] sm:$0xff] %v5288
        %5353 = vst [vmem:[%s274 + $0x30] sm:$0xff] %v5289
        %5354 = vst [vmem:[%s274 + $0x38] sm:$0xff] %v5290
        %5355 = vst [vmem:[%s274 + $0x40] sm:$0xff] %v5291
        %5356 = vst [vmem:[%s274 + $0x48] sm:$0xff] %v5292
        %5357 = vst [vmem:[%s274 + $0x50] sm:$0xff] %v5293
        %5358 = vst [vmem:[%s274 + $0x58] sm:$0xff] %v5294
        %5359 = vst [vmem:[%s274 + $0x60] sm:$0xff] %v5295
        %5360 = vst [vmem:[%s274 + $0x68] sm:$0xff] %v5296
        %5361 = vst [vmem:[%s274 + $0x70] sm:$0xff] %v5297
        %5362 = vst [vmem:[%s274 + $0x78] sm:$0xff] %v5298
        %5363 = vst [vmem:[%s274 + $0x80] sm:$0xff] %v5299
        %5364 = vst [vmem:[%s274 + $0x88] sm:$0xff] %v5300
        %5365 = vst [vmem:[%s274 + $0x90] sm:$0xff] %v5301
        %5366 = vst [vmem:[%s274 + $0x98] sm:$0xff] %v5302
        %5367 = vst [vmem:[%s274 + $0xa0] sm:$0xff] %v5303
        %5368 = vst [vmem:[%s274 + $0xa8] sm:$0xff] %v5304
        %5369 = vst [vmem:[%s274 + $0xb0] sm:$0xff] %v5305
        %5370 = vst [vmem:[%s274 + $0xb8] sm:$0xff] %v5306
        %5371 = vst [vmem:[%s274 + $0xc0] sm:$0xff] %v5307
        %5372 = vst [vmem:[%s274 + $0xc8] sm:$0xff] %v5308
        %5373 = vst [vmem:[%s274 + $0xd0] sm:$0xff] %v5309
        %5374 = vst [vmem:[%s274 + $0xd8] sm:$0xff] %v5310
        %5375 = vst [vmem:[%s274 + $0xe0] sm:$0xff] %v5311
        %5376 = vst [vmem:[%s274 + $0xe8] sm:$0xff] %v5312
        %5377 = vst [vmem:[%s274 + $0xf0] sm:$0xff] %v5313
        %5378 = vst [vmem:[%s274 + $0xf8] sm:$0xff] %v5314
        %5379 = vst [vmem:[%s274 + $0x100] sm:$0xff] %v5315
        %5380 = vst [vmem:[%s274 + $0x108] sm:$0xff] %v5316
        %5381 = vst [vmem:[%s274 + $0x110] sm:$0xff] %v5317
        %5382 = vst [vmem:[%s274 + $0x118] sm:$0xff] %v5318
        %5383 = vst [vmem:[%s274 + $0x120] sm:$0xff] %v5319
        %5384 = vst [vmem:[%s274 + $0x128] sm:$0xff] %v5320
        %5385 = vst [vmem:[%s274 + $0x130] sm:$0xff] %v5321
        %5386 = vst [vmem:[%s274 + $0x138] sm:$0xff] %v5322
        %5387 = vst [vmem:[%s274 + $0x140] sm:$0xff] %v5323
        %5388 = vst [vmem:[%s274 + $0x148] sm:$0xff] %v5324
        %5389 = vst [vmem:[%s274 + $0x150] sm:$0xff] %v5325
        %5390 = vst [vmem:[%s274 + $0x158] sm:$0xff] %v5326
        %5391 = vst [vmem:[%s274 + $0x160] sm:$0xff] %v5327
        %5392 = vst [vmem:[%s274 + $0x168] sm:$0xff] %v5328
        %5393 = vst [vmem:[%s274 + $0x170] sm:$0xff] %v5329
        %5394 = vst [vmem:[%s274 + $0x178] sm:$0xff] %v5330
        %5395 = vst [vmem:[%s274 + $0x180] sm:$0xff] %v5331
        %5396 = vst [vmem:[%s274 + $0x188] sm:$0xff] %v5332
        %5397 = vst [vmem:[%s274 + $0x190] sm:$0xff] %v5333
        %5398 = vst [vmem:[%s274 + $0x198] sm:$0xff] %v5334
        %5399 = vst [vmem:[%s274 + $0x1a0] sm:$0xff] %v5335
        %5400 = vst [vmem:[%s274 + $0x1a8] sm:$0xff] %v5336
        %5401 = vst [vmem:[%s274 + $0x1b0] sm:$0xff] %v5337
        %5402 = vst [vmem:[%s274 + $0x1b8] sm:$0xff] %v5338
        %5403 = vst [vmem:[%s274 + $0x1c0] sm:$0xff] %v5339
        %5404 = vst [vmem:[%s274 + $0x1c8] sm:$0xff] %v5340
        %5405 = vst [vmem:[%s274 + $0x1d0] sm:$0xff] %v5341
        %5406 = vst [vmem:[%s274 + $0x1d8] sm:$0xff] %v5342
        %5407 = vst [vmem:[%s274 + $0x1e0] sm:$0xff] %v5343
        %5408 = vst [vmem:[%s274 + $0x1e8] sm:$0xff] %v5344
        %5409 = vst [vmem:[%s274 + $0x1f0] sm:$0xff] %v5345
        %5410 = vst [vmem:[%s274 + $0x1f8] sm:$0xff] %v5346
        %v5411 = vld [vmem:[%s4452 + $0x2] sm:$0xff]
        %v5412 = vld [vmem:[%s4452 + $0xa] sm:$0xff]
        %v5413 = vld [vmem:[%s4452 + $0x1a] sm:$0xff]
        %v5414 = vld [vmem:[%s4452 + $0x22] sm:$0xff]
        %v5415 = vld [vmem:[%s4452 + $0x32] sm:$0xff]
        %v5416 = vld [vmem:[%s4452 + $0x3a] sm:$0xff]
        %v5417 = vld [vmem:[%s4452 + $0x4a] sm:$0xff]
        %v5418 = vld [vmem:[%s4452 + $0x52] sm:$0xff]
        %v5419 = vld [vmem:[%s4452 + $0x62] sm:$0xff]
        %v5420 = vld [vmem:[%s4452 + $0x6a] sm:$0xff]
        %v5421 = vld [vmem:[%s4452 + $0x7a] sm:$0xff]
        %v5422 = vld [vmem:[%s4452 + $0x82] sm:$0xff]
        %v5423 = vld [vmem:[%s4452 + $0x92] sm:$0xff]
        %v5424 = vld [vmem:[%s4452 + $0x9a] sm:$0xff]
        %v5425 = vld [vmem:[%s4452 + $0xaa] sm:$0xff]
        %v5426 = vld [vmem:[%s4452 + $0xb2] sm:$0xff]
        %v5427 = vld [vmem:[%s4452 + $0xc2] sm:$0xff]
        %v5428 = vld [vmem:[%s4452 + $0xca] sm:$0xff]
        %v5429 = vld [vmem:[%s4452 + $0xda] sm:$0xff]
        %v5430 = vld [vmem:[%s4452 + $0xe2] sm:$0xff]
        %v5431 = vld [vmem:[%s4452 + $0xf2] sm:$0xff]
        %v5432 = vld [vmem:[%s4452 + $0xfa] sm:$0xff]
        %v5433 = vld [vmem:[%s4452 + $0x10a] sm:$0xff]
        %v5434 = vld [vmem:[%s4452 + $0x112] sm:$0xff]
        %v5435 = vld [vmem:[%s4452 + $0x122] sm:$0xff]
        %v5436 = vld [vmem:[%s4452 + $0x12a] sm:$0xff]
        %v5437 = vld [vmem:[%s4452 + $0x13a] sm:$0xff]
        %v5438 = vld [vmem:[%s4452 + $0x142] sm:$0xff]
        %v5439 = vld [vmem:[%s4452 + $0x152] sm:$0xff]
        %v5440 = vld [vmem:[%s4452 + $0x15a] sm:$0xff]
        %v5441 = vld [vmem:[%s4452 + $0x16a] sm:$0xff]
        %v5442 = vld [vmem:[%s4452 + $0x172] sm:$0xff]
        %v5443 = vpack.c.bf16 %v5412, %v5411
        %v5444 = vpack.c.bf16 %v5414, %v5413
        %v5445 = vpack.c.bf16 %v5416, %v5415
        %v5446 = vpack.c.bf16 %v5418, %v5417
        %v5447 = vpack.c.bf16 %v5420, %v5419
        %v5448 = vpack.c.bf16 %v5422, %v5421
        %v5449 = vpack.c.bf16 %v5424, %v5423
        %v5450 = vpack.c.bf16 %v5426, %v5425
        %v5451 = vpack.c.bf16 %v5428, %v5427
        %v5452 = vpack.c.bf16 %v5430, %v5429
        %v5453 = vpack.c.bf16 %v5432, %v5431
        %v5454 = vpack.c.bf16 %v5434, %v5433
        %v5455 = vpack.c.bf16 %v5436, %v5435
        %v5456 = vpack.c.bf16 %v5438, %v5437
        %v5457 = vpack.c.bf16 %v5440, %v5439
        %v5458 = vpack.c.bf16 %v5442, %v5441
        %v5459 = vld [vmem:[%s274] sm:$0xff]
        %v5460 = vld [vmem:[%s274 + $0x8] sm:$0xff]
        %v5461 = vld [vmem:[%s274 + $0x10] sm:$0xff]
        %v5462 = vld [vmem:[%s274 + $0x18] sm:$0xff]
        %v5463 = vld [vmem:[%s274 + $0x20] sm:$0xff]
        %v5464 = vld [vmem:[%s274 + $0x28] sm:$0xff]
        %v5465 = vld [vmem:[%s274 + $0x30] sm:$0xff]
        %v5466 = vld [vmem:[%s274 + $0x38] sm:$0xff]
        %v5467 = vld [vmem:[%s274 + $0x40] sm:$0xff]
        %v5468 = vld [vmem:[%s274 + $0x48] sm:$0xff]
        %v5469 = vld [vmem:[%s274 + $0x50] sm:$0xff]
        %v5470 = vld [vmem:[%s274 + $0x58] sm:$0xff]
        %v5471 = vld [vmem:[%s274 + $0x60] sm:$0xff]
        %v5472 = vld [vmem:[%s274 + $0x68] sm:$0xff]
        %v5473 = vld [vmem:[%s274 + $0x70] sm:$0xff]
        %v5474 = vld [vmem:[%s274 + $0x78] sm:$0xff]
        %v5475 = vld [vmem:[%s274 + $0x80] sm:$0xff]
        %v5476 = vld [vmem:[%s274 + $0x88] sm:$0xff]
        %v5477 = vld [vmem:[%s274 + $0x90] sm:$0xff]
        %v5478 = vld [vmem:[%s274 + $0x98] sm:$0xff]
        %v5479 = vld [vmem:[%s274 + $0xa0] sm:$0xff]
        %v5480 = vld [vmem:[%s274 + $0xa8] sm:$0xff]
        %v5481 = vld [vmem:[%s274 + $0xb0] sm:$0xff]
        %v5482 = vld [vmem:[%s274 + $0xb8] sm:$0xff]
        %v5483 = vld [vmem:[%s274 + $0xc0] sm:$0xff]
        %v5484 = vld [vmem:[%s274 + $0xc8] sm:$0xff]
        %v5485 = vld [vmem:[%s274 + $0xd0] sm:$0xff]
        %v5486 = vld [vmem:[%s274 + $0xd8] sm:$0xff]
        %v5487 = vld [vmem:[%s274 + $0xe0] sm:$0xff]
        %v5488 = vld [vmem:[%s274 + $0xe8] sm:$0xff]
        %v5489 = vld [vmem:[%s274 + $0xf0] sm:$0xff]
        %v5490 = vld [vmem:[%s274 + $0xf8] sm:$0xff]
        %v5491 = vld [vmem:[%s274 + $0x100] sm:$0xff]
        %v5492 = vld [vmem:[%s274 + $0x108] sm:$0xff]
        %v5493 = vld [vmem:[%s274 + $0x110] sm:$0xff]
        %v5494 = vld [vmem:[%s274 + $0x118] sm:$0xff]
        %v5495 = vld [vmem:[%s274 + $0x120] sm:$0xff]
        %v5496 = vld [vmem:[%s274 + $0x128] sm:$0xff]
        %v5497 = vld [vmem:[%s274 + $0x130] sm:$0xff]
        %v5498 = vld [vmem:[%s274 + $0x138] sm:$0xff]
        %v5499 = vld [vmem:[%s274 + $0x140] sm:$0xff]
        %v5500 = vld [vmem:[%s274 + $0x148] sm:$0xff]
        %v5501 = vld [vmem:[%s274 + $0x150] sm:$0xff]
        %v5502 = vld [vmem:[%s274 + $0x158] sm:$0xff]
        %v5503 = vld [vmem:[%s274 + $0x160] sm:$0xff]
        %v5504 = vld [vmem:[%s274 + $0x168] sm:$0xff]
        %v5505 = vld [vmem:[%s274 + $0x170] sm:$0xff]
        %v5506 = vld [vmem:[%s274 + $0x178] sm:$0xff]
        %v5507 = vld [vmem:[%s274 + $0x180] sm:$0xff]
        %v5508 = vld [vmem:[%s274 + $0x188] sm:$0xff]
        %v5509 = vld [vmem:[%s274 + $0x190] sm:$0xff]
        %v5510 = vld [vmem:[%s274 + $0x198] sm:$0xff]
        %v5511 = vld [vmem:[%s274 + $0x1a0] sm:$0xff]
        %v5512 = vld [vmem:[%s274 + $0x1a8] sm:$0xff]
        %v5513 = vld [vmem:[%s274 + $0x1b0] sm:$0xff]
        %v5514 = vld [vmem:[%s274 + $0x1b8] sm:$0xff]
        %v5515 = vld [vmem:[%s274 + $0x1c0] sm:$0xff]
        %v5516 = vld [vmem:[%s274 + $0x1c8] sm:$0xff]
        %v5517 = vld [vmem:[%s274 + $0x1d0] sm:$0xff]
        %v5518 = vld [vmem:[%s274 + $0x1d8] sm:$0xff]
        %v5519 = vld [vmem:[%s274 + $0x1e0] sm:$0xff]
        %v5520 = vld [vmem:[%s274 + $0x1e8] sm:$0xff]
        %v5521 = vld [vmem:[%s274 + $0x1f0] sm:$0xff]
        %v5522 = vld [vmem:[%s274 + $0x1f8] sm:$0xff]
        %s5523 = scalar_lea.vmem [#allocation3], 128
        %v5524 = vld [vmem:[%s5523] sm:$0xff]
        %v5525 = vld [vmem:[%s5523 + $0x8] sm:$0xff]
        %v5528 = vunpack.c.l.b16 %v5524
        %v5529 = vunpack.c.h.b16 %v5524
        %v5530 = vunpack.c.l.b16 %v5525
        %v5531 = vunpack.c.h.b16 %v5525
        %v5532 = vpack.c.b16 %v5530, %v5528
        %v5533 = vpack.c.b16 %v5531, %v5529
        %v5537 = vsel %vm487, %v5443, 0
        %v5540 = vsel %vm487, %v5444, 0
        %v5543 = vsel %vm487, %v5445, 0
        %v5546 = vsel %vm487, %v5446, 0
        %v5549 = vsel %vm487, %v5447, 0
        %v5552 = vsel %vm487, %v5448, 0
        %v5555 = vsel %vm487, %v5449, 0
        %v5558 = vsel %vm487, %v5450, 0
        %v5561 = vsel %vm487, %v5451, 0
        %v5564 = vsel %vm487, %v5452, 0
        %v5567 = vsel %vm487, %v5453, 0
        %v5570 = vsel %vm487, %v5454, 0
        %v5573 = vsel %vm487, %v5455, 0
        %v5576 = vsel %vm487, %v5456, 0
        %v5579 = vsel %vm487, %v5457, 0
        %v5582 = vsel %vm487, %v5458, 0
        %5584 = vmatpush.bf16.msra.mxu0 0
        %5585 = vmatpush.bf16.msra.mxu0 0
        %5586 = vmatpush.bf16.msra.mxu0 0
        %5587 = vmatpush.bf16.msra.mxu0 0
        %5588 = vmatpush.bf16.msra.mxu0 0
        %5589 = vmatpush.bf16.msra.mxu0 0
        %5590 = vmatpush.bf16.msra.mxu0 0
        %5591 = vmatpush.bf16.msra.mxu0 %v5532
        %5592 = vmatmul.bf16.gmra.mxu0 %v5537
        %v5593 = vpop.f32.mrf.mxu0
        %v5594 = vadd.f32 0.0, %v5593
        %v5595 = vpop.f32.mrf.mxu0
        %v5596 = vadd.f32 0.0, %v5595
        %5597 = vmatmul.bf16.gmra.mxu0 %v5540
        %v5598 = vpop.f32.mrf.mxu0
        %v5599 = vadd.f32 0.0, %v5598
        %v5600 = vpop.f32.mrf.mxu0
        %v5601 = vadd.f32 0.0, %v5600
        %5602 = vmatmul.bf16.gmra.mxu0 %v5543
        %v5603 = vpop.f32.mrf.mxu0
        %v5604 = vadd.f32 0.0, %v5603
        %v5605 = vpop.f32.mrf.mxu0
        %v5606 = vadd.f32 0.0, %v5605
        %5607 = vmatmul.bf16.gmra.mxu0 %v5546
        %v5608 = vpop.f32.mrf.mxu0
        %v5609 = vadd.f32 0.0, %v5608
        %v5610 = vpop.f32.mrf.mxu0
        %v5611 = vadd.f32 0.0, %v5610
        %5612 = vmatmul.bf16.gmra.mxu0 %v5549
        %v5613 = vpop.f32.mrf.mxu0
        %v5614 = vadd.f32 0.0, %v5613
        %v5615 = vpop.f32.mrf.mxu0
        %v5616 = vadd.f32 0.0, %v5615
        %5617 = vmatmul.bf16.gmra.mxu0 %v5552
        %v5618 = vpop.f32.mrf.mxu0
        %v5619 = vadd.f32 0.0, %v5618
        %v5620 = vpop.f32.mrf.mxu0
        %v5621 = vadd.f32 0.0, %v5620
        %5622 = vmatmul.bf16.gmra.mxu0 %v5555
        %v5623 = vpop.f32.mrf.mxu0
        %v5624 = vadd.f32 0.0, %v5623
        %v5625 = vpop.f32.mrf.mxu0
        %v5626 = vadd.f32 0.0, %v5625
        %5627 = vmatmul.bf16.gmra.mxu0 %v5558
        %v5628 = vpop.f32.mrf.mxu0
        %v5629 = vadd.f32 0.0, %v5628
        %v5630 = vpop.f32.mrf.mxu0
        %v5631 = vadd.f32 0.0, %v5630
        %5632 = vmatmul.bf16.gmra.mxu0 %v5561
        %v5633 = vpop.f32.mrf.mxu0
        %v5634 = vadd.f32 0.0, %v5633
        %v5635 = vpop.f32.mrf.mxu0
        %v5636 = vadd.f32 0.0, %v5635
        %5637 = vmatmul.bf16.gmra.mxu0 %v5564
        %v5638 = vpop.f32.mrf.mxu0
        %v5639 = vadd.f32 0.0, %v5638
        %v5640 = vpop.f32.mrf.mxu0
        %v5641 = vadd.f32 0.0, %v5640
        %5642 = vmatmul.bf16.gmra.mxu0 %v5567
        %v5643 = vpop.f32.mrf.mxu0
        %v5644 = vadd.f32 0.0, %v5643
        %v5645 = vpop.f32.mrf.mxu0
        %v5646 = vadd.f32 0.0, %v5645
        %5647 = vmatmul.bf16.gmra.mxu0 %v5570
        %v5648 = vpop.f32.mrf.mxu0
        %v5649 = vadd.f32 0.0, %v5648
        %v5650 = vpop.f32.mrf.mxu0
        %v5651 = vadd.f32 0.0, %v5650
        %5652 = vmatmul.bf16.gmra.mxu0 %v5573
        %v5653 = vpop.f32.mrf.mxu0
        %v5654 = vadd.f32 0.0, %v5653
        %v5655 = vpop.f32.mrf.mxu0
        %v5656 = vadd.f32 0.0, %v5655
        %5657 = vmatmul.bf16.gmra.mxu0 %v5576
        %v5658 = vpop.f32.mrf.mxu0
        %v5659 = vadd.f32 0.0, %v5658
        %v5660 = vpop.f32.mrf.mxu0
        %v5661 = vadd.f32 0.0, %v5660
        %5662 = vmatmul.bf16.gmra.mxu0 %v5579
        %v5663 = vpop.f32.mrf.mxu0
        %v5664 = vadd.f32 0.0, %v5663
        %v5665 = vpop.f32.mrf.mxu0
        %v5666 = vadd.f32 0.0, %v5665
        %5667 = vmatmul.bf16.gmra.mxu0 %v5582
        %v5668 = vpop.f32.mrf.mxu0
        %v5669 = vadd.f32 0.0, %v5668
        %v5670 = vpop.f32.mrf.mxu0
        %v5671 = vadd.f32 0.0, %v5670
        %5672 = vdwg.mxu0
        %5673 = vmatpush.bf16.msra.mxu0 0
        %5674 = vmatpush.bf16.msra.mxu0 0
        %5675 = vmatpush.bf16.msra.mxu0 0
        %5676 = vmatpush.bf16.msra.mxu0 0
        %5677 = vmatpush.bf16.msra.mxu0 0
        %5678 = vmatpush.bf16.msra.mxu0 0
        %5679 = vmatpush.bf16.msra.mxu0 0
        %5680 = vmatpush.bf16.msra.mxu0 %v5533
        %5681 = vmatmul.bf16.gmra.mxu0 %v5537
        %v5682 = vpop.f32.mrf.mxu0
        %v5683 = vadd.f32 0.0, %v5682
        %v5684 = vpop.f32.mrf.mxu0
        %v5685 = vadd.f32 0.0, %v5684
        %5686 = vmatmul.bf16.gmra.mxu0 %v5540
        %v5687 = vpop.f32.mrf.mxu0
        %v5688 = vadd.f32 0.0, %v5687
        %v5689 = vpop.f32.mrf.mxu0
        %v5690 = vadd.f32 0.0, %v5689
        %5691 = vmatmul.bf16.gmra.mxu0 %v5543
        %v5692 = vpop.f32.mrf.mxu0
        %v5693 = vadd.f32 0.0, %v5692
        %v5694 = vpop.f32.mrf.mxu0
        %v5695 = vadd.f32 0.0, %v5694
        %5696 = vmatmul.bf16.gmra.mxu0 %v5546
        %v5697 = vpop.f32.mrf.mxu0
        %v5698 = vadd.f32 0.0, %v5697
        %v5699 = vpop.f32.mrf.mxu0
        %v5700 = vadd.f32 0.0, %v5699
        %5701 = vmatmul.bf16.gmra.mxu0 %v5549
        %v5702 = vpop.f32.mrf.mxu0
        %v5703 = vadd.f32 0.0, %v5702
        %v5704 = vpop.f32.mrf.mxu0
        %v5705 = vadd.f32 0.0, %v5704
        %5706 = vmatmul.bf16.gmra.mxu0 %v5552
        %v5707 = vpop.f32.mrf.mxu0
        %v5708 = vadd.f32 0.0, %v5707
        %v5709 = vpop.f32.mrf.mxu0
        %v5710 = vadd.f32 0.0, %v5709
        %5711 = vmatmul.bf16.gmra.mxu0 %v5555
        %v5712 = vpop.f32.mrf.mxu0
        %v5713 = vadd.f32 0.0, %v5712
        %v5714 = vpop.f32.mrf.mxu0
        %v5715 = vadd.f32 0.0, %v5714
        %5716 = vmatmul.bf16.gmra.mxu0 %v5558
        %v5717 = vpop.f32.mrf.mxu0
        %v5718 = vadd.f32 0.0, %v5717
        %v5719 = vpop.f32.mrf.mxu0
        %v5720 = vadd.f32 0.0, %v5719
        %5721 = vmatmul.bf16.gmra.mxu0 %v5561
        %v5722 = vpop.f32.mrf.mxu0
        %v5723 = vadd.f32 0.0, %v5722
        %v5724 = vpop.f32.mrf.mxu0
        %v5725 = vadd.f32 0.0, %v5724
        %5726 = vmatmul.bf16.gmra.mxu0 %v5564
        %v5727 = vpop.f32.mrf.mxu0
        %v5728 = vadd.f32 0.0, %v5727
        %v5729 = vpop.f32.mrf.mxu0
        %v5730 = vadd.f32 0.0, %v5729
        %5731 = vmatmul.bf16.gmra.mxu0 %v5567
        %v5732 = vpop.f32.mrf.mxu0
        %v5733 = vadd.f32 0.0, %v5732
        %v5734 = vpop.f32.mrf.mxu0
        %v5735 = vadd.f32 0.0, %v5734
        %5736 = vmatmul.bf16.gmra.mxu0 %v5570
        %v5737 = vpop.f32.mrf.mxu0
        %v5738 = vadd.f32 0.0, %v5737
        %v5739 = vpop.f32.mrf.mxu0
        %v5740 = vadd.f32 0.0, %v5739
        %5741 = vmatmul.bf16.gmra.mxu0 %v5573
        %v5742 = vpop.f32.mrf.mxu0
        %v5743 = vadd.f32 0.0, %v5742
        %v5744 = vpop.f32.mrf.mxu0
        %v5745 = vadd.f32 0.0, %v5744
        %5746 = vmatmul.bf16.gmra.mxu0 %v5576
        %v5747 = vpop.f32.mrf.mxu0
        %v5748 = vadd.f32 0.0, %v5747
        %v5749 = vpop.f32.mrf.mxu0
        %v5750 = vadd.f32 0.0, %v5749
        %5751 = vmatmul.bf16.gmra.mxu0 %v5579
        %v5752 = vpop.f32.mrf.mxu0
        %v5753 = vadd.f32 0.0, %v5752
        %v5754 = vpop.f32.mrf.mxu0
        %v5755 = vadd.f32 0.0, %v5754
        %5756 = vmatmul.bf16.gmra.mxu0 %v5582
        %v5757 = vpop.f32.mrf.mxu0
        %v5758 = vadd.f32 0.0, %v5757
        %v5759 = vpop.f32.mrf.mxu0
        %v5760 = vadd.f32 0.0, %v5759
        %5761 = vdwg.mxu0
        %v5762 = vadd.f32 %v5459, %v5594
        %v5763 = vadd.f32 %v5460, %v5683
        %v5764 = vadd.f32 %v5461, %v5596
        %v5765 = vadd.f32 %v5462, %v5685
        %v5766 = vadd.f32 %v5463, %v5599
        %v5767 = vadd.f32 %v5464, %v5688
        %v5768 = vadd.f32 %v5465, %v5601
        %v5769 = vadd.f32 %v5466, %v5690
        %v5770 = vadd.f32 %v5467, %v5604
        %v5771 = vadd.f32 %v5468, %v5693
        %v5772 = vadd.f32 %v5469, %v5606
        %v5773 = vadd.f32 %v5470, %v5695
        %v5774 = vadd.f32 %v5471, %v5609
        %v5775 = vadd.f32 %v5472, %v5698
        %v5776 = vadd.f32 %v5473, %v5611
        %v5777 = vadd.f32 %v5474, %v5700
        %v5778 = vadd.f32 %v5475, %v5614
        %v5779 = vadd.f32 %v5476, %v5703
        %v5780 = vadd.f32 %v5477, %v5616
        %v5781 = vadd.f32 %v5478, %v5705
        %v5782 = vadd.f32 %v5479, %v5619
        %v5783 = vadd.f32 %v5480, %v5708
        %v5784 = vadd.f32 %v5481, %v5621
        %v5785 = vadd.f32 %v5482, %v5710
        %v5786 = vadd.f32 %v5483, %v5624
        %v5787 = vadd.f32 %v5484, %v5713
        %v5788 = vadd.f32 %v5485, %v5626
        %v5789 = vadd.f32 %v5486, %v5715
        %v5790 = vadd.f32 %v5487, %v5629
        %v5791 = vadd.f32 %v5488, %v5718
        %v5792 = vadd.f32 %v5489, %v5631
        %v5793 = vadd.f32 %v5490, %v5720
        %v5794 = vadd.f32 %v5491, %v5634
        %v5795 = vadd.f32 %v5492, %v5723
        %v5796 = vadd.f32 %v5493, %v5636
        %v5797 = vadd.f32 %v5494, %v5725
        %v5798 = vadd.f32 %v5495, %v5639
        %v5799 = vadd.f32 %v5496, %v5728
        %v5800 = vadd.f32 %v5497, %v5641
        %v5801 = vadd.f32 %v5498, %v5730
        %v5802 = vadd.f32 %v5499, %v5644
        %v5803 = vadd.f32 %v5500, %v5733
        %v5804 = vadd.f32 %v5501, %v5646
        %v5805 = vadd.f32 %v5502, %v5735
        %v5806 = vadd.f32 %v5503, %v5649
        %v5807 = vadd.f32 %v5504, %v5738
        %v5808 = vadd.f32 %v5505, %v5651
        %v5809 = vadd.f32 %v5506, %v5740
        %v5810 = vadd.f32 %v5507, %v5654
        %v5811 = vadd.f32 %v5508, %v5743
        %v5812 = vadd.f32 %v5509, %v5656
        %v5813 = vadd.f32 %v5510, %v5745
        %v5814 = vadd.f32 %v5511, %v5659
        %v5815 = vadd.f32 %v5512, %v5748
        %v5816 = vadd.f32 %v5513, %v5661
        %v5817 = vadd.f32 %v5514, %v5750
        %v5818 = vadd.f32 %v5515, %v5664
        %v5819 = vadd.f32 %v5516, %v5753
        %v5820 = vadd.f32 %v5517, %v5666
        %v5821 = vadd.f32 %v5518, %v5755
        %v5822 = vadd.f32 %v5519, %v5669
        %v5823 = vadd.f32 %v5520, %v5758
        %v5824 = vadd.f32 %v5521, %v5671
        %v5825 = vadd.f32 %v5522, %v5760
        %5826 = vst [vmem:[%s274] sm:$0xff] %v5762
        %5827 = vst [vmem:[%s274 + $0x8] sm:$0xff] %v5763
        %5828 = vst [vmem:[%s274 + $0x10] sm:$0xff] %v5764
        %5829 = vst [vmem:[%s274 + $0x18] sm:$0xff] %v5765
        %5830 = vst [vmem:[%s274 + $0x20] sm:$0xff] %v5766
        %5831 = vst [vmem:[%s274 + $0x28] sm:$0xff] %v5767
        %5832 = vst [vmem:[%s274 + $0x30] sm:$0xff] %v5768
        %5833 = vst [vmem:[%s274 + $0x38] sm:$0xff] %v5769
        %5834 = vst [vmem:[%s274 + $0x40] sm:$0xff] %v5770
        %5835 = vst [vmem:[%s274 + $0x48] sm:$0xff] %v5771
        %5836 = vst [vmem:[%s274 + $0x50] sm:$0xff] %v5772
        %5837 = vst [vmem:[%s274 + $0x58] sm:$0xff] %v5773
        %5838 = vst [vmem:[%s274 + $0x60] sm:$0xff] %v5774
        %5839 = vst [vmem:[%s274 + $0x68] sm:$0xff] %v5775
        %5840 = vst [vmem:[%s274 + $0x70] sm:$0xff] %v5776
        %5841 = vst [vmem:[%s274 + $0x78] sm:$0xff] %v5777
        %5842 = vst [vmem:[%s274 + $0x80] sm:$0xff] %v5778
        %5843 = vst [vmem:[%s274 + $0x88] sm:$0xff] %v5779
        %5844 = vst [vmem:[%s274 + $0x90] sm:$0xff] %v5780
        %5845 = vst [vmem:[%s274 + $0x98] sm:$0xff] %v5781
        %5846 = vst [vmem:[%s274 + $0xa0] sm:$0xff] %v5782
        %5847 = vst [vmem:[%s274 + $0xa8] sm:$0xff] %v5783
        %5848 = vst [vmem:[%s274 + $0xb0] sm:$0xff] %v5784
        %5849 = vst [vmem:[%s274 + $0xb8] sm:$0xff] %v5785
        %5850 = vst [vmem:[%s274 + $0xc0] sm:$0xff] %v5786
        %5851 = vst [vmem:[%s274 + $0xc8] sm:$0xff] %v5787
        %5852 = vst [vmem:[%s274 + $0xd0] sm:$0xff] %v5788
        %5853 = vst [vmem:[%s274 + $0xd8] sm:$0xff] %v5789
        %5854 = vst [vmem:[%s274 + $0xe0] sm:$0xff] %v5790
        %5855 = vst [vmem:[%s274 + $0xe8] sm:$0xff] %v5791
        %5856 = vst [vmem:[%s274 + $0xf0] sm:$0xff] %v5792
        %5857 = vst [vmem:[%s274 + $0xf8] sm:$0xff] %v5793
        %5858 = vst [vmem:[%s274 + $0x100] sm:$0xff] %v5794
        %5859 = vst [vmem:[%s274 + $0x108] sm:$0xff] %v5795
        %5860 = vst [vmem:[%s274 + $0x110] sm:$0xff] %v5796
        %5861 = vst [vmem:[%s274 + $0x118] sm:$0xff] %v5797
        %5862 = vst [vmem:[%s274 + $0x120] sm:$0xff] %v5798
        %5863 = vst [vmem:[%s274 + $0x128] sm:$0xff] %v5799
        %5864 = vst [vmem:[%s274 + $0x130] sm:$0xff] %v5800
        %5865 = vst [vmem:[%s274 + $0x138] sm:$0xff] %v5801
        %5866 = vst [vmem:[%s274 + $0x140] sm:$0xff] %v5802
        %5867 = vst [vmem:[%s274 + $0x148] sm:$0xff] %v5803
        %5868 = vst [vmem:[%s274 + $0x150] sm:$0xff] %v5804
        %5869 = vst [vmem:[%s274 + $0x158] sm:$0xff] %v5805
        %5870 = vst [vmem:[%s274 + $0x160] sm:$0xff] %v5806
        %5871 = vst [vmem:[%s274 + $0x168] sm:$0xff] %v5807
        %5872 = vst [vmem:[%s274 + $0x170] sm:$0xff] %v5808
        %5873 = vst [vmem:[%s274 + $0x178] sm:$0xff] %v5809
        %5874 = vst [vmem:[%s274 + $0x180] sm:$0xff] %v5810
        %5875 = vst [vmem:[%s274 + $0x188] sm:$0xff] %v5811
        %5876 = vst [vmem:[%s274 + $0x190] sm:$0xff] %v5812
        %5877 = vst [vmem:[%s274 + $0x198] sm:$0xff] %v5813
        %5878 = vst [vmem:[%s274 + $0x1a0] sm:$0xff] %v5814
        %5879 = vst [vmem:[%s274 + $0x1a8] sm:$0xff] %v5815
        %5880 = vst [vmem:[%s274 + $0x1b0] sm:$0xff] %v5816
        %5881 = vst [vmem:[%s274 + $0x1b8] sm:$0xff] %v5817
        %5882 = vst [vmem:[%s274 + $0x1c0] sm:$0xff] %v5818
        %5883 = vst [vmem:[%s274 + $0x1c8] sm:$0xff] %v5819
        %5884 = vst [vmem:[%s274 + $0x1d0] sm:$0xff] %v5820
        %5885 = vst [vmem:[%s274 + $0x1d8] sm:$0xff] %v5821
        %5886 = vst [vmem:[%s274 + $0x1e0] sm:$0xff] %v5822
        %5887 = vst [vmem:[%s274 + $0x1e8] sm:$0xff] %v5823
        %5888 = vst [vmem:[%s274 + $0x1f0] sm:$0xff] %v5824
        %5889 = vst [vmem:[%s274 + $0x1f8] sm:$0xff] %v5825
        %s5890 = sadd.s32 %s22, %s23
        %s5891 = smul.u32 32, %s5890
        %p5892 = scmp.lt.s32.totalorder %s5891, 63
        %s5893 = scalar_select %p5892, %s5891, 63
        %s5894 = smul.addr %s5893, 2
        %s5895 = smul.addr %s5894, 8
        %s5896 = scalar_lea.vmem %s5, %s5895
        // Predicated region
        $region49: #{final_patch_expand_x4_cel.1} parent=39 // pred_check
          %p5897 = pneg %p160
        $region50: #{final_patch_expand_x4_cel.1} parent=39 // pred_check_branch
          %5899 = sbr.rel (%p5897) target = $region52
        $region51: #{final_patch_expand_x4_cel.1} parent=39 // pred_region
          %s5900 = sadd.s32 %s22, %s23
          %s5901 = smul.u32 32, %s5900
        $region52: #{final_patch_expand_x4_cel.1} parent=39 // pred_fallthru
          _
      $region40: #{final_patch_expand_x4_cel.1} parent=5 // pred_fallthru
        _
      %p5902 = scmp.le.s32.totalorder 2, %s13
      // Predicated region
      $region53: #{final_patch_expand_x4_cel.1} parent=5 // pred_check
        %p5903 = pneg %p5902
      $region54: #{final_patch_expand_x4_cel.1} parent=5 // pred_check_branch
        %5905 = sbr.rel (%p5903) target = $region56
      $region55: #{final_patch_expand_x4_cel.1} parent=5 // pred_region
        %s5906 = ssub.s32 %s13, 2
        // Predicated region
        $region57: #{final_patch_expand_x4_cel.1} parent=55 // pred_check
          %p5907 = pneg %p166
        $region58: #{final_patch_expand_x4_cel.1} parent=55 // pred_check_branch
          %5909 = sbr.rel (%p5907) target = $region60
        $region59: #{final_patch_expand_x4_cel.1} parent=55 // pred_region
          %s5910 = sadd.s32 %s24, %s25
          %s5911 = smul.u32 32, %s5910
          %p5912 = scmp.lt.s32.totalorder %s5911, 63
          %s5913 = scalar_select %p5912, %s5911, 63
          %s5914 = smul.addr %s5913, 2
          %s5915 = smul.addr %s5914, 8
          %s5916 = scalar_lea.vmem %s5, %s5915
        $region60: #{final_patch_expand_x4_cel.1} parent=55 // pred_fallthru
          _
      $region56: #{final_patch_expand_x4_cel.1} parent=5 // pred_fallthru
        _
    $region6: #{final_patch_expand_x4_cel.1} parent=1 // loop_footer
      %s17 = sadd.s32 1, %s13
    $region7: #{final_patch_expand_x4_cel.1} parent=1 // loop_footer_branch
      %12 = sbr.rel target = $region3
    $region8: #{final_patch_expand_x4_cel.1} parent=1 // loop_exit
      _
    %5917 = vsyncpa [#allocation4], 1
    %s5918 = scalar_lea.sflag [#allocation4], 1
    %5919 = vsyncpa %s5918, 1
    %5920 = vsyncpa [#allocation6], 1

</llo_original>
